<compile_context>
chip_gen: v7x
topology: tpu7x:2x2x1
jax: 0.10.0
libtpu: 0.0.40
codegen_flags: <defaults>
</compile_context>

<pallas_src>
import functools

import jax
import jax.numpy as jnp
from jax import lax
from jax.experimental import pallas as pl
from jax.experimental.pallas import tpu as pltpu

_EPS = 1e-5      # nn.BatchNorm2d default eps
_LANE = 128      # TPU lane width


def _round_up(x, m):
    return (x + m - 1) // m * m


def _vmem_budgets():
    """Return (per-kernel tile budget, vmem_limit_bytes), generation aware."""
    cap = 64 * 1024 * 1024
    try:
        cap = int(pltpu.get_tpu_info().vmem_capacity_bytes)
    except Exception:
        pass
    if cap >= 100 * 1024 * 1024:                      # v5e / v6e: 128 MiB VMEM
        return 36 * 1024 * 1024, 96 * 1024 * 1024
    return 18 * 1024 * 1024, 48 * 1024 * 1024         # v7x: 64 MiB per TC


# ---------------------------------------------------------------------------
# Kernel A1: patch matmul + BN pass-1 stats (conv1 when 9*C_in <= 128)
# ---------------------------------------------------------------------------
def _matmul_stats_kernel(p_ref, w_ref, y_ref, st_ref):
    res = jnp.dot(p_ref[...], w_ref[...], preferred_element_type=jnp.float32)
    y_ref[...] = res.astype(y_ref.dtype)
    m = res.shape[0]
    s = jnp.sum(res, axis=0, keepdims=True)                    # (1, ocp)
    q = jnp.sum((res - s / m) ** 2, axis=0, keepdims=True)     # (1, ocp)
    st_ref[:, 0:1, :] = s[None]
    st_ref[:, 1:2, :] = q[None]


# ---------------------------------------------------------------------------
# Kernel A2: fused 3x3 conv (single K=9*Cp dot over a packed im2col LHS)
#            + optional fused previous-BN scale/shift + ReLU prologue
#            + BN pass-1 partial statistics in the epilogue
# ---------------------------------------------------------------------------
def _conv3x3_stats_kernel(sc_ref, sh_ref, xm_ref, xt_ref, xb_ref, w_ref,
                          y_ref, st_ref, win_ref, lhs_ref, *, h, apply_act):
    n, th, w, cp = xm_ref.shape
    ocp = w_ref.shape[-1]
    i = pl.program_id(0)

    def act(v):
        # Fused "previous BN scale/shift + ReLU" prologue (conv2 only).
        if not apply_act:
            return v
        v = v.astype(jnp.float32) * sc_ref[...] + sh_ref[...]
        return jnp.maximum(v, 0.0).astype(jnp.bfloat16)

    # Activated window rows [top halo | main | bottom halo]; halo rows that
    # fall outside the image are the conv's spatial zero padding, so they are
    # zero-masked AFTER the affine+ReLU.
    zero_row = jnp.zeros((n, 1, w, cp), jnp.bfloat16)
    win_ref[:, 1:th + 1, :, :] = act(xm_ref[...])
    win_ref[:, 0:1, :, :] = jnp.where(i > 0, act(xt_ref[...]), zero_row)
    win_ref[:, th + 1:th + 2, :, :] = jnp.where((i + 1) * th < h,
                                                act(xb_ref[...]), zero_row)

    # Lane-packed im2col: tap t = 3*kh + kw occupies lanes [t*cp, (t+1)*cp).
    # Shifts are absorbed into the store/load addresses (no value relayouts).
    zero_col = jnp.zeros((n, th, 1, cp), jnp.bfloat16)
    for kh in range(3):
        for kw in range(3):
            t = 3 * kh + kw
            dlo = 1 if kw == 0 else 0              # dest column start
            slo = 1 if kw == 2 else 0              # source column start
            ncol = w if kw == 1 else w - 1
            lhs_ref[:, :, dlo:dlo + ncol, t * cp:(t + 1) * cp] = \
                win_ref[:, kh:kh + th, slo:slo + ncol, :]
            if kw == 0:
                lhs_ref[:, :, 0:1, t * cp:(t + 1) * cp] = zero_col
            elif kw == 2:
                lhs_ref[:, :, w - 1:w, t * cp:(t + 1) * cp] = zero_col

    # One MXU dot with K = 9*cp: no per-tap f32 accumulator read-modify-write.
    m = n * th * w
    res = jnp.dot(lhs_ref[...].reshape(m, 9 * cp), w_ref[...],
                  preferred_element_type=jnp.float32)
    y_ref[...] = res.reshape(n, th, w, ocp).astype(y_ref.dtype)

    # BN pass-1 fused into the epilogue: per-tile sum and sum of squared
    # deviations from the tile mean (combined with Chan's formula outside).
    s = jnp.sum(res, axis=0, keepdims=True)
    q = jnp.sum((res - s / m) ** 2, axis=0, keepdims=True)
    st_ref[:, 0:1, :] = s[None]
    st_ref[:, 1:2, :] = q[None]


# ---------------------------------------------------------------------------
# Kernel B: final BN scale/shift + ReLU (only needed once, after conv2)
# ---------------------------------------------------------------------------
def _bn_relu_kernel(y_ref, s_ref, b_ref, o_ref):
    y = y_ref[...].astype(jnp.float32)
    o_ref[...] = jnp.maximum(y * s_ref[...] + b_ref[...], 0.0).astype(o_ref.dtype)


# ---------------------------------------------------------------------------
# Tile pickers (full VMEM accounting, generation-aware budget)
# ---------------------------------------------------------------------------
def _pick_row_tile(n, h, w, cp, ocp, budget):
    kdim = 9 * cp

    def cost(th):
        return (2 * n * th * w * cp * 2          # main input block (x2 buffers)
                + 2 * 2 * n * w * cp * 2         # two 1-row halo blocks (x2)
                + 2 * kdim * ocp * 2             # resident weights (x2)
                + 2 * n * th * w * ocp * 2       # bf16 y block (x2)
                + n * (th + 2) * w * cp * 2      # activated-window scratch
                + 2 * n * th * w * kdim * 2      # im2col scratch (+ dot operand)
                + 2 * n * th * w * ocp * 4)      # f32 dot result / epilogue temps

    divs = [t for t in range(1, h + 1) if h % t == 0 and cost(t) <= budget]
    if not divs:
        return 1
    even = [t for t in divs if (h // t) % 2 == 0]   # even tile count: v7x 2-TC split
    return max(even) if even else max(divs)


def _pick_m_tile(m, row_bytes, budget):
    cands = [t for t in range(8, m + 1, 8) if m % t == 0]
    if m not in cands:
        cands.append(m)
    fit = [t for t in cands if t * row_bytes <= budget]
    if not fit:
        return min(cands)
    even = [t for t in fit if (m // t) % 2 == 0]
    return max(even) if even else max(fit)


# ---------------------------------------------------------------------------
# pallas_call wrappers
# ---------------------------------------------------------------------------
def _matmul_bnstats(p2d, w_packed, budget, vmem_limit):
    m, kp = p2d.shape
    ocp = w_packed.shape[-1]
    fixed = 2 * kp * ocp * 2 + 8 * ocp * 4
    row_bytes = 2 * kp * 2 + 2 * ocp * 2 + 2 * ocp * 4
    tm = _pick_m_tile(m, row_bytes, max(budget - fixed, 8 * row_bytes))
    mb = m // tm
    return pl.pallas_call(
        _matmul_stats_kernel,
        out_shape=(jax.ShapeDtypeStruct((m, ocp), jnp.bfloat16),
                   jax.ShapeDtypeStruct((mb, 2, ocp), jnp.float32)),
        grid_spec=pltpu.PrefetchScalarGridSpec(
            num_scalar_prefetch=0,
            grid=(mb,),
            in_specs=[pl.BlockSpec((tm, kp), lambda i: (i, 0)),
                      pl.BlockSpec((kp, ocp), lambda i: (0, 0))],
            out_specs=(pl.BlockSpec((tm, ocp), lambda i: (i, 0)),
                       pl.BlockSpec((1, 2, ocp), lambda i: (i, 0, 0))),
        ),
        compiler_params=pltpu.CompilerParams(
            dimension_semantics=("parallel",), vmem_limit_bytes=vmem_limit),
    )(p2d, w_packed)


def _conv3x3_bnstats(x, w9, scale, shift, *, apply_act, budget, vmem_limit):
    n, h, w, cp = x.shape
    kdim, ocp = w9.shape
    th = _pick_row_tile(n, h, w, cp, ocp, budget)
    hb = h // th
    kernel = functools.partial(_conv3x3_stats_kernel, h=h, apply_act=apply_act)
    return pl.pallas_call(
        kernel,
        out_shape=(jax.ShapeDtypeStruct((n, h, w, ocp), jnp.bfloat16),
                   jax.ShapeDtypeStruct((hb, 2, ocp), jnp.float32)),
        grid_spec=pltpu.PrefetchScalarGridSpec(
            num_scalar_prefetch=0,
            grid=(hb,),
            in_specs=[
                pl.BlockSpec((1, cp), lambda i: (0, 0)),                  # scale
                pl.BlockSpec((1, cp), lambda i: (0, 0)),                  # shift
                pl.BlockSpec((n, th, w, cp), lambda i: (0, i, 0, 0)),     # main rows
                pl.BlockSpec((n, 1, w, cp),                               # top halo
                             lambda i: (0, jnp.maximum(i * th - 1, 0), 0, 0)),
                pl.BlockSpec((n, 1, w, cp),                               # bottom halo
                             lambda i: (0, jnp.minimum(i * th + th, h - 1), 0, 0)),
                pl.BlockSpec((kdim, ocp), lambda i: (0, 0)),              # weights
            ],
            out_specs=(
                pl.BlockSpec((n, th, w, ocp), lambda i: (0, i, 0, 0)),
                pl.BlockSpec((1, 2, ocp), lambda i: (i, 0, 0)),
            ),
            scratch_shapes=[
                pltpu.VMEM((n, th + 2, w, cp), jnp.bfloat16),   # activated window
                pltpu.VMEM((n, th, w, kdim), jnp.bfloat16),     # packed im2col LHS
            ],
        ),
        compiler_params=pltpu.CompilerParams(
            dimension_semantics=("parallel",), vmem_limit_bytes=vmem_limit),
    )(scale, shift, x, x, x, w9)


def _bn_affine_relu(y2d, scale, shift, out_dtype, budget, vmem_limit):
    m, ocp = y2d.shape
    row_bytes = 2 * ocp * 2 + 2 * ocp * 4
    tm = _pick_m_tile(m, row_bytes, budget)
    return pl.pallas_call(
        _bn_relu_kernel,
        out_shape=jax.ShapeDtypeStruct((m, ocp), out_dtype),
        grid_spec=pltpu.PrefetchScalarGridSpec(
            num_scalar_prefetch=0,
            grid=(m // tm,),
            in_specs=[pl.BlockSpec((tm, ocp), lambda i: (i, 0)),
                      pl.BlockSpec((1, ocp), lambda i: (0, 0)),
                      pl.BlockSpec((1, ocp), lambda i: (0, 0))],
            out_specs=pl.BlockSpec((tm, ocp), lambda i: (i, 0)),
        ),
        compiler_params=pltpu.CompilerParams(
            dimension_semantics=("parallel",), vmem_limit_bytes=vmem_limit),
    )(y2d, scale, shift)


# ---------------------------------------------------------------------------
# Glue (cheap per-channel / layout-only work)
# ---------------------------------------------------------------------------
def _pack_w_taps(w, cp, ocp):
    # (OC, IC, 3, 3) -> (9*Cp, OCp); tap (kh,kw) occupies rows [t*cp, t*cp+IC).
    oc, c = w.shape[0], w.shape[1]
    wt = jnp.transpose(w, (2, 3, 1, 0)).reshape(9, c, oc)
    wt = jnp.pad(wt, ((0, 0), (0, cp - c), (0, ocp - oc)))
    return wt.reshape(9 * cp, ocp).astype(jnp.bfloat16)


def _pack_w_patch(w, kp, ocp):
    # (OC, IC, 3, 3) -> (kp, OCp); rows are [tap-major, channel-minor] 9*IC,
    # matching the XLA-built patch slab, padded up to the 128-lane K.
    oc, c = w.shape[0], w.shape[1]
    wt = jnp.transpose(w, (2, 3, 1, 0)).reshape(9 * c, oc)
    return jnp.pad(wt, ((0, kp - 9 * c), (0, ocp - oc))).astype(jnp.bfloat16)


def _pad_vec(v, n, fill):
    return jnp.pad(v.astype(jnp.float32), (0, n - v.shape[0]),
                   constant_values=fill)


def _finalize_stats(st, m_total):
    # st: (T, 2, ocp) per-tile [sum, sum of squared deviations from tile mean].
    t = st.shape[0]
    m_t = m_total // t
    s, q = st[:, 0, :], st[:, 1, :]
    mean = jnp.sum(s, axis=0) / m_total
    var = (jnp.sum(q, axis=0)
           + m_t * jnp.sum((s / m_t - mean) ** 2, axis=0)) / m_total
    return mean, jnp.maximum(var, 0.0)


def _bn_affine(gamma, beta, mean, var, ocp):
    scale = _pad_vec(gamma, ocp, 1.0) * lax.rsqrt(var + _EPS)
    shift = _pad_vec(beta, ocp, 0.0) - mean * scale
    return scale.reshape(1, ocp), shift.reshape(1, ocp)


@jax.jit
def double_conv(x_nchw, params):
    w1, b1, g1, be1, w2, b2, g2, be2 = params
    # Conv bias is cancelled exactly by the train-mode BN mean subtraction that
    # immediately follows each conv -> identical forward output, less work.
    del b1, b2
    n, c, h, w = x_nchw.shape
    oc = w1.shape[0]
    ocp = _round_up(oc, _LANE)
    budget, vmem_limit = _vmem_budgets()

    x = jnp.transpose(x_nchw, (0, 2, 3, 1))            # NCHW -> NHWC, once

    # ---- conv1 + BN1 batch statistics ---------------------------------------
    if 9 * c <= _LANE:
        # Small-C first conv: a 128-lane 3x3 patch slab costs the same HBM as a
        # 128-lane channel pad, so build it in XLA and conv1 is one K=128 dot.
        kp = _LANE
        xpad = jnp.pad(x, ((0, 0), (1, 1), (1, 1), (0, 0)))
        patches = jnp.concatenate(
            [xpad[:, kh:kh + h, kw:kw + w, :]
             for kh in range(3) for kw in range(3)], axis=-1)
        patches = jnp.pad(patches, ((0, 0), (0, 0), (0, 0), (0, kp - 9 * c)))
        y1, st1 = _matmul_bnstats(
            patches.astype(jnp.bfloat16).reshape(n * h * w, kp),
            _pack_w_patch(w1, kp, ocp), budget, vmem_limit)
        y1 = y1.reshape(n, h, w, ocp)
    else:
        cp = _round_up(c, _LANE)
        xb = jnp.pad(x, ((0, 0), (0, 0), (0, 0), (0, cp - c))).astype(jnp.bfloat16)
        y1, st1 = _conv3x3_bnstats(
            xb, _pack_w_taps(w1, cp, ocp),
            jnp.ones((1, cp), jnp.float32), jnp.zeros((1, cp), jnp.float32),
            apply_act=False, budget=budget, vmem_limit=vmem_limit)
    mean1, var1 = _finalize_stats(st1, n * h * w)
    scale1, shift1 = _bn_affine(g1, be1, mean1, var1, ocp)

    # ---- conv2 with BN1 + ReLU fused into its prologue ----------------------
    y2, st2 = _conv3x3_bnstats(y1, _pack_w_taps(w2, ocp, ocp), scale1, shift1,
                               apply_act=True, budget=budget,
                               vmem_limit=vmem_limit)
    mean2, var2 = _finalize_stats(st2, n * h * w)
    scale2, shift2 = _bn_affine(g2, be2, mean2, var2, ocp)

    # ---- BN2 + ReLU (final activation, f32 out) ------------------------------
    out = _bn_affine_relu(y2.reshape(n * h * w, ocp), scale2, shift2,
                          jnp.float32, budget, vmem_limit)
    out = out.reshape(n, h, w, ocp)[..., :oc]
    return jnp.transpose(out, (0, 3, 1, 2))            # NHWC -> NCHW, once


# ---------------------------------------------------------------------------
# Parameters + pure-JAX f32 reference (self-check)
# ---------------------------------------------------------------------------
def init_params(key, in_channels, out_channels):
    k = jax.random.split(key, 6)
    fan1 = in_channels * 9
    fan2 = out_channels * 9
    w1 = jax.random.uniform(k[0], (out_channels, in_channels, 3, 3),
                            jnp.float32, -1.0, 1.0) / jnp.sqrt(fan1)
    b1 = jax.random.uniform(k[1], (out_channels,), jnp.float32, -1.0, 1.0) / jnp.sqrt(fan1)
    w2 = jax.random.uniform(k[2], (out_channels, out_channels, 3, 3),
                            jnp.float32, -1.0, 1.0) / jnp.sqrt(fan2)
    b2 = jax.random.uniform(k[3], (out_channels,), jnp.float32, -1.0, 1.0) / jnp.sqrt(fan2)
    g1 = jnp.ones((out_channels,), jnp.float32) + 0.1 * jax.random.normal(k[4], (out_channels,))
    be1 = 0.1 * jax.random.normal(k[5], (out_channels,))
    g2 = jnp.ones((out_channels,), jnp.float32)
    be2 = jnp.zeros((out_channels,), jnp.float32)
    return (w1, b1, g1, be1, w2, b2, g2, be2)


def _reference(x, params):
    # f32 reference: Conv2d(bias=True) -> train-mode BN -> ReLU, twice.
    w1, b1, g1, be1, w2, b2, g2, be2 = params

    def conv_bn_relu(x, w, b, g, be):
        y = lax.conv_general_dilated(x, w, (1, 1), ((1, 1), (1, 1)),
                                     dimension_numbers=("NCHW", "OIHW", "NCHW"),
                                     precision=lax.Precision.HIGHEST)
        y = y + b.reshape(1, -1, 1, 1)
        mean = jnp.mean(y, axis=(0, 2, 3), keepdims=True)
        var = jnp.mean((y - mean) ** 2, axis=(0, 2, 3), keepdims=True)
        xhat = (y - mean) * lax.rsqrt(var + _EPS)
        return jnp.maximum(xhat * g.reshape(1, -1, 1, 1) + be.reshape(1, -1, 1, 1), 0.0)

    return conv_bn_relu(conv_bn_relu(x, w1, b1, g1, be1), w2, b2, g2, be2)


if __name__ == "__main__":
    N, C_IN, C_OUT, H, W = 2, 4, 8, 16, 16
    key = jax.random.PRNGKey(0)
    kx, kp = jax.random.split(key)
    x = jax.random.normal(kx, (N, C_IN, H, W), jnp.float32)
    params = init_params(kp, C_IN, C_OUT)

    out = jax.block_until_ready(double_conv(x, params))
    assert out.shape == (N, C_OUT, H, W)
    assert bool(jnp.all(jnp.isfinite(out)))
    assert bool(jnp.all(out >= 0.0))          # post-ReLU

    ref = jax.block_until_ready(_reference(x, params))
    err = float(jnp.max(jnp.abs(out - ref)))
    assert err < 1e-1, f"max abs err vs f32 reference: {err}"
    print("KERNEL_OK")
</pallas_src>

<mosaic_0001>
module attributes {stable_mosaic.version = 11 : i64} {
  func.func @_matmul_stats_kernel(%arg0: i32, %arg1: memref<256x128xbf16, #tpu.memory_space<vmem>>, %arg2: memref<128x128xbf16, #tpu.memory_space<vmem>>, %arg3: memref<256x128xbf16, #tpu.memory_space<vmem>>, %arg4: memref<1x2x128xf32, #tpu.memory_space<vmem>>) attributes {dimension_semantics = [#tpu.dimension_semantics<parallel>], iteration_bounds = array<i64: 2>, scalar_prefetch = 0 : i64, scratch_operands = 0 : i64, tpu.core_type = #tpu.core_type<tc>, window_params = [{transform_indices = @transform_0, window_bounds = array<i64: 256, 128>}, {pipeline_mode = #tpu.pipeline_mode<synchronous>, transform_indices = @transform_1, window_bounds = array<i64: 128, 128>}, {transform_indices = @transform_2, window_bounds = array<i64: 256, 128>}, {transform_indices = @transform_3, window_bounds = array<i64: 1, 2, 128>}]} {
    %c0 = arith.constant 0 : index
    %c0_0 = arith.constant 0 : index
    %0 = vector.load %arg1[%c0, %c0_0] : memref<256x128xbf16, #tpu.memory_space<vmem>>, vector<256x128xbf16>
    %c0_1 = arith.constant 0 : index
    %c0_2 = arith.constant 0 : index
    %1 = vector.load %arg2[%c0_1, %c0_2] : memref<128x128xbf16, #tpu.memory_space<vmem>>, vector<128x128xbf16>
    %cst = arith.constant dense<0.000000e+00> : vector<256x128xf32>
    %2 = tpu.matmul %0, %1, %cst {dimension_numbers = #tpu.dot_dimension_numbers<[1], [0], [0], [1], [0, 0, 1, 1], [], []>} : vector<256x128xbf16>, vector<128x128xbf16>, vector<256x128xf32> -> vector<256x128xf32>
    %3 = arith.truncf %2 : vector<256x128xf32> to vector<256x128xbf16>
    %c0_3 = arith.constant 0 : index
    %c0_4 = arith.constant 0 : index
    %4 = vector.load %arg3[%c0_3, %c0_4] : memref<256x128xbf16, #tpu.memory_space<vmem>>, vector<256x128xbf16>
    tpu.vector_store %arg3[%c0_3, %c0_4], %3 {strides = array<i32>} : memref<256x128xbf16, #tpu.memory_space<vmem>>, vector<256x128xbf16>,
    %cst_5 = arith.constant dense<0.000000e+00> : vector<128xf32>
    %5 = vector.multi_reduction <add>, %2, %cst_5 [0] : vector<256x128xf32> to vector<128xf32>
    %6 = vector.shape_cast %5 : vector<128xf32> to vector<1x128xf32>
    %cst_6 = arith.constant 2.560000e+02 : f32
    %7 = vector.broadcast %cst_6 : f32 to vector<1x128xf32>
    %8 = arith.divf %6, %7 : vector<1x128xf32>
    %9 = vector.broadcast %8 : vector<1x128xf32> to vector<256x128xf32>
    %10 = arith.subf %2, %9 : vector<256x128xf32>
    %11 = arith.mulf %10, %10 : vector<256x128xf32>
    %cst_7 = arith.constant dense<0.000000e+00> : vector<128xf32>
    %12 = vector.multi_reduction <add>, %11, %cst_7 [0] : vector<256x128xf32> to vector<128xf32>
    %13 = vector.shape_cast %12 : vector<128xf32> to vector<1x128xf32>
    %14 = vector.shape_cast %6 : vector<1x128xf32> to vector<1x1x128xf32>
    %c0_8 = arith.constant 0 : index
    %c0_9 = arith.constant 0 : index
    %c0_10 = arith.constant 0 : index
    %15 = vector.load %arg4[%c0_8, %c0_9, %c0_10] : memref<1x2x128xf32, #tpu.memory_space<vmem>>, vector<1x1x128xf32>
    tpu.vector_store %arg4[%c0_8, %c0_9, %c0_10], %14 {strides = array<i32>} : memref<1x2x128xf32, #tpu.memory_space<vmem>>, vector<1x1x128xf32>,
    %16 = vector.shape_cast %13 : vector<1x128xf32> to vector<1x1x128xf32>
    %c0_11 = arith.constant 0 : index
    %c1 = arith.constant 1 : index
    %c0_12 = arith.constant 0 : index
    %17 = vector.load %arg4[%c0_11, %c1, %c0_12] : memref<1x2x128xf32, #tpu.memory_space<vmem>>, vector<1x1x128xf32>
    tpu.vector_store %arg4[%c0_11, %c1, %c0_12], %16 {strides = array<i32>} : memref<1x2x128xf32, #tpu.memory_space<vmem>>, vector<1x1x128xf32>,
    return
  }
  func.func @transform_0(%arg0: i32) -> (i32, i32) {
    %c0_i32 = arith.constant 0 : i32
    %c0_i32_0 = arith.constant 0 : i32
    return %arg0, %c0_i32 : i32, i32
  }
  func.func @transform_1(%arg0: i32) -> (i32, i32) {
    %c0_i32 = arith.constant 0 : i32
    %c0_i32_0 = arith.constant 0 : i32
    %c0_i32_1 = arith.constant 0 : i32
    return %c0_i32, %c0_i32_0 : i32, i32
  }
  func.func @transform_2(%arg0: i32) -> (i32, i32) {
    %c0_i32 = arith.constant 0 : i32
    %c0_i32_0 = arith.constant 0 : i32
    return %arg0, %c0_i32 : i32, i32
  }
  func.func @transform_3(%arg0: i32) -> (i32, i32, i32) {
    %c0_i32 = arith.constant 0 : i32
    %c0_i32_0 = arith.constant 0 : i32
    %c0_i32_1 = arith.constant 0 : i32
    return %arg0, %c0_i32, %c0_i32_0 : i32, i32, i32
  }
}

module attributes {stable_mosaic.version = 11 : i64} {
  func.func @_bn_relu_kernel(%arg0: i32, %arg1: memref<256x128xbf16, #tpu.memory_space<vmem>>, %arg2: memref<1x128xf32, #tpu.memory_space<vmem>>, %arg3: memref<1x128xf32, #tpu.memory_space<vmem>>, %arg4: memref<256x128xf32, #tpu.memory_space<vmem>>) attributes {dimension_semantics = [#tpu.dimension_semantics<parallel>], iteration_bounds = array<i64: 2>, scalar_prefetch = 0 : i64, scratch_operands = 0 : i64, tpu.core_type = #tpu.core_type<tc>, window_params = [{transform_indices = @transform_0, window_bounds = array<i64: 256, 128>}, {pipeline_mode = #tpu.pipeline_mode<synchronous>, transform_indices = @transform_1, window_bounds = array<i64: 1, 128>}, {pipeline_mode = #tpu.pipeline_mode<synchronous>, transform_indices = @transform_2, window_bounds = array<i64: 1, 128>}, {transform_indices = @transform_3, window_bounds = array<i64: 256, 128>}]} {
    %c0 = arith.constant 0 : index
    %c0_0 = arith.constant 0 : index
    %0 = vector.load %arg1[%c0, %c0_0] : memref<256x128xbf16, #tpu.memory_space<vmem>>, vector<256x128xbf16>
    %1 = arith.extf %0 : vector<256x128xbf16> to vector<256x128xf32>
    %c0_1 = arith.constant 0 : index
    %c0_2 = arith.constant 0 : index
    %2 = vector.load %arg2[%c0_1, %c0_2] : memref<1x128xf32, #tpu.memory_space<vmem>>, vector<1x128xf32>
    %3 = vector.broadcast %2 : vector<1x128xf32> to vector<256x128xf32>
    %4 = arith.mulf %1, %3 : vector<256x128xf32>
    %c0_3 = arith.constant 0 : index
    %c0_4 = arith.constant 0 : index
    %5 = vector.load %arg3[%c0_3, %c0_4] : memref<1x128xf32, #tpu.memory_space<vmem>>, vector<1x128xf32>
    %6 = vector.broadcast %5 : vector<1x128xf32> to vector<256x128xf32>
    %7 = arith.addf %4, %6 : vector<256x128xf32>
    %cst = arith.constant 0.000000e+00 : f32
    %8 = vector.broadcast %cst : f32 to vector<256x128xf32>
    %9 = arith.maximumf %7, %8 : vector<256x128xf32>
    %c0_5 = arith.constant 0 : index
    %c0_6 = arith.constant 0 : index
    %10 = vector.load %arg4[%c0_5, %c0_6] : memref<256x128xf32, #tpu.memory_space<vmem>>, vector<256x128xf32>
    tpu.vector_store %arg4[%c0_5, %c0_6], %9 {strides = array<i32>} : memref<256x128xf32, #tpu.memory_space<vmem>>, vector<256x128xf32>,
    return
  }
  func.func @transform_0(%arg0: i32) -> (i32, i32) {
    %c0_i32 = arith.constant 0 : i32
    %c0_i32_0 = arith.constant 0 : i32
    return %arg0, %c0_i32 : i32, i32
  }
  func.func @transform_1(%arg0: i32) -> (i32, i32) {
    %c0_i32 = arith.constant 0 : i32
    %c0_i32_0 = arith.constant 0 : i32
    %c0_i32_1 = arith.constant 0 : i32
    return %c0_i32, %c0_i32_0 : i32, i32
  }
  func.func @transform_2(%arg0: i32) -> (i32, i32) {
    %c0_i32 = arith.constant 0 : i32
    %c0_i32_0 = arith.constant 0 : i32
    %c0_i32_1 = arith.constant 0 : i32
    return %c0_i32, %c0_i32_0 : i32, i32
  }
  func.func @transform_3(%arg0: i32) -> (i32, i32) {
    %c0_i32 = arith.constant 0 : i32
    %c0_i32_0 = arith.constant 0 : i32
    return %arg0, %c0_i32 : i32, i32
  }
}

module attributes {stable_mosaic.version = 11 : i64} {
  func.func @_conv3x3_stats_kernel(%arg0: i32, %arg1: memref<1x128xf32, #tpu.memory_space<vmem>>, %arg2: memref<1x128xf32, #tpu.memory_space<vmem>>, %arg3: memref<2x8x16x128xbf16, #tpu.memory_space<vmem>>, %arg4: memref<2x1x16x128xbf16, #tpu.memory_space<vmem>>, %arg5: memref<2x1x16x128xbf16, #tpu.memory_space<vmem>>, %arg6: memref<1152x128xbf16, #tpu.memory_space<vmem>>, %arg7: memref<2x8x16x128xbf16, #tpu.memory_space<vmem>>, %arg8: memref<1x2x128xf32, #tpu.memory_space<vmem>>, %arg9: memref<2x10x16x128xbf16, #tpu.memory_space<vmem>>, %arg10: memref<2x8x16x1152xbf16, #tpu.memory_space<vmem>>) attributes {dimension_semantics = [#tpu.dimension_semantics<parallel>], iteration_bounds = array<i64: 2>, scalar_prefetch = 0 : i64, scratch_operands = 2 : i64, tpu.core_type = #tpu.core_type<tc>, window_params = [{pipeline_mode = #tpu.pipeline_mode<synchronous>, transform_indices = @transform_0, window_bounds = array<i64: 1, 128>}, {pipeline_mode = #tpu.pipeline_mode<synchronous>, transform_indices = @transform_1, window_bounds = array<i64: 1, 128>}, {transform_indices = @transform_2, window_bounds = array<i64: 2, 8, 16, 128>}, {transform_indices = @transform_3, window_bounds = array<i64: 2, 1, 16, 128>}, {transform_indices = @transform_4, window_bounds = array<i64: 2, 1, 16, 128>}, {pipeline_mode = #tpu.pipeline_mode<synchronous>, transform_indices = @transform_5, window_bounds = array<i64: 1152, 128>}, {transform_indices = @transform_6, window_bounds = array<i64: 2, 8, 16, 128>}, {transform_indices = @transform_7, window_bounds = array<i64: 1, 2, 128>}]} {
    %cst = arith.constant 0.000000e+00 : bf16
    %0 = vector.broadcast %cst : bf16 to vector<2x1x16x128xbf16>
    %c0 = arith.constant 0 : index
    %c0_0 = arith.constant 0 : index
    %c0_1 = arith.constant 0 : index
    %c0_2 = arith.constant 0 : index
    %1 = vector.load %arg3[%c0, %c0_0, %c0_1, %c0_2] : memref<2x8x16x128xbf16, #tpu.memory_space<vmem>>, vector<2x8x16x128xbf16>
    %2 = arith.extf %1 : vector<2x8x16x128xbf16> to vector<2x8x16x128xf32>
    %c0_3 = arith.constant 0 : index
    %c0_4 = arith.constant 0 : index
    %3 = vector.load %arg1[%c0_3, %c0_4] : memref<1x128xf32, #tpu.memory_space<vmem>>, vector<1x128xf32>
    %4 = vector.shape_cast %3 : vector<1x128xf32> to vector<1x1x1x128xf32>
    %5 = vector.broadcast %4 : vector<1x1x1x128xf32> to vector<2x8x16x128xf32>
    %6 = arith.mulf %2, %5 : vector<2x8x16x128xf32>
    %c0_5 = arith.constant 0 : index
    %c0_6 = arith.constant 0 : index
    %7 = vector.load %arg2[%c0_5, %c0_6] : memref<1x128xf32, #tpu.memory_space<vmem>>, vector<1x128xf32>
    %8 = vector.shape_cast %7 : vector<1x128xf32> to vector<1x1x1x128xf32>
    %9 = vector.broadcast %8 : vector<1x1x1x128xf32> to vector<2x8x16x128xf32>
    %10 = arith.addf %6, %9 : vector<2x8x16x128xf32>
    %cst_7 = arith.constant 0.000000e+00 : f32
    %11 = vector.broadcast %cst_7 : f32 to vector<2x8x16x128xf32>
    %12 = arith.maximumf %10, %11 : vector<2x8x16x128xf32>
    %13 = arith.truncf %12 : vector<2x8x16x128xf32> to vector<2x8x16x128xbf16>
    %c0_8 = arith.constant 0 : index
    %c1 = arith.constant 1 : index
    %c0_9 = arith.constant 0 : index
    %c0_10 = arith.constant 0 : index
    %14 = vector.load %arg9[%c0_8, %c1, %c0_9, %c0_10] : memref<2x10x16x128xbf16, #tpu.memory_space<vmem>>, vector<2x8x16x128xbf16>
    tpu.vector_store %arg9[%c0_8, %c1, %c0_9, %c0_10], %13 {strides = array<i32>} : memref<2x10x16x128xbf16, #tpu.memory_space<vmem>>, vector<2x8x16x128xbf16>,
    %c0_i32 = arith.constant 0 : i32
    %15 = arith.cmpi sgt, %arg0, %c0_i32 : i32
    %c0_11 = arith.constant 0 : index
    %c0_12 = arith.constant 0 : index
    %c0_13 = arith.constant 0 : index
    %c0_14 = arith.constant 0 : index
    %16 = vector.load %arg4[%c0_11, %c0_12, %c0_13, %c0_14] : memref<2x1x16x128xbf16, #tpu.memory_space<vmem>>, vector<2x1x16x128xbf16>
    %17 = arith.extf %16 : vector<2x1x16x128xbf16> to vector<2x1x16x128xf32>
    %c0_15 = arith.constant 0 : index
    %c0_16 = arith.constant 0 : index
    %18 = vector.load %arg1[%c0_15, %c0_16] : memref<1x128xf32, #tpu.memory_space<vmem>>, vector<1x128xf32>
    %19 = vector.shape_cast %18 : vector<1x128xf32> to vector<1x1x1x128xf32>
    %20 = vector.broadcast %19 : vector<1x1x1x128xf32> to vector<2x1x16x128xf32>
    %21 = arith.mulf %17, %20 : vector<2x1x16x128xf32>
    %c0_17 = arith.constant 0 : index
    %c0_18 = arith.constant 0 : index
    %22 = vector.load %arg2[%c0_17, %c0_18] : memref<1x128xf32, #tpu.memory_space<vmem>>, vector<1x128xf32>
    %23 = vector.shape_cast %22 : vector<1x128xf32> to vector<1x1x1x128xf32>
    %24 = vector.broadcast %23 : vector<1x1x1x128xf32> to vector<2x1x16x128xf32>
    %25 = arith.addf %21, %24 : vector<2x1x16x128xf32>
    %cst_19 = arith.constant 0.000000e+00 : f32
    %26 = vector.broadcast %cst_19 : f32 to vector<2x1x16x128xf32>
    %27 = arith.maximumf %25, %26 : vector<2x1x16x128xf32>
    %28 = arith.truncf %27 : vector<2x1x16x128xf32> to vector<2x1x16x128xbf16>
    %29 = arith.select %15, %28, %0 : vector<2x1x16x128xbf16>
    %c0_20 = arith.constant 0 : index
    %c0_21 = arith.constant 0 : index
    %c0_22 = arith.constant 0 : index
    %c0_23 = arith.constant 0 : index
    %30 = vector.load %arg9[%c0_20, %c0_21, %c0_22, %c0_23] : memref<2x10x16x128xbf16, #tpu.memory_space<vmem>>, vector<2x1x16x128xbf16>
    tpu.vector_store %arg9[%c0_20, %c0_21, %c0_22, %c0_23], %29 {strides = array<i32>} : memref<2x10x16x128xbf16, #tpu.memory_space<vmem>>, vector<2x1x16x128xbf16>,
    %c1_i32 = arith.constant 1 : i32
    %31 = arith.addi %arg0, %c1_i32 : i32
    %c8_i32 = arith.constant 8 : i32
    %32 = arith.muli %31, %c8_i32 : i32
    %c16_i32 = arith.constant 16 : i32
    %33 = arith.cmpi slt, %32, %c16_i32 : i32
    %c0_24 = arith.constant 0 : index
    %c0_25 = arith.constant 0 : index
    %c0_26 = arith.constant 0 : index
    %c0_27 = arith.constant 0 : index
    %34 = vector.load %arg5[%c0_24, %c0_25, %c0_26, %c0_27] : memref<2x1x16x128xbf16, #tpu.memory_space<vmem>>, vector<2x1x16x128xbf16>
    %35 = arith.extf %34 : vector<2x1x16x128xbf16> to vector<2x1x16x128xf32>
    %c0_28 = arith.constant 0 : index
    %c0_29 = arith.constant 0 : index
    %36 = vector.load %arg1[%c0_28, %c0_29] : memref<1x128xf32, #tpu.memory_space<vmem>>, vector<1x128xf32>
    %37 = vector.shape_cast %36 : vector<1x128xf32> to vector<1x1x1x128xf32>
    %38 = vector.broadcast %37 : vector<1x1x1x128xf32> to vector<2x1x16x128xf32>
    %39 = arith.mulf %35, %38 : vector<2x1x16x128xf32>
    %c0_30 = arith.constant 0 : index
    %c0_31 = arith.constant 0 : index
    %40 = vector.load %arg2[%c0_30, %c0_31] : memref<1x128xf32, #tpu.memory_space<vmem>>, vector<1x128xf32>
    %41 = vector.shape_cast %40 : vector<1x128xf32> to vector<1x1x1x128xf32>
    %42 = vector.broadcast %41 : vector<1x1x1x128xf32> to vector<2x1x16x128xf32>
    %43 = arith.addf %39, %42 : vector<2x1x16x128xf32>
    %cst_32 = arith.constant 0.000000e+00 : f32
    %44 = vector.broadcast %cst_32 : f32 to vector<2x1x16x128xf32>
    %45 = arith.maximumf %43, %44 : vector<2x1x16x128xf32>
    %46 = arith.truncf %45 : vector<2x1x16x128xf32> to vector<2x1x16x128xbf16>
    %47 = arith.select %33, %46, %0 : vector<2x1x16x128xbf16>
    %c0_33 = arith.constant 0 : index
    %c9 = arith.constant 9 : index
    %c0_34 = arith.constant 0 : index
    %c0_35 = arith.constant 0 : index
    %48 = vector.load %arg9[%c0_33, %c9, %c0_34, %c0_35] : memref<2x10x16x128xbf16, #tpu.memory_space<vmem>>, vector<2x1x16x128xbf16>
    tpu.vector_store %arg9[%c0_33, %c9, %c0_34, %c0_35], %47 {strides = array<i32>} : memref<2x10x16x128xbf16, #tpu.memory_space<vmem>>, vector<2x1x16x128xbf16>,
    %cst_36 = arith.constant 0.000000e+00 : bf16
    %49 = vector.broadcast %cst_36 : bf16 to vector<2x8x1x128xbf16>
    %c0_37 = arith.constant 0 : index
    %c0_38 = arith.constant 0 : index
    %c0_39 = arith.constant 0 : index
    %c0_40 = arith.constant 0 : index
    %50 = vector.load %arg9[%c0_37, %c0_38, %c0_39, %c0_40] : memref<2x10x16x128xbf16, #tpu.memory_space<vmem>>, vector<2x8x15x128xbf16>
    %c0_41 = arith.constant 0 : index
    %c0_42 = arith.constant 0 : index
    %c1_43 = arith.constant 1 : index
    %c0_44 = arith.constant 0 : index
    %51 = vector.load %arg10[%c0_41, %c0_42, %c1_43, %c0_44] : memref<2x8x16x1152xbf16, #tpu.memory_space<vmem>>, vector<2x8x15x128xbf16>
    tpu.vector_store %arg10[%c0_41, %c0_42, %c1_43, %c0_44], %50 {strides = array<i32>} : memref<2x8x16x1152xbf16, #tpu.memory_space<vmem>>, vector<2x8x15x128xbf16>,
    %c0_45 = arith.constant 0 : index
    %c0_46 = arith.constant 0 : index
    %c0_47 = arith.constant 0 : index
    %c0_48 = arith.constant 0 : index
    %52 = vector.load %arg10[%c0_45, %c0_46, %c0_47, %c0_48] : memref<2x8x16x1152xbf16, #tpu.memory_space<vmem>>, vector<2x8x1x128xbf16>
    tpu.vector_store %arg10[%c0_45, %c0_46, %c0_47, %c0_48], %49 {strides = array<i32>} : memref<2x8x16x1152xbf16, #tpu.memory_space<vmem>>, vector<2x8x1x128xbf16>,
    %c0_49 = arith.constant 0 : index
    %c0_50 = arith.constant 0 : index
    %c0_51 = arith.constant 0 : index
    %c0_52 = arith.constant 0 : index
    %53 = vector.load %arg9[%c0_49, %c0_50, %c0_51, %c0_52] : memref<2x10x16x128xbf16, #tpu.memory_space<vmem>>, vector<2x8x16x128xbf16>
    %c0_53 = arith.constant 0 : index
    %c0_54 = arith.constant 0 : index
    %c0_55 = arith.constant 0 : index
    %c128 = arith.constant 128 : index
    %54 = vector.load %arg10[%c0_53, %c0_54, %c0_55, %c128] : memref<2x8x16x1152xbf16, #tpu.memory_space<vmem>>, vector<2x8x16x128xbf16>
    tpu.vector_store %arg10[%c0_53, %c0_54, %c0_55, %c128], %53 {strides = array<i32>} : memref<2x8x16x1152xbf16, #tpu.memory_space<vmem>>, vector<2x8x16x128xbf16>,
    %c0_56 = arith.constant 0 : index
    %c0_57 = arith.constant 0 : index
    %c1_58 = arith.constant 1 : index
    %c0_59 = arith.constant 0 : index
    %55 = vector.load %arg9[%c0_56, %c0_57, %c1_58, %c0_59] : memref<2x10x16x128xbf16, #tpu.memory_space<vmem>>, vector<2x8x15x128xbf16>
    %c0_60 = arith.constant 0 : index
    %c0_61 = arith.constant 0 : index
    %c0_62 = arith.constant 0 : index
    %c256 = arith.constant 256 : index
    %56 = vector.load %arg10[%c0_60, %c0_61, %c0_62, %c256] : memref<2x8x16x1152xbf16, #tpu.memory_space<vmem>>, vector<2x8x15x128xbf16>
    tpu.vector_store %arg10[%c0_60, %c0_61, %c0_62, %c256], %55 {strides = array<i32>} : memref<2x8x16x1152xbf16, #tpu.memory_space<vmem>>, vector<2x8x15x128xbf16>,
    %c0_63 = arith.constant 0 : index
    %c0_64 = arith.constant 0 : index
    %c15 = arith.constant 15 : index
    %c256_65 = arith.constant 256 : index
    %57 = vector.load %arg10[%c0_63, %c0_64, %c15, %c256_65] : memref<2x8x16x1152xbf16, #tpu.memory_space<vmem>>, vector<2x8x1x128xbf16>
    tpu.vector_store %arg10[%c0_63, %c0_64, %c15, %c256_65], %49 {strides = array<i32>} : memref<2x8x16x1152xbf16, #tpu.memory_space<vmem>>, vector<2x8x1x128xbf16>,
    %c0_66 = arith.constant 0 : index
    %c1_67 = arith.constant 1 : index
    %c0_68 = arith.constant 0 : index
    %c0_69 = arith.constant 0 : index
    %58 = vector.load %arg9[%c0_66, %c1_67, %c0_68, %c0_69] : memref<2x10x16x128xbf16, #tpu.memory_space<vmem>>, vector<2x8x15x128xbf16>
    %c0_70 = arith.constant 0 : index
    %c0_71 = arith.constant 0 : index
    %c1_72 = arith.constant 1 : index
    %c384 = arith.constant 384 : index
    %59 = vector.load %arg10[%c0_70, %c0_71, %c1_72, %c384] : memref<2x8x16x1152xbf16, #tpu.memory_space<vmem>>, vector<2x8x15x128xbf16>
    tpu.vector_store %arg10[%c0_70, %c0_71, %c1_72, %c384], %58 {strides = array<i32>} : memref<2x8x16x1152xbf16, #tpu.memory_space<vmem>>, vector<2x8x15x128xbf16>,
    %c0_73 = arith.constant 0 : index
    %c0_74 = arith.constant 0 : index
    %c0_75 = arith.constant 0 : index
    %c384_76 = arith.constant 384 : index
    %60 = vector.load %arg10[%c0_73, %c0_74, %c0_75, %c384_76] : memref<2x8x16x1152xbf16, #tpu.memory_space<vmem>>, vector<2x8x1x128xbf16>
    tpu.vector_store %arg10[%c0_73, %c0_74, %c0_75, %c384_76], %49 {strides = array<i32>} : memref<2x8x16x1152xbf16, #tpu.memory_space<vmem>>, vector<2x8x1x128xbf16>,
    %c0_77 = arith.constant 0 : index
    %c1_78 = arith.constant 1 : index
    %c0_79 = arith.constant 0 : index
    %c0_80 = arith.constant 0 : index
    %61 = vector.load %arg9[%c0_77, %c1_78, %c0_79, %c0_80] : memref<2x10x16x128xbf16, #tpu.memory_space<vmem>>, vector<2x8x16x128xbf16>
    %c0_81 = arith.constant 0 : index
    %c0_82 = arith.constant 0 : index
    %c0_83 = arith.constant 0 : index
    %c512 = arith.constant 512 : index
    %62 = vector.load %arg10[%c0_81, %c0_82, %c0_83, %c512] : memref<2x8x16x1152xbf16, #tpu.memory_space<vmem>>, vector<2x8x16x128xbf16>
    tpu.vector_store %arg10[%c0_81, %c0_82, %c0_83, %c512], %61 {strides = array<i32>} : memref<2x8x16x1152xbf16, #tpu.memory_space<vmem>>, vector<2x8x16x128xbf16>,
    %c0_84 = arith.constant 0 : index
    %c1_85 = arith.constant 1 : index
    %c1_86 = arith.constant 1 : index
    %c0_87 = arith.constant 0 : index
    %63 = vector.load %arg9[%c0_84, %c1_85, %c1_86, %c0_87] : memref<2x10x16x128xbf16, #tpu.memory_space<vmem>>, vector<2x8x15x128xbf16>
    %c0_88 = arith.constant 0 : index
    %c0_89 = arith.constant 0 : index
    %c0_90 = arith.constant 0 : index
    %c640 = arith.constant 640 : index
    %64 = vector.load %arg10[%c0_88, %c0_89, %c0_90, %c640] : memref<2x8x16x1152xbf16, #tpu.memory_space<vmem>>, vector<2x8x15x128xbf16>
    tpu.vector_store %arg10[%c0_88, %c0_89, %c0_90, %c640], %63 {strides = array<i32>} : memref<2x8x16x1152xbf16, #tpu.memory_space<vmem>>, vector<2x8x15x128xbf16>,
    %c0_91 = arith.constant 0 : index
    %c0_92 = arith.constant 0 : index
    %c15_93 = arith.constant 15 : index
    %c640_94 = arith.constant 640 : index
    %65 = vector.load %arg10[%c0_91, %c0_92, %c15_93, %c640_94] : memref<2x8x16x1152xbf16, #tpu.memory_space<vmem>>, vector<2x8x1x128xbf16>
    tpu.vector_store %arg10[%c0_91, %c0_92, %c15_93, %c640_94], %49 {strides = array<i32>} : memref<2x8x16x1152xbf16, #tpu.memory_space<vmem>>, vector<2x8x1x128xbf16>,
    %c0_95 = arith.constant 0 : index
    %c2 = arith.constant 2 : index
    %c0_96 = arith.constant 0 : index
    %c0_97 = arith.constant 0 : index
    %66 = vector.load %arg9[%c0_95, %c2, %c0_96, %c0_97] : memref<2x10x16x128xbf16, #tpu.memory_space<vmem>>, vector<2x8x15x128xbf16>
    %c0_98 = arith.constant 0 : index
    %c0_99 = arith.constant 0 : index
    %c1_100 = arith.constant 1 : index
    %c768 = arith.constant 768 : index
    %67 = vector.load %arg10[%c0_98, %c0_99, %c1_100, %c768] : memref<2x8x16x1152xbf16, #tpu.memory_space<vmem>>, vector<2x8x15x128xbf16>
    tpu.vector_store %arg10[%c0_98, %c0_99, %c1_100, %c768], %66 {strides = array<i32>} : memref<2x8x16x1152xbf16, #tpu.memory_space<vmem>>, vector<2x8x15x128xbf16>,
    %c0_101 = arith.constant 0 : index
    %c0_102 = arith.constant 0 : index
    %c0_103 = arith.constant 0 : index
    %c768_104 = arith.constant 768 : index
    %68 = vector.load %arg10[%c0_101, %c0_102, %c0_103, %c768_104] : memref<2x8x16x1152xbf16, #tpu.memory_space<vmem>>, vector<2x8x1x128xbf16>
    tpu.vector_store %arg10[%c0_101, %c0_102, %c0_103, %c768_104], %49 {strides = array<i32>} : memref<2x8x16x1152xbf16, #tpu.memory_space<vmem>>, vector<2x8x1x128xbf16>,
    %c0_105 = arith.constant 0 : index
    %c2_106 = arith.constant 2 : index
    %c0_107 = arith.constant 0 : index
    %c0_108 = arith.constant 0 : index
    %69 = vector.load %arg9[%c0_105, %c2_106, %c0_107, %c0_108] : memref<2x10x16x128xbf16, #tpu.memory_space<vmem>>, vector<2x8x16x128xbf16>
    %c0_109 = arith.constant 0 : index
    %c0_110 = arith.constant 0 : index
    %c0_111 = arith.constant 0 : index
    %c896 = arith.constant 896 : index
    %70 = vector.load %arg10[%c0_109, %c0_110, %c0_111, %c896] : memref<2x8x16x1152xbf16, #tpu.memory_space<vmem>>, vector<2x8x16x128xbf16>
    tpu.vector_store %arg10[%c0_109, %c0_110, %c0_111, %c896], %69 {strides = array<i32>} : memref<2x8x16x1152xbf16, #tpu.memory_space<vmem>>, vector<2x8x16x128xbf16>,
    %c0_112 = arith.constant 0 : index
    %c2_113 = arith.constant 2 : index
    %c1_114 = arith.constant 1 : index
    %c0_115 = arith.constant 0 : index
    %71 = vector.load %arg9[%c0_112, %c2_113, %c1_114, %c0_115] : memref<2x10x16x128xbf16, #tpu.memory_space<vmem>>, vector<2x8x15x128xbf16>
    %c0_116 = arith.constant 0 : index
    %c0_117 = arith.constant 0 : index
    %c0_118 = arith.constant 0 : index
    %c1024 = arith.constant 1024 : index
    %72 = vector.load %arg10[%c0_116, %c0_117, %c0_118, %c1024] : memref<2x8x16x1152xbf16, #tpu.memory_space<vmem>>, vector<2x8x15x128xbf16>
    tpu.vector_store %arg10[%c0_116, %c0_117, %c0_118, %c1024], %71 {strides = array<i32>} : memref<2x8x16x1152xbf16, #tpu.memory_space<vmem>>, vector<2x8x15x128xbf16>,
    %c0_119 = arith.constant 0 : index
    %c0_120 = arith.constant 0 : index
    %c15_121 = arith.constant 15 : index
    %c1024_122 = arith.constant 1024 : index
    %73 = vector.load %arg10[%c0_119, %c0_120, %c15_121, %c1024_122] : memref<2x8x16x1152xbf16, #tpu.memory_space<vmem>>, vector<2x8x1x128xbf16>
    tpu.vector_store %arg10[%c0_119, %c0_120, %c15_121, %c1024_122], %49 {strides = array<i32>} : memref<2x8x16x1152xbf16, #tpu.memory_space<vmem>>, vector<2x8x1x128xbf16>,
    %c0_123 = arith.constant 0 : index
    %c0_124 = arith.constant 0 : index
    %c0_125 = arith.constant 0 : index
    %c0_126 = arith.constant 0 : index
    %74 = vector.load %arg10[%c0_123, %c0_124, %c0_125, %c0_126] : memref<2x8x16x1152xbf16, #tpu.memory_space<vmem>>, vector<2x8x16x1152xbf16>
    %75 = vector.shape_cast %74 : vector<2x8x16x1152xbf16> to vector<256x1152xbf16>
    %c0_127 = arith.constant 0 : index
    %c0_128 = arith.constant 0 : index
    %76 = vector.load %arg6[%c0_127, %c0_128] : memref<1152x128xbf16, #tpu.memory_space<vmem>>, vector<1152x128xbf16>
    %cst_129 = arith.constant dense<0.000000e+00> : vector<256x128xf32>
    %77 = tpu.matmul %75, %76, %cst_129 {dimension_numbers = #tpu.dot_dimension_numbers<[1], [0], [0], [1], [0, 0, 1, 1], [], []>} : vector<256x1152xbf16>, vector<1152x128xbf16>, vector<256x128xf32> -> vector<256x128xf32>
    %78 = vector.shape_cast %77 : vector<256x128xf32> to vector<2x8x16x128xf32>
    %79 = arith.truncf %78 : vector<2x8x16x128xf32> to vector<2x8x16x128xbf16>
    %c0_130 = arith.constant 0 : index
    %c0_131 = arith.constant 0 : index
    %c0_132 = arith.constant 0 : index
    %c0_133 = arith.constant 0 : index
    %80 = vector.load %arg7[%c0_130, %c0_131, %c0_132, %c0_133] : memref<2x8x16x128xbf16, #tpu.memory_space<vmem>>, vector<2x8x16x128xbf16>
    tpu.vector_store %arg7[%c0_130, %c0_131, %c0_132, %c0_133], %79 {strides = array<i32>} : memref<2x8x16x128xbf16, #tpu.memory_space<vmem>>, vector<2x8x16x128xbf16>,
    %cst_134 = arith.constant dense<0.000000e+00> : vector<128xf32>
    %81 = vector.multi_reduction <add>, %77, %cst_134 [0] : vector<256x128xf32> to vector<128xf32>
    %82 = vector.shape_cast %81 : vector<128xf32> to vector<1x128xf32>
    %cst_135 = arith.constant 2.560000e+02 : f32
    %83 = vector.broadcast %cst_135 : f32 to vector<1x128xf32>
    %84 = arith.divf %82, %83 : vector<1x128xf32>
    %85 = vector.broadcast %84 : vector<1x128xf32> to vector<256x128xf32>
    %86 = arith.subf %77, %85 : vector<256x128xf32>
    %87 = arith.mulf %86, %86 : vector<256x128xf32>
    %cst_136 = arith.constant dense<0.000000e+00> : vector<128xf32>
    %88 = vector.multi_reduction <add>, %87, %cst_136 [0] : vector<256x128xf32> to vector<128xf32>
    %89 = vector.shape_cast %88 : vector<128xf32> to vector<1x128xf32>
    %90 = vector.shape_cast %82 : vector<1x128xf32> to vector<1x1x128xf32>
    %c0_137 = arith.constant 0 : index
    %c0_138 = arith.constant 0 : index
    %c0_139 = arith.constant 0 : index
    %91 = vector.load %arg8[%c0_137, %c0_138, %c0_139] : memref<1x2x128xf32, #tpu.memory_space<vmem>>, vector<1x1x128xf32>
    tpu.vector_store %arg8[%c0_137, %c0_138, %c0_139], %90 {strides = array<i32>} : memref<1x2x128xf32, #tpu.memory_space<vmem>>, vector<1x1x128xf32>,
    %92 = vector.shape_cast %89 : vector<1x128xf32> to vector<1x1x128xf32>
    %c0_140 = arith.constant 0 : index
    %c1_141 = arith.constant 1 : index
    %c0_142 = arith.constant 0 : index
    %93 = vector.load %arg8[%c0_140, %c1_141, %c0_142] : memref<1x2x128xf32, #tpu.memory_space<vmem>>, vector<1x1x128xf32>
    tpu.vector_store %arg8[%c0_140, %c1_141, %c0_142], %92 {strides = array<i32>} : memref<1x2x128xf32, #tpu.memory_space<vmem>>, vector<1x1x128xf32>,
    return
  }
  func.func @transform_0(%arg0: i32) -> (i32, i32) {
    %c0_i32 = arith.constant 0 : i32
    %c0_i32_0 = arith.constant 0 : i32
    %c0_i32_1 = arith.constant 0 : i32
    return %c0_i32, %c0_i32_0 : i32, i32
  }
  func.func @transform_1(%arg0: i32) -> (i32, i32) {
    %c0_i32 = arith.constant 0 : i32
    %c0_i32_0 = arith.constant 0 : i32
    %c0_i32_1 = arith.constant 0 : i32
    return %c0_i32, %c0_i32_0 : i32, i32
  }
  func.func @transform_2(%arg0: i32) -> (i32, i32, i32, i32) {
    %c0_i32 = arith.constant 0 : i32
    %c0_i32_0 = arith.constant 0 : i32
    %c0_i32_1 = arith.constant 0 : i32
    %c0_i32_2 = arith.constant 0 : i32
    return %c0_i32, %arg0, %c0_i32_0, %c0_i32_1 : i32, i32, i32, i32
  }
  func.func @transform_3(%arg0: i32) -> (i32, i32, i32, i32) {
    %c8_i32 = arith.constant 8 : i32
    %0 = arith.muli %arg0, %c8_i32 : i32
    %c1_i32 = arith.constant 1 : i32
    %1 = arith.subi %0, %c1_i32 : i32
    %c0_i32 = arith.constant 0 : i32
    %2 = arith.maxsi %1, %c0_i32 : i32
    %c0_i32_0 = arith.constant 0 : i32
    %c0_i32_1 = arith.constant 0 : i32
    %c0_i32_2 = arith.constant 0 : i32
    %c0_i32_3 = arith.constant 0 : i32
    return %c0_i32_0, %2, %c0_i32_1, %c0_i32_2 : i32, i32, i32, i32
  }
  func.func @transform_4(%arg0: i32) -> (i32, i32, i32, i32) {
    %c8_i32 = arith.constant 8 : i32
    %0 = arith.muli %arg0, %c8_i32 : i32
    %c8_i32_0 = arith.constant 8 : i32
    %1 = arith.addi %0, %c8_i32_0 : i32
    %c15_i32 = arith.constant 15 : i32
    %2 = arith.minsi %1, %c15_i32 : i32
    %c0_i32 = arith.constant 0 : i32
    %c0_i32_1 = arith.constant 0 : i32
    %c0_i32_2 = arith.constant 0 : i32
    %c0_i32_3 = arith.constant 0 : i32
    return %c0_i32, %2, %c0_i32_1, %c0_i32_2 : i32, i32, i32, i32
  }
  func.func @transform_5(%arg0: i32) -> (i32, i32) {
    %c0_i32 = arith.constant 0 : i32
    %c0_i32_0 = arith.constant 0 : i32
    %c0_i32_1 = arith.constant 0 : i32
    return %c0_i32, %c0_i32_0 : i32, i32
  }
  func.func @transform_6(%arg0: i32) -> (i32, i32, i32, i32) {
    %c0_i32 = arith.constant 0 : i32
    %c0_i32_0 = arith.constant 0 : i32
    %c0_i32_1 = arith.constant 0 : i32
    %c0_i32_2 = arith.constant 0 : i32
    return %c0_i32, %arg0, %c0_i32_0, %c0_i32_1 : i32, i32, i32, i32
  }
  func.func @transform_7(%arg0: i32) -> (i32, i32, i32) {
    %c0_i32 = arith.constant 0 : i32
    %c0_i32_0 = arith.constant 0 : i32
    %c0_i32_1 = arith.constant 0 : i32
    return %arg0, %c0_i32, %c0_i32_0 : i32, i32, i32
  }
}

</mosaic_0001>

<llo_original>
// kernel: double_conv.5
$region0: #{double_conv.5}
  #allocation0 [shape = 'u32[]', space=smem, size = 0x4, offset = 0x4, fixed_abs, tag = 'smem constant byte address 0x4 - core index']
  #allocation1 [shape = 'u32[144,128]{1,0:T(1,128)}', space=vmem, size = 0x12000, scoped, tag = 'internal scratch']
  %s0 = inlined_call_operand.vmem [shape: bf16[512,128], index: 0, kind: input, shape index: {}]
  %s1 = inlined_call_operand.vmem [shape: f32[1,128], index: 1, kind: input, shape index: {}]
  %s2 = inlined_call_operand.vmem [shape: f32[1,128], index: 2, kind: input, shape index: {}]
  %s3 = inlined_call_operand.vmem [shape: f32[512,128], index: 3, kind: output, shape index: {}]
  %s4 = sld [smem:[#allocation0]]
  $region45: #{double_conv.5} parent=0
    _
  %s6 = ssub.s32 1, %s4
  %s7 = scalar_select 0, %s6, %s4
  loop: start=0, step=1, limit=4
  $region2: #{double_conv.5} parent=0 // loop_pre_header
    _
  $region3: #{double_conv.5} parent=0 // loop_header
    %s9 = sphi 0, %s13
    %p10 = scmp.ge.s32.totalorder %s9, 4
    %s19 = sphi 0, %s21
    %s22 = sphi 0, %s19
    %s23 = sphi 0, %s22
    %s39 = sphi 0, %s23
    %s43 = sphi 0, %s43
    %s45 = sphi 0, %s43
    %s46 = sphi 0, %s45
    %s60 = sphi 0, %s46
    %s64 = sphi 0, %s64
    %s66 = sphi 0, %s64
    %s67 = sphi 0, %s66
    %s81 = sphi 0, %s67
    %s87 = sphi 0, %s89
    %s90 = sphi 0, %s87
    %s91 = sphi 0, %s90
    %s107 = sphi 0, %s91
  $region4: #{double_conv.5} parent=0 // loop_header_branch
    %12 = sbr.rel (%p10) target = $region8
  $region5: #{double_conv.5} parent=0 // loop_body
    %s14 = ssub.s32 %s9, 1
    %s15 = ssub.s32 %s9, 2
    %s16 = sadd.s32 %s9, 1
    %s17 = ssub.s32 %s9, %s16
    %p18 = scmp.eq.s32.totalorder %s17, 0
    %s20 = sadd.s32 %s19, 1
    %s21 = scalar_select %p18, %s19, %s20
    %p24 = pneg %p18
    %p25 = scmp.eq.s32.totalorder %s9, 1
    %p26 = por %p24, %p25
    %p27 = scmp.ne.s32.totalorder %s19, %s22
    %p28 = scmp.eq.s32.totalorder %s9, 0
    %p29 = por %p27, %p28
    %p30 = scmp.ne.s32.totalorder %s19, %s22
    %p31 = scmp.eq.s32.totalorder %s14, 1
    %p32 = por %p30, %p31
    %p33 = scmp.ne.s32.totalorder %s22, %s23
    %p34 = scmp.eq.s32.totalorder %s14, 0
    %p35 = por %p33, %p34
    %p36 = scmp.ne.s32.totalorder %s22, %s23
    %p37 = scmp.eq.s32.totalorder %s15, 1
    %p38 = por %p36, %p37
    %p40 = scmp.ne.s32.totalorder %s23, %s39
    %p41 = scmp.eq.s32.totalorder %s15, 0
    %p42 = por %p40, %p41
    %s44 = sadd.s32 %s43, 1
    %p47 = scmp.eq.s32.totalorder %s9, 1
    %p48 = scmp.ne.s32.totalorder %s43, %s45
    %p49 = scmp.eq.s32.totalorder %s9, 0
    %p50 = por %p48, %p49
    %p51 = scmp.ne.s32.totalorder %s43, %s45
    %p52 = scmp.eq.s32.totalorder %s14, 1
    %p53 = por %p51, %p52
    %p54 = scmp.ne.s32.totalorder %s45, %s46
    %p55 = scmp.eq.s32.totalorder %s14, 0
    %p56 = por %p54, %p55
    %p57 = scmp.ne.s32.totalorder %s45, %s46
    %p58 = scmp.eq.s32.totalorder %s15, 1
    %p59 = por %p57, %p58
    %p61 = scmp.ne.s32.totalorder %s46, %s60
    %p62 = scmp.eq.s32.totalorder %s15, 0
    %p63 = por %p61, %p62
    %s65 = sadd.s32 %s64, 1
    %p68 = scmp.eq.s32.totalorder %s9, 1
    %p69 = scmp.ne.s32.totalorder %s64, %s66
    %p70 = scmp.eq.s32.totalorder %s9, 0
    %p71 = por %p69, %p70
    %p72 = scmp.ne.s32.totalorder %s64, %s66
    %p73 = scmp.eq.s32.totalorder %s14, 1
    %p74 = por %p72, %p73
    %p75 = scmp.ne.s32.totalorder %s66, %s67
    %p76 = scmp.eq.s32.totalorder %s14, 0
    %p77 = por %p75, %p76
    %p78 = scmp.ne.s32.totalorder %s66, %s67
    %p79 = scmp.eq.s32.totalorder %s15, 1
    %p80 = por %p78, %p79
    %p82 = scmp.ne.s32.totalorder %s67, %s81
    %p83 = scmp.eq.s32.totalorder %s15, 0
    %p84 = por %p82, %p83
    %s85 = ssub.s32 %s9, %s16
    %p86 = scmp.eq.s32.totalorder %s85, 0
    %s88 = sadd.s32 %s87, 1
    %s89 = scalar_select %p86, %s87, %s88
    %p92 = pneg %p86
    %p93 = scmp.eq.s32.totalorder %s9, 1
    %p94 = por %p92, %p93
    %p95 = scmp.ne.s32.totalorder %s87, %s90
    %p96 = scmp.eq.s32.totalorder %s9, 0
    %p97 = por %p95, %p96
    %p98 = scmp.ne.s32.totalorder %s87, %s90
    %p99 = scmp.eq.s32.totalorder %s14, 1
    %p100 = por %p98, %p99
    %p101 = scmp.ne.s32.totalorder %s90, %s91
    %p102 = scmp.eq.s32.totalorder %s14, 0
    %p103 = por %p101, %p102
    %p104 = scmp.ne.s32.totalorder %s90, %s91
    %p105 = scmp.eq.s32.totalorder %s15, 1
    %p106 = por %p104, %p105
    %p108 = scmp.ne.s32.totalorder %s91, %s107
    %p109 = scmp.eq.s32.totalorder %s15, 0
    %p110 = por %p108, %p109
    %p111 = scmp.le.s32.totalorder 1, %s9
    %p112 = scmp.lt.s32.totalorder %s9, 3
    %p113 = pnand %p111, %p112
    %p114 = pneg %p113
    // Predicated region
    $region9: #{double_conv.5} parent=5 // pred_check
      _
    $region10: #{double_conv.5} parent=5 // pred_check_branch
      %116 = sbr.rel (%p113) target = $region12
    $region11: #{double_conv.5} parent=5 // pred_region
      %s117 = ssub.s32 %s9, 1
      // Predicated region
      $region13: #{double_conv.5} parent=11 // pred_check
        %p118 = pneg %p56
      $region14: #{double_conv.5} parent=11 // pred_check_branch
        %120 = sbr.rel (%p118) target = $region16
      $region15: #{double_conv.5} parent=11 // pred_region
        _
      $region16: #{double_conv.5} parent=11 // pred_fallthru
        _
      // Predicated region
      $region17: #{double_conv.5} parent=11 // pred_check
        %p121 = pneg %p77
      $region18: #{double_conv.5} parent=11 // pred_check_branch
        %123 = sbr.rel (%p121) target = $region20
      $region19: #{double_conv.5} parent=11 // pred_region
        _
      $region20: #{double_conv.5} parent=11 // pred_fallthru
        _
    $region12: #{double_conv.5} parent=5 // pred_fallthru
      _
    %p124 = scmp.lt.s32.totalorder %s9, 2
    // Predicated region
    $region21: #{double_conv.5} parent=5 // pred_check
      %p125 = pneg %p124
    $region22: #{double_conv.5} parent=5 // pred_check_branch
      %127 = sbr.rel (%p125) target = $region24
    $region23: #{double_conv.5} parent=5 // pred_region
      // Predicated region
      $region25: #{double_conv.5} parent=23 // pred_check
        %p128 = pneg %p29
      $region26: #{double_conv.5} parent=23 // pred_check_branch
        %130 = sbr.rel (%p128) target = $region28
      $region27: #{double_conv.5} parent=23 // pred_region
        %s131 = smul.u32 32, %s9
        %p132 = scmp.lt.s32.totalorder %s131, 63
        %s133 = scalar_select %p132, %s131, 63
        %s134 = smul.addr %s133, 4
        %s135 = scalar_lea.vmem %s0, %s134
        %s136 = smul.u32 32, %s9
      $region28: #{double_conv.5} parent=23 // pred_fallthru
        _
    $region24: #{double_conv.5} parent=5 // pred_fallthru
      _
    %p137 = scmp.le.s32.totalorder 1, %s9
    %p138 = scmp.lt.s32.totalorder %s9, 3
    %p139 = pnand %p137, %p138
    %p140 = pneg %p139
    // Predicated region
    $region29: #{double_conv.5} parent=5 // pred_check
      _
    $region30: #{double_conv.5} parent=5 // pred_check_branch
      %142 = sbr.rel (%p139) target = $region32
    $region31: #{double_conv.5} parent=5 // pred_region
      %s143 = ssub.s32 %s9, 1
      %s144 = smul.u32 32, %s14
      %p145 = scmp.lt.s32.totalorder %s144, 63
      %s146 = scalar_select %p145, %s144, 63
      %s147 = smul.addr %s146, 4
      %s148 = scalar_lea.vmem %s0, %s147
      %p149 = pneg %p35
      %p150 = pneg %p32
      %p151 = pneg %p56
      %p152 = pneg %p53
      %p153 = pneg %p77
      %p154 = pneg %p74
      %p155 = pneg %p103
      %p156 = pneg %p100
      %s157 = smul.u32 32, %s14
      %p158 = scmp.lt.s32.totalorder %s157, 63
      %s159 = scalar_select %p158, %s157, 63
      %s160 = smul.addr %s159, 8
      %s161 = scalar_lea.vmem %s3, %s160
      %s162 = smul.u32 32, %s14
      %p163 = scmp.lt.s32.totalorder %s162, 63
      %s164 = scalar_select %p163, %s162, 63
      %s165 = smul.addr %s164, 4
      %s166 = scalar_lea.vmem %s0, %s165
      %s167 = smul.u32 32, %s14
      %s168 = smul.u32 32, %s14
      %p169 = scmp.lt.s32.totalorder %s168, 63
      %s170 = scalar_select %p169, %s168, 63
      %s171 = smul.addr %s170, 8
      %s172 = scalar_lea.vmem %s3, %s171
      %s173 = smul.u32 32, %s14
      %v174 = vld [vmem:[%s166] sm:$0xf]
      %v175 = vld [vmem:[%s166 + $0x4] sm:$0xf]
      %v176 = vld [vmem:[%s166 + $0x8] sm:$0xf]
      %v177 = vld [vmem:[%s166 + $0xc] sm:$0xf]
      %v178 = vld [vmem:[%s166 + $0x10] sm:$0xf]
      %v179 = vld [vmem:[%s166 + $0x14] sm:$0xf]
      %v180 = vld [vmem:[%s166 + $0x18] sm:$0xf]
      %v181 = vld [vmem:[%s166 + $0x1c] sm:$0xf]
      %v182 = vld [vmem:[%s166 + $0x20] sm:$0xf]
      %v183 = vld [vmem:[%s166 + $0x24] sm:$0xf]
      %v184 = vld [vmem:[%s166 + $0x28] sm:$0xf]
      %v185 = vld [vmem:[%s166 + $0x2c] sm:$0xf]
      %v186 = vld [vmem:[%s166 + $0x30] sm:$0xf]
      %v187 = vld [vmem:[%s166 + $0x34] sm:$0xf]
      %v188 = vld [vmem:[%s166 + $0x38] sm:$0xf]
      %v189 = vld [vmem:[%s166 + $0x3c] sm:$0xf]
      %v190 = vld [vmem:[%s166 + $0x40] sm:$0xf]
      %v191 = vld [vmem:[%s166 + $0x44] sm:$0xf]
      %v192 = vld [vmem:[%s166 + $0x48] sm:$0xf]
      %v193 = vld [vmem:[%s166 + $0x4c] sm:$0xf]
      %v194 = vld [vmem:[%s166 + $0x50] sm:$0xf]
      %v195 = vld [vmem:[%s166 + $0x54] sm:$0xf]
      %v196 = vld [vmem:[%s166 + $0x58] sm:$0xf]
      %v197 = vld [vmem:[%s166 + $0x5c] sm:$0xf]
      %v198 = vld [vmem:[%s166 + $0x60] sm:$0xf]
      %v199 = vld [vmem:[%s166 + $0x64] sm:$0xf]
      %v200 = vld [vmem:[%s166 + $0x68] sm:$0xf]
      %v201 = vld [vmem:[%s166 + $0x6c] sm:$0xf]
      %v202 = vld [vmem:[%s166 + $0x70] sm:$0xf]
      %v203 = vld [vmem:[%s166 + $0x74] sm:$0xf]
      %v204 = vld [vmem:[%s166 + $0x78] sm:$0xf]
      %v205 = vld [vmem:[%s166 + $0x7c] sm:$0xf]
      %v206 = vunpack.c.l.bf16 %v174
      %v207 = vunpack.c.l.bf16 %v175
      %v208 = vunpack.c.l.bf16 %v176
      %v209 = vunpack.c.l.bf16 %v177
      %v210 = vunpack.c.l.bf16 %v178
      %v211 = vunpack.c.l.bf16 %v179
      %v212 = vunpack.c.l.bf16 %v180
      %v213 = vunpack.c.l.bf16 %v181
      %v214 = vunpack.c.l.bf16 %v182
      %v215 = vunpack.c.l.bf16 %v183
      %v216 = vunpack.c.l.bf16 %v184
      %v217 = vunpack.c.l.bf16 %v185
      %v218 = vunpack.c.l.bf16 %v186
      %v219 = vunpack.c.l.bf16 %v187
      %v220 = vunpack.c.l.bf16 %v188
      %v221 = vunpack.c.l.bf16 %v189
      %v222 = vunpack.c.l.bf16 %v190
      %v223 = vunpack.c.l.bf16 %v191
      %v224 = vunpack.c.l.bf16 %v192
      %v225 = vunpack.c.l.bf16 %v193
      %v226 = vunpack.c.l.bf16 %v194
      %v227 = vunpack.c.l.bf16 %v195
      %v228 = vunpack.c.l.bf16 %v196
      %v229 = vunpack.c.l.bf16 %v197
      %v230 = vunpack.c.l.bf16 %v198
      %v231 = vunpack.c.l.bf16 %v199
      %v232 = vunpack.c.l.bf16 %v200
      %v233 = vunpack.c.l.bf16 %v201
      %v234 = vunpack.c.l.bf16 %v202
      %v235 = vunpack.c.l.bf16 %v203
      %v236 = vunpack.c.l.bf16 %v204
      %v237 = vunpack.c.l.bf16 %v205
      %v238 = vld [vmem:[%s1] sm:$0x1]
      %v240 = vlaneseq
      %v241 = vshrl.u32 %v240, 7
      %v242 = vsub.s32 0, %v241
      %v243 = vrot.slane %v238, %v242
      %v245 = vmul.f32 %v206, %v243
      %v246 = vmul.f32 %v207, %v243
      %v247 = vmul.f32 %v208, %v243
      %v248 = vmul.f32 %v209, %v243
      %v249 = vmul.f32 %v210, %v243
      %v250 = vmul.f32 %v211, %v243
      %v251 = vmul.f32 %v212, %v243
      %v252 = vmul.f32 %v213, %v243
      %v253 = vmul.f32 %v214, %v243
      %v254 = vmul.f32 %v215, %v243
      %v255 = vmul.f32 %v216, %v243
      %v256 = vmul.f32 %v217, %v243
      %v257 = vmul.f32 %v218, %v243
      %v258 = vmul.f32 %v219, %v243
      %v259 = vmul.f32 %v220, %v243
      %v260 = vmul.f32 %v221, %v243
      %v261 = vmul.f32 %v222, %v243
      %v262 = vmul.f32 %v223, %v243
      %v263 = vmul.f32 %v224, %v243
      %v264 = vmul.f32 %v225, %v243
      %v265 = vmul.f32 %v226, %v243
      %v266 = vmul.f32 %v227, %v243
      %v267 = vmul.f32 %v228, %v243
      %v268 = vmul.f32 %v229, %v243
      %v269 = vmul.f32 %v230, %v243
      %v270 = vmul.f32 %v231, %v243
      %v271 = vmul.f32 %v232, %v243
      %v272 = vmul.f32 %v233, %v243
      %v273 = vmul.f32 %v234, %v243
      %v274 = vmul.f32 %v235, %v243
      %v275 = vmul.f32 %v236, %v243
      %v276 = vmul.f32 %v237, %v243
      %v277 = vld [vmem:[%s2] sm:$0x1]
      %v279 = vlaneseq
      %v280 = vshrl.u32 %v279, 7
      %v281 = vsub.s32 0, %v280
      %v282 = vrot.slane %v277, %v281
      %v284 = vadd.f32 %v245, %v282
      %v285 = vadd.f32 %v246, %v282
      %v286 = vadd.f32 %v247, %v282
      %v287 = vadd.f32 %v248, %v282
      %v288 = vadd.f32 %v249, %v282
      %v289 = vadd.f32 %v250, %v282
      %v290 = vadd.f32 %v251, %v282
      %v291 = vadd.f32 %v252, %v282
      %v292 = vadd.f32 %v253, %v282
      %v293 = vadd.f32 %v254, %v282
      %v294 = vadd.f32 %v255, %v282
      %v295 = vadd.f32 %v256, %v282
      %v296 = vadd.f32 %v257, %v282
      %v297 = vadd.f32 %v258, %v282
      %v298 = vadd.f32 %v259, %v282
      %v299 = vadd.f32 %v260, %v282
      %v300 = vadd.f32 %v261, %v282
      %v301 = vadd.f32 %v262, %v282
      %v302 = vadd.f32 %v263, %v282
      %v303 = vadd.f32 %v264, %v282
      %v304 = vadd.f32 %v265, %v282
      %v305 = vadd.f32 %v266, %v282
      %v306 = vadd.f32 %v267, %v282
      %v307 = vadd.f32 %v268, %v282
      %v308 = vadd.f32 %v269, %v282
      %v309 = vadd.f32 %v270, %v282
      %v310 = vadd.f32 %v271, %v282
      %v311 = vadd.f32 %v272, %v282
      %v312 = vadd.f32 %v273, %v282
      %v313 = vadd.f32 %v274, %v282
      %v314 = vadd.f32 %v275, %v282
      %v315 = vadd.f32 %v276, %v282
      %v316 = vmax.f32 %v284, 0.0
      %v317 = vmax.f32 %v285, 0.0
      %v318 = vmax.f32 %v286, 0.0
      %v319 = vmax.f32 %v287, 0.0
      %v320 = vmax.f32 %v288, 0.0
      %v321 = vmax.f32 %v289, 0.0
      %v322 = vmax.f32 %v290, 0.0
      %v323 = vmax.f32 %v291, 0.0
      %v324 = vmax.f32 %v292, 0.0
      %v325 = vmax.f32 %v293, 0.0
      %v326 = vmax.f32 %v294, 0.0
      %v327 = vmax.f32 %v295, 0.0
      %v328 = vmax.f32 %v296, 0.0
      %v329 = vmax.f32 %v297, 0.0
      %v330 = vmax.f32 %v298, 0.0
      %v331 = vmax.f32 %v299, 0.0
      %v332 = vmax.f32 %v300, 0.0
      %v333 = vmax.f32 %v301, 0.0
      %v334 = vmax.f32 %v302, 0.0
      %v335 = vmax.f32 %v303, 0.0
      %v336 = vmax.f32 %v304, 0.0
      %v337 = vmax.f32 %v305, 0.0
      %v338 = vmax.f32 %v306, 0.0
      %v339 = vmax.f32 %v307, 0.0
      %v340 = vmax.f32 %v308, 0.0
      %v341 = vmax.f32 %v309, 0.0
      %v342 = vmax.f32 %v310, 0.0
      %v343 = vmax.f32 %v311, 0.0
      %v344 = vmax.f32 %v312, 0.0
      %v345 = vmax.f32 %v313, 0.0
      %v346 = vmax.f32 %v314, 0.0
      %v347 = vmax.f32 %v315, 0.0
      %348 = vst [vmem:[%s172] sm:$0xff] %v316
      %349 = vst [vmem:[%s172 + $0x8] sm:$0xff] %v317
      %350 = vst [vmem:[%s172 + $0x10] sm:$0xff] %v318
      %351 = vst [vmem:[%s172 + $0x18] sm:$0xff] %v319
      %352 = vst [vmem:[%s172 + $0x20] sm:$0xff] %v320
      %353 = vst [vmem:[%s172 + $0x28] sm:$0xff] %v321
      %354 = vst [vmem:[%s172 + $0x30] sm:$0xff] %v322
      %355 = vst [vmem:[%s172 + $0x38] sm:$0xff] %v323
      %356 = vst [vmem:[%s172 + $0x40] sm:$0xff] %v324
      %357 = vst [vmem:[%s172 + $0x48] sm:$0xff] %v325
      %358 = vst [vmem:[%s172 + $0x50] sm:$0xff] %v326
      %359 = vst [vmem:[%s172 + $0x58] sm:$0xff] %v327
      %360 = vst [vmem:[%s172 + $0x60] sm:$0xff] %v328
      %361 = vst [vmem:[%s172 + $0x68] sm:$0xff] %v329
      %362 = vst [vmem:[%s172 + $0x70] sm:$0xff] %v330
      %363 = vst [vmem:[%s172 + $0x78] sm:$0xff] %v331
      %364 = vst [vmem:[%s172 + $0x80] sm:$0xff] %v332
      %365 = vst [vmem:[%s172 + $0x88] sm:$0xff] %v333
      %366 = vst [vmem:[%s172 + $0x90] sm:$0xff] %v334
      %367 = vst [vmem:[%s172 + $0x98] sm:$0xff] %v335
      %368 = vst [vmem:[%s172 + $0xa0] sm:$0xff] %v336
      %369 = vst [vmem:[%s172 + $0xa8] sm:$0xff] %v337
      %370 = vst [vmem:[%s172 + $0xb0] sm:$0xff] %v338
      %371 = vst [vmem:[%s172 + $0xb8] sm:$0xff] %v339
      %372 = vst [vmem:[%s172 + $0xc0] sm:$0xff] %v340
      %373 = vst [vmem:[%s172 + $0xc8] sm:$0xff] %v341
      %374 = vst [vmem:[%s172 + $0xd0] sm:$0xff] %v342
      %375 = vst [vmem:[%s172 + $0xd8] sm:$0xff] %v343
      %376 = vst [vmem:[%s172 + $0xe0] sm:$0xff] %v344
      %377 = vst [vmem:[%s172 + $0xe8] sm:$0xff] %v345
      %378 = vst [vmem:[%s172 + $0xf0] sm:$0xff] %v346
      %379 = vst [vmem:[%s172 + $0xf8] sm:$0xff] %v347
      %s380 = smul.u32 32, %s14
      %p381 = scmp.lt.s32.totalorder %s380, 63
      %s382 = scalar_select %p381, %s380, 63
      %s383 = smul.addr %s382, 8
      %s384 = scalar_lea.vmem %s3, %s383
      // Predicated region
      $region33: #{double_conv.5} parent=31 // pred_check
        %p385 = pneg %p100
      $region34: #{double_conv.5} parent=31 // pred_check_branch
        %387 = sbr.rel (%p385) target = $region36
      $region35: #{double_conv.5} parent=31 // pred_region
        %s388 = smul.u32 32, %s14
      $region36: #{double_conv.5} parent=31 // pred_fallthru
        _
    $region32: #{double_conv.5} parent=5 // pred_fallthru
      _
    %p389 = scmp.le.s32.totalorder 2, %s9
    // Predicated region
    $region37: #{double_conv.5} parent=5 // pred_check
      %p390 = pneg %p389
    $region38: #{double_conv.5} parent=5 // pred_check_branch
      %392 = sbr.rel (%p390) target = $region40
    $region39: #{double_conv.5} parent=5 // pred_region
      %s393 = ssub.s32 %s9, 2
      // Predicated region
      $region41: #{double_conv.5} parent=39 // pred_check
        %p394 = pneg %p106
      $region42: #{double_conv.5} parent=39 // pred_check_branch
        %396 = sbr.rel (%p394) target = $region44
      $region43: #{double_conv.5} parent=39 // pred_region
        %s397 = smul.u32 32, %s15
        %p398 = scmp.lt.s32.totalorder %s397, 63
        %s399 = scalar_select %p398, %s397, 63
        %s400 = smul.addr %s399, 8
        %s401 = scalar_lea.vmem %s3, %s400
      $region44: #{double_conv.5} parent=39 // pred_fallthru
        _
    $region40: #{double_conv.5} parent=5 // pred_fallthru
      _
  $region6: #{double_conv.5} parent=0 // loop_footer
    %s13 = sadd.s32 1, %s9
  $region7: #{double_conv.5} parent=0 // loop_footer_branch
    %8 = sbr.rel target = $region3
  $region8: #{double_conv.5} parent=0 // loop_exit
    _

// kernel: double_conv.3
$region0: #{double_conv.3}
  #allocation0 [shape = 'u32[]', space=smem, size = 0x4, offset = 0x4, fixed_abs, tag = 'smem constant byte address 0x4 - core index']
  #allocation1 [shape = 'u32[144,128]{1,0:T(1,128)}', space=vmem, size = 0x12000, scoped, tag = 'internal scratch']
  %s0 = inlined_call_operand.vmem [shape: bf16[512,128], index: 0, kind: input, shape index: {}]
  %s1 = inlined_call_operand.vmem [shape: bf16[128,128], index: 1, kind: input, shape index: {}]
  %s2 = inlined_call_operand.vmem [shape: bf16[512,128], index: 2, kind: output, shape index: {0}]
  %s3 = inlined_call_operand.vmem [shape: f32[2,2,128], index: 3, kind: output, shape index: {1}]
  %4 = xla_tuple %s2, %s3
  %s5 = sld [smem:[#allocation0]]
  $region49: #{double_conv.3} parent=0
    _
  %s7 = ssub.s32 1, %s5
  %s8 = scalar_select 0, %s7, %s5
  loop: start=0, step=1, limit=4
  $region2: #{double_conv.3} parent=0 // loop_pre_header
    _
  $region3: #{double_conv.3} parent=0 // loop_header
    %s10 = sphi 0, %s14
    %p11 = scmp.ge.s32.totalorder %s10, 4
    %s20 = sphi 0, %s22
    %s23 = sphi 0, %s20
    %s24 = sphi 0, %s23
    %s40 = sphi 0, %s24
    %s44 = sphi 0, %s44
    %s46 = sphi 0, %s44
    %s47 = sphi 0, %s46
    %s61 = sphi 0, %s47
    %s67 = sphi 0, %s69
    %s70 = sphi 0, %s67
    %s71 = sphi 0, %s70
    %s87 = sphi 0, %s71
    %s93 = sphi 0, %s95
    %s96 = sphi 0, %s93
    %s97 = sphi 0, %s96
    %s113 = sphi 0, %s97
  $region4: #{double_conv.3} parent=0 // loop_header_branch
    %13 = sbr.rel (%p11) target = $region8
  $region5: #{double_conv.3} parent=0 // loop_body
    %s15 = ssub.s32 %s10, 1
    %s16 = ssub.s32 %s10, 2
    %s17 = sadd.s32 %s10, 1
    %s18 = ssub.s32 %s10, %s17
    %p19 = scmp.eq.s32.totalorder %s18, 0
    %s21 = sadd.s32 %s20, 1
    %s22 = scalar_select %p19, %s20, %s21
    %p25 = pneg %p19
    %p26 = scmp.eq.s32.totalorder %s10, 1
    %p27 = por %p25, %p26
    %p28 = scmp.ne.s32.totalorder %s20, %s23
    %p29 = scmp.eq.s32.totalorder %s10, 0
    %p30 = por %p28, %p29
    %p31 = scmp.ne.s32.totalorder %s20, %s23
    %p32 = scmp.eq.s32.totalorder %s15, 1
    %p33 = por %p31, %p32
    %p34 = scmp.ne.s32.totalorder %s23, %s24
    %p35 = scmp.eq.s32.totalorder %s15, 0
    %p36 = por %p34, %p35
    %p37 = scmp.ne.s32.totalorder %s23, %s24
    %p38 = scmp.eq.s32.totalorder %s16, 1
    %p39 = por %p37, %p38
    %p41 = scmp.ne.s32.totalorder %s24, %s40
    %p42 = scmp.eq.s32.totalorder %s16, 0
    %p43 = por %p41, %p42
    %s45 = sadd.s32 %s44, 1
    %p48 = scmp.eq.s32.totalorder %s10, 1
    %p49 = scmp.ne.s32.totalorder %s44, %s46
    %p50 = scmp.eq.s32.totalorder %s10, 0
    %p51 = por %p49, %p50
    %p52 = scmp.ne.s32.totalorder %s44, %s46
    %p53 = scmp.eq.s32.totalorder %s15, 1
    %p54 = por %p52, %p53
    %p55 = scmp.ne.s32.totalorder %s46, %s47
    %p56 = scmp.eq.s32.totalorder %s15, 0
    %p57 = por %p55, %p56
    %p58 = scmp.ne.s32.totalorder %s46, %s47
    %p59 = scmp.eq.s32.totalorder %s16, 1
    %p60 = por %p58, %p59
    %p62 = scmp.ne.s32.totalorder %s47, %s61
    %p63 = scmp.eq.s32.totalorder %s16, 0
    %p64 = por %p62, %p63
    %s65 = ssub.s32 %s10, %s17
    %p66 = scmp.eq.s32.totalorder %s65, 0
    %s68 = sadd.s32 %s67, 1
    %s69 = scalar_select %p66, %s67, %s68
    %p72 = pneg %p66
    %p73 = scmp.eq.s32.totalorder %s10, 1
    %p74 = por %p72, %p73
    %p75 = scmp.ne.s32.totalorder %s67, %s70
    %p76 = scmp.eq.s32.totalorder %s10, 0
    %p77 = por %p75, %p76
    %p78 = scmp.ne.s32.totalorder %s67, %s70
    %p79 = scmp.eq.s32.totalorder %s15, 1
    %p80 = por %p78, %p79
    %p81 = scmp.ne.s32.totalorder %s70, %s71
    %p82 = scmp.eq.s32.totalorder %s15, 0
    %p83 = por %p81, %p82
    %p84 = scmp.ne.s32.totalorder %s70, %s71
    %p85 = scmp.eq.s32.totalorder %s16, 1
    %p86 = por %p84, %p85
    %p88 = scmp.ne.s32.totalorder %s71, %s87
    %p89 = scmp.eq.s32.totalorder %s16, 0
    %p90 = por %p88, %p89
    %s91 = ssub.s32 %s10, %s17
    %p92 = scmp.eq.s32.totalorder %s91, 0
    %s94 = sadd.s32 %s93, 1
    %s95 = scalar_select %p92, %s93, %s94
    %p98 = pneg %p92
    %p99 = scmp.eq.s32.totalorder %s10, 1
    %p100 = por %p98, %p99
    %p101 = scmp.ne.s32.totalorder %s93, %s96
    %p102 = scmp.eq.s32.totalorder %s10, 0
    %p103 = por %p101, %p102
    %p104 = scmp.ne.s32.totalorder %s93, %s96
    %p105 = scmp.eq.s32.totalorder %s15, 1
    %p106 = por %p104, %p105
    %p107 = scmp.ne.s32.totalorder %s96, %s97
    %p108 = scmp.eq.s32.totalorder %s15, 0
    %p109 = por %p107, %p108
    %p110 = scmp.ne.s32.totalorder %s96, %s97
    %p111 = scmp.eq.s32.totalorder %s16, 1
    %p112 = por %p110, %p111
    %p114 = scmp.ne.s32.totalorder %s97, %s113
    %p115 = scmp.eq.s32.totalorder %s16, 0
    %p116 = por %p114, %p115
    %p117 = scmp.le.s32.totalorder 1, %s10
    %p118 = scmp.lt.s32.totalorder %s10, 3
    %p119 = pnand %p117, %p118
    %p120 = pneg %p119
    // Predicated region
    $region9: #{double_conv.3} parent=5 // pred_check
      _
    $region10: #{double_conv.3} parent=5 // pred_check_branch
      %122 = sbr.rel (%p119) target = $region12
    $region11: #{double_conv.3} parent=5 // pred_region
      %s123 = ssub.s32 %s10, 1
      // Predicated region
      $region13: #{double_conv.3} parent=11 // pred_check
        %p124 = pneg %p57
      $region14: #{double_conv.3} parent=11 // pred_check_branch
        %126 = sbr.rel (%p124) target = $region16
      $region15: #{double_conv.3} parent=11 // pred_region
        _
      $region16: #{double_conv.3} parent=11 // pred_fallthru
        _
    $region12: #{double_conv.3} parent=5 // pred_fallthru
      _
    %p127 = scmp.lt.s32.totalorder %s10, 2
    // Predicated region
    $region17: #{double_conv.3} parent=5 // pred_check
      %p128 = pneg %p127
    $region18: #{double_conv.3} parent=5 // pred_check_branch
      %130 = sbr.rel (%p128) target = $region20
    $region19: #{double_conv.3} parent=5 // pred_region
      // Predicated region
      $region21: #{double_conv.3} parent=19 // pred_check
        %p131 = pneg %p30
      $region22: #{double_conv.3} parent=19 // pred_check_branch
        %133 = sbr.rel (%p131) target = $region24
      $region23: #{double_conv.3} parent=19 // pred_region
        %s134 = smul.u32 32, %s10
        %p135 = scmp.lt.s32.totalorder %s134, 63
        %s136 = scalar_select %p135, %s134, 63
        %s137 = smul.addr %s136, 4
        %s138 = scalar_lea.vmem %s0, %s137
        %s139 = smul.u32 32, %s10
      $region24: #{double_conv.3} parent=19 // pred_fallthru
        _
    $region20: #{double_conv.3} parent=5 // pred_fallthru
      _
    %p140 = scmp.le.s32.totalorder 1, %s10
    %p141 = scmp.lt.s32.totalorder %s10, 3
    %p142 = pnand %p140, %p141
    %p143 = pneg %p142
    // Predicated region
    $region25: #{double_conv.3} parent=5 // pred_check
      _
    $region26: #{double_conv.3} parent=5 // pred_check_branch
      %145 = sbr.rel (%p142) target = $region28
    $region27: #{double_conv.3} parent=5 // pred_region
      %s146 = ssub.s32 %s10, 1
      %s147 = smul.u32 32, %s15
      %p148 = scmp.lt.s32.totalorder %s147, 63
      %s149 = scalar_select %p148, %s147, 63
      %s150 = smul.addr %s149, 4
      %s151 = scalar_lea.vmem %s0, %s150
      %p152 = pneg %p36
      %p153 = pneg %p33
      %p154 = pneg %p57
      %p155 = pneg %p54
      %p156 = pneg %p83
      %p157 = pneg %p80
      %s158 = smul.u32 32, %s15
      %p159 = scmp.lt.s32.totalorder %s158, 63
      %s160 = scalar_select %p159, %s158, 63
      %s161 = smul.addr %s160, 4
      %s162 = scalar_lea.vmem %s2, %s161
      %p163 = pneg %p109
      %p164 = pneg %p106
      %p165 = scmp.lt.s32.totalorder %s15, 1
      %s166 = scalar_select %p165, %s15, 1
      %s167 = smul.addr %s166, 2
      %s168 = scalar_lea.vmem %s3, %s167
      %s169 = smul.u32 32, %s15
      %p170 = scmp.lt.s32.totalorder %s169, 63
      %s171 = scalar_select %p170, %s169, 63
      %s172 = smul.addr %s171, 4
      %s173 = scalar_lea.vmem %s0, %s172
      %s174 = smul.u32 32, %s15
      %s175 = smul.u32 32, %s15
      %p176 = scmp.lt.s32.totalorder %s175, 63
      %s177 = scalar_select %p176, %s175, 63
      %s178 = smul.addr %s177, 4
      %s179 = scalar_lea.vmem %s2, %s178
      %s180 = smul.u32 32, %s15
      %p181 = scmp.lt.s32.totalorder %s15, 1
      %s182 = scalar_select %p181, %s15, 1
      %s183 = smul.addr %s182, 2
      %s184 = scalar_lea.vmem %s3, %s183
      %v186 = vld [vmem:[%s173] sm:$0xf]
      %v187 = vld [vmem:[%s173 + $0x4] sm:$0xf]
      %v188 = vld [vmem:[%s173 + $0x8] sm:$0xf]
      %v189 = vld [vmem:[%s173 + $0xc] sm:$0xf]
      %v190 = vld [vmem:[%s173 + $0x10] sm:$0xf]
      %v191 = vld [vmem:[%s173 + $0x14] sm:$0xf]
      %v192 = vld [vmem:[%s173 + $0x18] sm:$0xf]
      %v193 = vld [vmem:[%s173 + $0x1c] sm:$0xf]
      %v194 = vld [vmem:[%s173 + $0x20] sm:$0xf]
      %v195 = vld [vmem:[%s173 + $0x24] sm:$0xf]
      %v196 = vld [vmem:[%s173 + $0x28] sm:$0xf]
      %v197 = vld [vmem:[%s173 + $0x2c] sm:$0xf]
      %v198 = vld [vmem:[%s173 + $0x30] sm:$0xf]
      %v199 = vld [vmem:[%s173 + $0x34] sm:$0xf]
      %v200 = vld [vmem:[%s173 + $0x38] sm:$0xf]
      %v201 = vld [vmem:[%s173 + $0x3c] sm:$0xf]
      %v202 = vld [vmem:[%s173 + $0x40] sm:$0xf]
      %v203 = vld [vmem:[%s173 + $0x44] sm:$0xf]
      %v204 = vld [vmem:[%s173 + $0x48] sm:$0xf]
      %v205 = vld [vmem:[%s173 + $0x4c] sm:$0xf]
      %v206 = vld [vmem:[%s173 + $0x50] sm:$0xf]
      %v207 = vld [vmem:[%s173 + $0x54] sm:$0xf]
      %v208 = vld [vmem:[%s173 + $0x58] sm:$0xf]
      %v209 = vld [vmem:[%s173 + $0x5c] sm:$0xf]
      %v210 = vld [vmem:[%s173 + $0x60] sm:$0xf]
      %v211 = vld [vmem:[%s173 + $0x64] sm:$0xf]
      %v212 = vld [vmem:[%s173 + $0x68] sm:$0xf]
      %v213 = vld [vmem:[%s173 + $0x6c] sm:$0xf]
      %v214 = vld [vmem:[%s173 + $0x70] sm:$0xf]
      %v215 = vld [vmem:[%s173 + $0x74] sm:$0xf]
      %v216 = vld [vmem:[%s173 + $0x78] sm:$0xf]
      %v217 = vld [vmem:[%s173 + $0x7c] sm:$0xf]
      %v218 = vld [vmem:[%s1] sm:$0xf]
      %v219 = vld [vmem:[%s1 + $0x4] sm:$0xf]
      %v220 = vld [vmem:[%s1 + $0x8] sm:$0xf]
      %v221 = vld [vmem:[%s1 + $0xc] sm:$0xf]
      %v222 = vld [vmem:[%s1 + $0x10] sm:$0xf]
      %v223 = vld [vmem:[%s1 + $0x14] sm:$0xf]
      %v224 = vld [vmem:[%s1 + $0x18] sm:$0xf]
      %v225 = vld [vmem:[%s1 + $0x1c] sm:$0xf]
      %v226 = vld [vmem:[%s1 + $0x20] sm:$0xf]
      %v227 = vld [vmem:[%s1 + $0x24] sm:$0xf]
      %v228 = vld [vmem:[%s1 + $0x28] sm:$0xf]
      %v229 = vld [vmem:[%s1 + $0x2c] sm:$0xf]
      %v230 = vld [vmem:[%s1 + $0x30] sm:$0xf]
      %v231 = vld [vmem:[%s1 + $0x34] sm:$0xf]
      %v232 = vld [vmem:[%s1 + $0x38] sm:$0xf]
      %v233 = vld [vmem:[%s1 + $0x3c] sm:$0xf]
      %v266 = vunpack.c.l.b16 %v186
      %v267 = vunpack.c.l.b16 %v187
      %v268 = vunpack.c.l.b16 %v188
      %v269 = vunpack.c.l.b16 %v189
      %v270 = vunpack.c.l.b16 %v190
      %v271 = vunpack.c.l.b16 %v191
      %v272 = vunpack.c.l.b16 %v192
      %v273 = vunpack.c.l.b16 %v193
      %v274 = vunpack.c.l.b16 %v194
      %v275 = vunpack.c.l.b16 %v195
      %v276 = vunpack.c.l.b16 %v196
      %v277 = vunpack.c.l.b16 %v197
      %v278 = vunpack.c.l.b16 %v198
      %v279 = vunpack.c.l.b16 %v199
      %v280 = vunpack.c.l.b16 %v200
      %v281 = vunpack.c.l.b16 %v201
      %v282 = vunpack.c.l.b16 %v202
      %v283 = vunpack.c.l.b16 %v203
      %v284 = vunpack.c.l.b16 %v204
      %v285 = vunpack.c.l.b16 %v205
      %v286 = vunpack.c.l.b16 %v206
      %v287 = vunpack.c.l.b16 %v207
      %v288 = vunpack.c.l.b16 %v208
      %v289 = vunpack.c.l.b16 %v209
      %v290 = vunpack.c.l.b16 %v210
      %v291 = vunpack.c.l.b16 %v211
      %v292 = vunpack.c.l.b16 %v212
      %v293 = vunpack.c.l.b16 %v213
      %v294 = vunpack.c.l.b16 %v214
      %v295 = vunpack.c.l.b16 %v215
      %v296 = vunpack.c.l.b16 %v216
      %v297 = vunpack.c.l.b16 %v217
      %v298 = vpack.c.b16 %v267, %v266
      %v299 = vpack.c.b16 %v269, %v268
      %v300 = vpack.c.b16 %v271, %v270
      %v301 = vpack.c.b16 %v273, %v272
      %v302 = vpack.c.b16 %v275, %v274
      %v303 = vpack.c.b16 %v277, %v276
      %v304 = vpack.c.b16 %v279, %v278
      %v305 = vpack.c.b16 %v281, %v280
      %v306 = vpack.c.b16 %v283, %v282
      %v307 = vpack.c.b16 %v285, %v284
      %v308 = vpack.c.b16 %v287, %v286
      %v309 = vpack.c.b16 %v289, %v288
      %v310 = vpack.c.b16 %v291, %v290
      %v311 = vpack.c.b16 %v293, %v292
      %v312 = vpack.c.b16 %v295, %v294
      %v313 = vpack.c.b16 %v297, %v296
      %v346 = vunpack.c.l.b16 %v218
      %v347 = vunpack.c.l.b16 %v219
      %v348 = vunpack.c.l.b16 %v220
      %v349 = vunpack.c.l.b16 %v221
      %v350 = vunpack.c.l.b16 %v222
      %v351 = vunpack.c.l.b16 %v223
      %v352 = vunpack.c.l.b16 %v224
      %v353 = vunpack.c.l.b16 %v225
      %v354 = vunpack.c.l.b16 %v226
      %v355 = vunpack.c.l.b16 %v227
      %v356 = vunpack.c.l.b16 %v228
      %v357 = vunpack.c.l.b16 %v229
      %v358 = vunpack.c.l.b16 %v230
      %v359 = vunpack.c.l.b16 %v231
      %v360 = vunpack.c.l.b16 %v232
      %v361 = vunpack.c.l.b16 %v233
      %v362 = vpack.c.b16 %v347, %v346
      %v363 = vpack.c.b16 %v349, %v348
      %v364 = vpack.c.b16 %v351, %v350
      %v365 = vpack.c.b16 %v353, %v352
      %v366 = vpack.c.b16 %v355, %v354
      %v367 = vpack.c.b16 %v357, %v356
      %v368 = vpack.c.b16 %v359, %v358
      %v369 = vpack.c.b16 %v361, %v360
      %378 = vmatprep.subr.bf16.mxu0 0
      %379 = vmatpush1.bf16.msra.mxu0 %v362
      %380 = vmatprep.subr.bf16.mxu0 0
      %381 = vmatpush1.bf16.msra.mxu0 %v363
      %382 = vmatprep.subr.bf16.mxu0 0
      %383 = vmatpush1.bf16.msra.mxu0 %v364
      %384 = vmatprep.subr.bf16.mxu0 0
      %385 = vmatpush1.bf16.msra.mxu0 %v365
      %386 = vmatprep.subr.bf16.mxu0 0
      %387 = vmatpush1.bf16.msra.mxu0 %v366
      %388 = vmatprep.subr.bf16.mxu0 0
      %389 = vmatpush1.bf16.msra.mxu0 %v367
      %390 = vmatprep.subr.bf16.mxu0 0
      %391 = vmatpush1.bf16.msra.mxu0 %v368
      %392 = vmatprep.subr.bf16.mxu0 0
      %393 = vmatpush1.bf16.msra.mxu0 %v369
      %394 = vmatprep.subr.bf16.mxu0 0
      %395 = vmatpush1.bf16.msra.mxu0 0
      %396 = vmatprep.subr.bf16.mxu0 0
      %397 = vmatpush1.bf16.msra.mxu0 0
      %398 = vmatprep.subr.bf16.mxu0 0
      %399 = vmatpush1.bf16.msra.mxu0 0
      %400 = vmatprep.subr.bf16.mxu0 0
      %401 = vmatpush1.bf16.msra.mxu0 0
      %402 = vmatprep.subr.bf16.mxu0 0
      %403 = vmatpush1.bf16.msra.mxu0 0
      %404 = vmatprep.subr.bf16.mxu0 0
      %405 = vmatpush1.bf16.msra.mxu0 0
      %406 = vmatprep.subr.bf16.mxu0 0
      %407 = vmatpush1.bf16.msra.mxu0 0
      %408 = vmatprep.subr.bf16.mxu0 0
      %409 = vmatpush1.bf16.msra.mxu0 0
      %410 = vmatprep.mubr.bf16.mxu0 0
      %411 = vmatmul.mubr.bf16.gmra.mrb[0].mxu0 %v298
      %v412 = vpop.f32.mrb[0].mxu0
      %v413 = vadd.f32 0.0, %v412
      %v414 = vpop.f32.mrb[0].mxu0
      %v415 = vpop.f32.mrb[0].mxu0
      %v416 = vadd.f32 0.0, %v415
      %v417 = vpop.f32.mrb[0].mxu0
      %418 = vmatprep.mubr.bf16.mxu0 0
      %419 = vmatmul.mubr.bf16.gmra.mrb[0].mxu0 %v299
      %v420 = vpop.f32.mrb[0].mxu0
      %v421 = vadd.f32 0.0, %v420
      %v422 = vpop.f32.mrb[0].mxu0
      %v423 = vpop.f32.mrb[0].mxu0
      %v424 = vadd.f32 0.0, %v423
      %v425 = vpop.f32.mrb[0].mxu0
      %426 = vmatprep.mubr.bf16.mxu0 0
      %427 = vmatmul.mubr.bf16.gmra.mrb[0].mxu0 %v300
      %v428 = vpop.f32.mrb[0].mxu0
      %v429 = vadd.f32 0.0, %v428
      %v430 = vpop.f32.mrb[0].mxu0
      %v431 = vpop.f32.mrb[0].mxu0
      %v432 = vadd.f32 0.0, %v431
      %v433 = vpop.f32.mrb[0].mxu0
      %434 = vmatprep.mubr.bf16.mxu0 0
      %435 = vmatmul.mubr.bf16.gmra.mrb[0].mxu0 %v301
      %v436 = vpop.f32.mrb[0].mxu0
      %v437 = vadd.f32 0.0, %v436
      %v438 = vpop.f32.mrb[0].mxu0
      %v439 = vpop.f32.mrb[0].mxu0
      %v440 = vadd.f32 0.0, %v439
      %v441 = vpop.f32.mrb[0].mxu0
      %442 = vmatprep.mubr.bf16.mxu0 0
      %443 = vmatmul.mubr.bf16.gmra.mrb[0].mxu0 %v302
      %v444 = vpop.f32.mrb[0].mxu0
      %v445 = vadd.f32 0.0, %v444
      %v446 = vpop.f32.mrb[0].mxu0
      %v447 = vpop.f32.mrb[0].mxu0
      %v448 = vadd.f32 0.0, %v447
      %v449 = vpop.f32.mrb[0].mxu0
      %450 = vmatprep.mubr.bf16.mxu0 0
      %451 = vmatmul.mubr.bf16.gmra.mrb[0].mxu0 %v303
      %v452 = vpop.f32.mrb[0].mxu0
      %v453 = vadd.f32 0.0, %v452
      %v454 = vpop.f32.mrb[0].mxu0
      %v455 = vpop.f32.mrb[0].mxu0
      %v456 = vadd.f32 0.0, %v455
      %v457 = vpop.f32.mrb[0].mxu0
      %458 = vmatprep.mubr.bf16.mxu0 0
      %459 = vmatmul.mubr.bf16.gmra.mrb[0].mxu0 %v304
      %v460 = vpop.f32.mrb[0].mxu0
      %v461 = vadd.f32 0.0, %v460
      %v462 = vpop.f32.mrb[0].mxu0
      %v463 = vpop.f32.mrb[0].mxu0
      %v464 = vadd.f32 0.0, %v463
      %v465 = vpop.f32.mrb[0].mxu0
      %466 = vmatprep.mubr.bf16.mxu0 0
      %467 = vmatmul.mubr.bf16.gmra.mrb[0].mxu0 %v305
      %v468 = vpop.f32.mrb[0].mxu0
      %v469 = vadd.f32 0.0, %v468
      %v470 = vpop.f32.mrb[0].mxu0
      %v471 = vpop.f32.mrb[0].mxu0
      %v472 = vadd.f32 0.0, %v471
      %v473 = vpop.f32.mrb[0].mxu0
      %474 = vmatprep.mubr.bf16.mxu0 0
      %475 = vmatmul.mubr.bf16.gmra.mrb[0].mxu0 %v306
      %v476 = vpop.f32.mrb[0].mxu0
      %v477 = vadd.f32 0.0, %v476
      %v478 = vpop.f32.mrb[0].mxu0
      %v479 = vpop.f32.mrb[0].mxu0
      %v480 = vadd.f32 0.0, %v479
      %v481 = vpop.f32.mrb[0].mxu0
      %482 = vmatprep.mubr.bf16.mxu0 0
      %483 = vmatmul.mubr.bf16.gmra.mrb[0].mxu0 %v307
      %v484 = vpop.f32.mrb[0].mxu0
      %v485 = vadd.f32 0.0, %v484
      %v486 = vpop.f32.mrb[0].mxu0
      %v487 = vpop.f32.mrb[0].mxu0
      %v488 = vadd.f32 0.0, %v487
      %v489 = vpop.f32.mrb[0].mxu0
      %490 = vmatprep.mubr.bf16.mxu0 0
      %491 = vmatmul.mubr.bf16.gmra.mrb[0].mxu0 %v308
      %v492 = vpop.f32.mrb[0].mxu0
      %v493 = vadd.f32 0.0, %v492
      %v494 = vpop.f32.mrb[0].mxu0
      %v495 = vpop.f32.mrb[0].mxu0
      %v496 = vadd.f32 0.0, %v495
      %v497 = vpop.f32.mrb[0].mxu0
      %498 = vmatprep.mubr.bf16.mxu0 0
      %499 = vmatmul.mubr.bf16.gmra.mrb[0].mxu0 %v309
      %v500 = vpop.f32.mrb[0].mxu0
      %v501 = vadd.f32 0.0, %v500
      %v502 = vpop.f32.mrb[0].mxu0
      %v503 = vpop.f32.mrb[0].mxu0
      %v504 = vadd.f32 0.0, %v503
      %v505 = vpop.f32.mrb[0].mxu0
      %506 = vmatprep.mubr.bf16.mxu0 0
      %507 = vmatmul.mubr.bf16.gmra.mrb[0].mxu0 %v310
      %v508 = vpop.f32.mrb[0].mxu0
      %v509 = vadd.f32 0.0, %v508
      %v510 = vpop.f32.mrb[0].mxu0
      %v511 = vpop.f32.mrb[0].mxu0
      %v512 = vadd.f32 0.0, %v511
      %v513 = vpop.f32.mrb[0].mxu0
      %514 = vmatprep.mubr.bf16.mxu0 0
      %515 = vmatmul.mubr.bf16.gmra.mrb[0].mxu0 %v311
      %v516 = vpop.f32.mrb[0].mxu0
      %v517 = vadd.f32 0.0, %v516
      %v518 = vpop.f32.mrb[0].mxu0
      %v519 = vpop.f32.mrb[0].mxu0
      %v520 = vadd.f32 0.0, %v519
      %v521 = vpop.f32.mrb[0].mxu0
      %522 = vmatprep.mubr.bf16.mxu0 0
      %523 = vmatmul.mubr.bf16.gmra.mrb[0].mxu0 %v312
      %v524 = vpop.f32.mrb[0].mxu0
      %v525 = vadd.f32 0.0, %v524
      %v526 = vpop.f32.mrb[0].mxu0
      %v527 = vpop.f32.mrb[0].mxu0
      %v528 = vadd.f32 0.0, %v527
      %v529 = vpop.f32.mrb[0].mxu0
      %530 = vmatprep.mubr.bf16.mxu0 0
      %531 = vmatmul.mubr.bf16.gmra.mrb[0].mxu0 %v313
      %v532 = vpop.f32.mrb[0].mxu0
      %v533 = vadd.f32 0.0, %v532
      %v534 = vpop.f32.mrb[0].mxu0
      %v535 = vpop.f32.mrb[0].mxu0
      %v536 = vadd.f32 0.0, %v535
      %v537 = vpop.f32.mrb[0].mxu0
      %538 = vdwg.mxu0
      %v539 = vpack.c.bf16 %v416, %v413
      %v540 = vpack.c.bf16 %v424, %v421
      %v541 = vpack.c.bf16 %v432, %v429
      %v542 = vpack.c.bf16 %v440, %v437
      %v543 = vpack.c.bf16 %v448, %v445
      %v544 = vpack.c.bf16 %v456, %v453
      %v545 = vpack.c.bf16 %v464, %v461
      %v546 = vpack.c.bf16 %v472, %v469
      %v547 = vpack.c.bf16 %v480, %v477
      %v548 = vpack.c.bf16 %v488, %v485
      %v549 = vpack.c.bf16 %v496, %v493
      %v550 = vpack.c.bf16 %v504, %v501
      %v551 = vpack.c.bf16 %v512, %v509
      %v552 = vpack.c.bf16 %v520, %v517
      %v553 = vpack.c.bf16 %v528, %v525
      %v554 = vpack.c.bf16 %v536, %v533
      %v571 = vunpack.c.l.b16 %v539
      %v572 = vunpack.c.h.b16 %v539
      %v573 = vunpack.c.l.b16 %v540
      %v574 = vunpack.c.h.b16 %v540
      %v575 = vunpack.c.l.b16 %v541
      %v576 = vunpack.c.h.b16 %v541
      %v577 = vunpack.c.l.b16 %v542
      %v578 = vunpack.c.h.b16 %v542
      %v579 = vunpack.c.l.b16 %v543
      %v580 = vunpack.c.h.b16 %v543
      %v581 = vunpack.c.l.b16 %v544
      %v582 = vunpack.c.h.b16 %v544
      %v583 = vunpack.c.l.b16 %v545
      %v584 = vunpack.c.h.b16 %v545
      %v585 = vunpack.c.l.b16 %v546
      %v586 = vunpack.c.h.b16 %v546
      %v587 = vunpack.c.l.b16 %v547
      %v588 = vunpack.c.h.b16 %v547
      %v589 = vunpack.c.l.b16 %v548
      %v590 = vunpack.c.h.b16 %v548
      %v591 = vunpack.c.l.b16 %v549
      %v592 = vunpack.c.h.b16 %v549
      %v593 = vunpack.c.l.b16 %v550
      %v594 = vunpack.c.h.b16 %v550
      %v595 = vunpack.c.l.b16 %v551
      %v596 = vunpack.c.h.b16 %v551
      %v597 = vunpack.c.l.b16 %v552
      %v598 = vunpack.c.h.b16 %v552
      %v599 = vunpack.c.l.b16 %v553
      %v600 = vunpack.c.h.b16 %v553
      %v601 = vunpack.c.l.b16 %v554
      %v602 = vunpack.c.h.b16 %v554
      %v603 = vpack.c.b16 %v571, %v571
      %v604 = vpack.c.b16 %v572, %v572
      %v605 = vpack.c.b16 %v573, %v573
      %v606 = vpack.c.b16 %v574, %v574
      %v607 = vpack.c.b16 %v575, %v575
      %v608 = vpack.c.b16 %v576, %v576
      %v609 = vpack.c.b16 %v577, %v577
      %v610 = vpack.c.b16 %v578, %v578
      %v611 = vpack.c.b16 %v579, %v579
      %v612 = vpack.c.b16 %v580, %v580
      %v613 = vpack.c.b16 %v581, %v581
      %v614 = vpack.c.b16 %v582, %v582
      %v615 = vpack.c.b16 %v583, %v583
      %v616 = vpack.c.b16 %v584, %v584
      %v617 = vpack.c.b16 %v585, %v585
      %v618 = vpack.c.b16 %v586, %v586
      %v619 = vpack.c.b16 %v587, %v587
      %v620 = vpack.c.b16 %v588, %v588
      %v621 = vpack.c.b16 %v589, %v589
      %v622 = vpack.c.b16 %v590, %v590
      %v623 = vpack.c.b16 %v591, %v591
      %v624 = vpack.c.b16 %v592, %v592
      %v625 = vpack.c.b16 %v593, %v593
      %v626 = vpack.c.b16 %v594, %v594
      %v627 = vpack.c.b16 %v595, %v595
      %v628 = vpack.c.b16 %v596, %v596
      %v629 = vpack.c.b16 %v597, %v597
      %v630 = vpack.c.b16 %v598, %v598
      %v631 = vpack.c.b16 %v599, %v599
      %v632 = vpack.c.b16 %v600, %v600
      %v633 = vpack.c.b16 %v601, %v601
      %v634 = vpack.c.b16 %v602, %v602
      %667 = vst [vmem:[%s179] sm:$0xf] %v603
      %668 = vst [vmem:[%s179 + $0x4] sm:$0xf] %v604
      %669 = vst [vmem:[%s179 + $0x8] sm:$0xf] %v605
      %670 = vst [vmem:[%s179 + $0xc] sm:$0xf] %v606
      %671 = vst [vmem:[%s179 + $0x10] sm:$0xf] %v607
      %672 = vst [vmem:[%s179 + $0x14] sm:$0xf] %v608
      %673 = vst [vmem:[%s179 + $0x18] sm:$0xf] %v609
      %674 = vst [vmem:[%s179 + $0x1c] sm:$0xf] %v610
      %675 = vst [vmem:[%s179 + $0x20] sm:$0xf] %v611
      %676 = vst [vmem:[%s179 + $0x24] sm:$0xf] %v612
      %677 = vst [vmem:[%s179 + $0x28] sm:$0xf] %v613
      %678 = vst [vmem:[%s179 + $0x2c] sm:$0xf] %v614
      %679 = vst [vmem:[%s179 + $0x30] sm:$0xf] %v615
      %680 = vst [vmem:[%s179 + $0x34] sm:$0xf] %v616
      %681 = vst [vmem:[%s179 + $0x38] sm:$0xf] %v617
      %682 = vst [vmem:[%s179 + $0x3c] sm:$0xf] %v618
      %683 = vst [vmem:[%s179 + $0x40] sm:$0xf] %v619
      %684 = vst [vmem:[%s179 + $0x44] sm:$0xf] %v620
      %685 = vst [vmem:[%s179 + $0x48] sm:$0xf] %v621
      %686 = vst [vmem:[%s179 + $0x4c] sm:$0xf] %v622
      %687 = vst [vmem:[%s179 + $0x50] sm:$0xf] %v623
      %688 = vst [vmem:[%s179 + $0x54] sm:$0xf] %v624
      %689 = vst [vmem:[%s179 + $0x58] sm:$0xf] %v625
      %690 = vst [vmem:[%s179 + $0x5c] sm:$0xf] %v626
      %691 = vst [vmem:[%s179 + $0x60] sm:$0xf] %v627
      %692 = vst [vmem:[%s179 + $0x64] sm:$0xf] %v628
      %693 = vst [vmem:[%s179 + $0x68] sm:$0xf] %v629
      %694 = vst [vmem:[%s179 + $0x6c] sm:$0xf] %v630
      %695 = vst [vmem:[%s179 + $0x70] sm:$0xf] %v631
      %696 = vst [vmem:[%s179 + $0x74] sm:$0xf] %v632
      %697 = vst [vmem:[%s179 + $0x78] sm:$0xf] %v633
      %698 = vst [vmem:[%s179 + $0x7c] sm:$0xf] %v634
      %v699 = vadd.f32 %v413, %v416
      %v700 = vadd.f32 %v699, %v421
      %v701 = vadd.f32 %v700, %v424
      %v702 = vadd.f32 %v701, %v429
      %v703 = vadd.f32 %v702, %v432
      %v704 = vadd.f32 %v703, %v437
      %v705 = vadd.f32 %v704, %v440
      %v706 = vadd.f32 %v705, %v445
      %v707 = vadd.f32 %v706, %v448
      %v708 = vadd.f32 %v707, %v453
      %v709 = vadd.f32 %v708, %v456
      %v710 = vadd.f32 %v709, %v461
      %v711 = vadd.f32 %v710, %v464
      %v712 = vadd.f32 %v711, %v469
      %v713 = vadd.f32 %v712, %v472
      %v714 = vadd.f32 %v713, %v477
      %v715 = vadd.f32 %v714, %v480
      %v716 = vadd.f32 %v715, %v485
      %v717 = vadd.f32 %v716, %v488
      %v718 = vadd.f32 %v717, %v493
      %v719 = vadd.f32 %v718, %v496
      %v720 = vadd.f32 %v719, %v501
      %v721 = vadd.f32 %v720, %v504
      %v722 = vadd.f32 %v721, %v509
      %v723 = vadd.f32 %v722, %v512
      %v724 = vadd.f32 %v723, %v517
      %v725 = vadd.f32 %v724, %v520
      %v726 = vadd.f32 %v725, %v525
      %v727 = vadd.f32 %v726, %v528
      %v728 = vadd.f32 %v727, %v533
      %v729 = vadd.f32 %v728, %v536
      %v730 = vrot.slane %v729, 4
      %v731 = vadd.f32 %v729, %v730
      %v732 = vrot.slane %v731, 2
      %v733 = vadd.f32 %v731, %v732
      %v734 = vrot.slane %v733, 1
      %v735 = vadd.f32 %v733, %v734
      %v736 = vrcp.pop 256.0
      %v737 = vmul.f32 %v735, %v736
      %v738 = vsub.f32 %v413, %v737
      %v739 = vsub.f32 %v416, %v737
      %v740 = vsub.f32 %v421, %v737
      %v741 = vsub.f32 %v424, %v737
      %v742 = vsub.f32 %v429, %v737
      %v743 = vsub.f32 %v432, %v737
      %v744 = vsub.f32 %v437, %v737
      %v745 = vsub.f32 %v440, %v737
      %v746 = vsub.f32 %v445, %v737
      %v747 = vsub.f32 %v448, %v737
      %v748 = vsub.f32 %v453, %v737
      %v749 = vsub.f32 %v456, %v737
      %v750 = vsub.f32 %v461, %v737
      %v751 = vsub.f32 %v464, %v737
      %v752 = vsub.f32 %v469, %v737
      %v753 = vsub.f32 %v472, %v737
      %v754 = vsub.f32 %v477, %v737
      %v755 = vsub.f32 %v480, %v737
      %v756 = vsub.f32 %v485, %v737
      %v757 = vsub.f32 %v488, %v737
      %v758 = vsub.f32 %v493, %v737
      %v759 = vsub.f32 %v496, %v737
      %v760 = vsub.f32 %v501, %v737
      %v761 = vsub.f32 %v504, %v737
      %v762 = vsub.f32 %v509, %v737
      %v763 = vsub.f32 %v512, %v737
      %v764 = vsub.f32 %v517, %v737
      %v765 = vsub.f32 %v520, %v737
      %v766 = vsub.f32 %v525, %v737
      %v767 = vsub.f32 %v528, %v737
      %v768 = vsub.f32 %v533, %v737
      %v769 = vsub.f32 %v536, %v737
      %v770 = vmul.f32 %v738, %v738
      %v771 = vmul.f32 %v739, %v739
      %v772 = vmul.f32 %v740, %v740
      %v773 = vmul.f32 %v741, %v741
      %v774 = vmul.f32 %v742, %v742
      %v775 = vmul.f32 %v743, %v743
      %v776 = vmul.f32 %v744, %v744
      %v777 = vmul.f32 %v745, %v745
      %v778 = vmul.f32 %v746, %v746
      %v779 = vmul.f32 %v747, %v747
      %v780 = vmul.f32 %v748, %v748
      %v781 = vmul.f32 %v749, %v749
      %v782 = vmul.f32 %v750, %v750
      %v783 = vmul.f32 %v751, %v751
      %v784 = vmul.f32 %v752, %v752
      %v785 = vmul.f32 %v753, %v753
      %v786 = vmul.f32 %v754, %v754
      %v787 = vmul.f32 %v755, %v755
      %v788 = vmul.f32 %v756, %v756
      %v789 = vmul.f32 %v757, %v757
      %v790 = vmul.f32 %v758, %v758
      %v791 = vmul.f32 %v759, %v759
      %v792 = vmul.f32 %v760, %v760
      %v793 = vmul.f32 %v761, %v761
      %v794 = vmul.f32 %v762, %v762
      %v795 = vmul.f32 %v763, %v763
      %v796 = vmul.f32 %v764, %v764
      %v797 = vmul.f32 %v765, %v765
      %v798 = vmul.f32 %v766, %v766
      %v799 = vmul.f32 %v767, %v767
      %v800 = vmul.f32 %v768, %v768
      %v801 = vmul.f32 %v769, %v769
      %v802 = vadd.f32 %v770, %v771
      %v803 = vadd.f32 %v802, %v772
      %v804 = vadd.f32 %v803, %v773
      %v805 = vadd.f32 %v804, %v774
      %v806 = vadd.f32 %v805, %v775
      %v807 = vadd.f32 %v806, %v776
      %v808 = vadd.f32 %v807, %v777
      %v809 = vadd.f32 %v808, %v778
      %v810 = vadd.f32 %v809, %v779
      %v811 = vadd.f32 %v810, %v780
      %v812 = vadd.f32 %v811, %v781
      %v813 = vadd.f32 %v812, %v782
      %v814 = vadd.f32 %v813, %v783
      %v815 = vadd.f32 %v814, %v784
      %v816 = vadd.f32 %v815, %v785
      %v817 = vadd.f32 %v816, %v786
      %v818 = vadd.f32 %v817, %v787
      %v819 = vadd.f32 %v818, %v788
      %v820 = vadd.f32 %v819, %v789
      %v821 = vadd.f32 %v820, %v790
      %v822 = vadd.f32 %v821, %v791
      %v823 = vadd.f32 %v822, %v792
      %v824 = vadd.f32 %v823, %v793
      %v825 = vadd.f32 %v824, %v794
      %v826 = vadd.f32 %v825, %v795
      %v827 = vadd.f32 %v826, %v796
      %v828 = vadd.f32 %v827, %v797
      %v829 = vadd.f32 %v828, %v798
      %v830 = vadd.f32 %v829, %v799
      %v831 = vadd.f32 %v830, %v800
      %v832 = vadd.f32 %v831, %v801
      %v833 = vrot.slane %v832, 4
      %v834 = vadd.f32 %v832, %v833
      %v835 = vrot.slane %v834, 2
      %v836 = vadd.f32 %v834, %v835
      %v837 = vrot.slane %v836, 1
      %v838 = vadd.f32 %v836, %v837
      %839 = vst [vmem:[%s184] sm:$0x1] %v735
      %840 = vst [vmem:[%s184 + $0x1] sm:$0x1] %v838
      %s841 = smul.u32 32, %s15
      %p842 = scmp.lt.s32.totalorder %s841, 63
      %s843 = scalar_select %p842, %s841, 63
      %s844 = smul.addr %s843, 4
      %s845 = scalar_lea.vmem %s2, %s844
      %p846 = scmp.lt.s32.totalorder %s15, 1
      %s847 = scalar_select %p846, %s15, 1
      %s848 = smul.addr %s847, 2
      %s849 = scalar_lea.vmem %s3, %s848
      // Predicated region
      $region29: #{double_conv.3} parent=27 // pred_check
        %p850 = pneg %p80
      $region30: #{double_conv.3} parent=27 // pred_check_branch
        %852 = sbr.rel (%p850) target = $region32
      $region31: #{double_conv.3} parent=27 // pred_region
        %s853 = smul.u32 32, %s15
      $region32: #{double_conv.3} parent=27 // pred_fallthru
        _
      // Predicated region
      $region33: #{double_conv.3} parent=27 // pred_check
        %p854 = pneg %p106
      $region34: #{double_conv.3} parent=27 // pred_check_branch
        %856 = sbr.rel (%p854) target = $region36
      $region35: #{double_conv.3} parent=27 // pred_region
        _
      $region36: #{double_conv.3} parent=27 // pred_fallthru
        _
    $region28: #{double_conv.3} parent=5 // pred_fallthru
      _
    %p857 = scmp.le.s32.totalorder 2, %s10
    // Predicated region
    $region37: #{double_conv.3} parent=5 // pred_check
      %p858 = pneg %p857
    $region38: #{double_conv.3} parent=5 // pred_check_branch
      %860 = sbr.rel (%p858) target = $region40
    $region39: #{double_conv.3} parent=5 // pred_region
      %s861 = ssub.s32 %s10, 2
      // Predicated region
      $region41: #{double_conv.3} parent=39 // pred_check
        %p862 = pneg %p86
      $region42: #{double_conv.3} parent=39 // pred_check_branch
        %864 = sbr.rel (%p862) target = $region44
      $region43: #{double_conv.3} parent=39 // pred_region
        %s865 = smul.u32 32, %s16
        %p866 = scmp.lt.s32.totalorder %s865, 63
        %s867 = scalar_select %p866, %s865, 63
        %s868 = smul.addr %s867, 4
        %s869 = scalar_lea.vmem %s2, %s868
      $region44: #{double_conv.3} parent=39 // pred_fallthru
        _
      // Predicated region
      $region45: #{double_conv.3} parent=39 // pred_check
        %p870 = pneg %p112
      $region46: #{double_conv.3} parent=39 // pred_check_branch
        %872 = sbr.rel (%p870) target = $region48
      $region47: #{double_conv.3} parent=39 // pred_region
        %p873 = scmp.lt.s32.totalorder %s16, 1
        %s874 = scalar_select %p873, %s16, 1
        %s875 = smul.addr %s874, 2
        %s876 = scalar_lea.vmem %s3, %s875
      $region48: #{double_conv.3} parent=39 // pred_fallthru
        _
    $region40: #{double_conv.3} parent=5 // pred_fallthru
      _
  $region6: #{double_conv.3} parent=0 // loop_footer
    %s14 = sadd.s32 1, %s10
  $region7: #{double_conv.3} parent=0 // loop_footer_branch
    %9 = sbr.rel target = $region3
  $region8: #{double_conv.3} parent=0 // loop_exit
    _

// kernel: double_conv.4
$region0: #{double_conv.4}
  #allocation0 [shape = 'u32[]', space=smem, size = 0x4, offset = 0x4, fixed_abs, tag = 'smem constant byte address 0x4 - core index']
  #allocation1 [shape = 'u32[144,128]{1,0:T(1,128)}', space=vmem, size = 0x12000, scoped, tag = 'internal scratch']
  #allocation2 [shape = 'bf16[2,10,16,128]{3,2,1,0:T(16,128)(2,1)}', space=vmem, size = 0x14000, scoped, tag = 'scratch operand']
  #allocation3 [shape = 'bf16[2,8,16,1152]{3,2,1,0:T(16,128)(2,1)}', space=vmem, size = 0x90000, scoped, tag = 'scratch operand']
  %s0 = inlined_call_operand.vmem [shape: f32[1,128], index: 0, kind: input, shape index: {}]
  %s1 = inlined_call_operand.vmem [shape: f32[1,128], index: 1, kind: input, shape index: {}]
  %s2 = inlined_call_operand.vmem [shape: bf16[2,16,16,128], index: 2, kind: input, shape index: {}, may-alias: {2,3,4}]
  %s3 = inlined_call_operand.vmem [shape: bf16[2,16,16,128], index: 3, kind: input, shape index: {}, may-alias: {2,3,4}]
  %s4 = inlined_call_operand.vmem [shape: bf16[2,16,16,128], index: 4, kind: input, shape index: {}, may-alias: {2,3,4}]
  %s5 = inlined_call_operand.vmem [shape: bf16[1152,128], index: 5, kind: input, shape index: {}]
  %s6 = inlined_call_operand.vmem [shape: bf16[2,16,16,128], index: 6, kind: output, shape index: {0}]
  %s7 = inlined_call_operand.vmem [shape: f32[2,2,128], index: 7, kind: output, shape index: {1}]
  %8 = xla_tuple %s6, %s7
  %s9 = sld [smem:[#allocation0]]
  $region225: #{double_conv.4} parent=0
    _
  %s11 = ssub.s32 1, %s9
  %s12 = scalar_select 0, %s11, %s9
  $region1: #{double_conv.4} parent=0
    #allocation4 [shape = 'u8[131072]{0}', space=vmem, size = 0x20000, scoped, tag = 'input window, operand 2']
    #allocation5 [shape = 'u8[16384]{0}', space=vmem, size = 0x4000, scoped, tag = 'input window, operand 3']
    #allocation6 [shape = 'u8[16384]{0}', space=vmem, size = 0x4000, scoped, tag = 'input window, operand 4']
    #allocation7 [shape = 'u8[131072]{0}', space=vmem, size = 0x20000, scoped, tag = 'output window, operand 0']
    loop: start=0, step=1, limit=4
    $region2: #{double_conv.4} parent=1 // loop_pre_header
      _
    $region3: #{double_conv.4} parent=1 // loop_header
      %s14 = sphi 0, %s18
      %p15 = scmp.ge.s32.totalorder %s14, 4
      %s22 = sphi 0, %s22
      %s24 = sphi 0, %s22
      %s25 = sphi 0, %s24
      %s39 = sphi 0, %s25
      %s43 = sphi 0, %s43
      %s45 = sphi 0, %s43
      %s46 = sphi 0, %s45
      %s60 = sphi 0, %s46
      %s66 = sphi 0, %s68
      %s69 = sphi 0, %s66
      %s70 = sphi 0, %s69
      %s86 = sphi 0, %s70
      %s100 = sphi 0, %s102
      %s103 = sphi 0, %s100
      %s104 = sphi 0, %s103
      %s120 = sphi 0, %s104
      %s134 = sphi 0, %s136
      %s137 = sphi 0, %s134
      %s138 = sphi 0, %s137
      %s154 = sphi 0, %s138
      %s158 = sphi 0, %s158
      %s160 = sphi 0, %s158
      %s161 = sphi 0, %s160
      %s175 = sphi 0, %s161
      %s181 = sphi 0, %s183
      %s184 = sphi 0, %s181
      %s185 = sphi 0, %s184
      %s201 = sphi 0, %s185
      %s207 = sphi 0, %s209
      %s210 = sphi 0, %s207
      %s211 = sphi 0, %s210
      %s227 = sphi 0, %s211
    $region4: #{double_conv.4} parent=1 // loop_header_branch
      %17 = sbr.rel (%p15) target = $region8
    $region5: #{double_conv.4} parent=1 // loop_body
      %s19 = ssub.s32 %s14, 1
      %s20 = ssub.s32 %s14, 2
      %s21 = sadd.s32 %s14, 1
      %s23 = sadd.s32 %s22, 1
      %p26 = scmp.eq.s32.totalorder %s14, 1
      %p27 = scmp.ne.s32.totalorder %s22, %s24
      %p28 = scmp.eq.s32.totalorder %s14, 0
      %p29 = por %p27, %p28
      %p30 = scmp.ne.s32.totalorder %s22, %s24
      %p31 = scmp.eq.s32.totalorder %s19, 1
      %p32 = por %p30, %p31
      %p33 = scmp.ne.s32.totalorder %s24, %s25
      %p34 = scmp.eq.s32.totalorder %s19, 0
      %p35 = por %p33, %p34
      %p36 = scmp.ne.s32.totalorder %s24, %s25
      %p37 = scmp.eq.s32.totalorder %s20, 1
      %p38 = por %p36, %p37
      %p40 = scmp.ne.s32.totalorder %s25, %s39
      %p41 = scmp.eq.s32.totalorder %s20, 0
      %p42 = por %p40, %p41
      %s44 = sadd.s32 %s43, 1
      %p47 = scmp.eq.s32.totalorder %s14, 1
      %p48 = scmp.ne.s32.totalorder %s43, %s45
      %p49 = scmp.eq.s32.totalorder %s14, 0
      %p50 = por %p48, %p49
      %p51 = scmp.ne.s32.totalorder %s43, %s45
      %p52 = scmp.eq.s32.totalorder %s19, 1
      %p53 = por %p51, %p52
      %p54 = scmp.ne.s32.totalorder %s45, %s46
      %p55 = scmp.eq.s32.totalorder %s19, 0
      %p56 = por %p54, %p55
      %p57 = scmp.ne.s32.totalorder %s45, %s46
      %p58 = scmp.eq.s32.totalorder %s20, 1
      %p59 = por %p57, %p58
      %p61 = scmp.ne.s32.totalorder %s46, %s60
      %p62 = scmp.eq.s32.totalorder %s20, 0
      %p63 = por %p61, %p62
      %s64 = ssub.s32 %s14, %s21
      %p65 = scmp.eq.s32.totalorder %s64, 0
      %s67 = sadd.s32 %s66, 1
      %s68 = scalar_select %p65, %s66, %s67
      %p71 = pneg %p65
      %p72 = scmp.eq.s32.totalorder %s14, 1
      %p73 = por %p71, %p72
      %p74 = scmp.ne.s32.totalorder %s66, %s69
      %p75 = scmp.eq.s32.totalorder %s14, 0
      %p76 = por %p74, %p75
      %p77 = scmp.ne.s32.totalorder %s66, %s69
      %p78 = scmp.eq.s32.totalorder %s19, 1
      %p79 = por %p77, %p78
      %p80 = scmp.ne.s32.totalorder %s69, %s70
      %p81 = scmp.eq.s32.totalorder %s19, 0
      %p82 = por %p80, %p81
      %p83 = scmp.ne.s32.totalorder %s69, %s70
      %p84 = scmp.eq.s32.totalorder %s20, 1
      %p85 = por %p83, %p84
      %p87 = scmp.ne.s32.totalorder %s70, %s86
      %p88 = scmp.eq.s32.totalorder %s20, 0
      %p89 = por %p87, %p88
      %s90 = smul.u32 %s14, 8
      %s91 = ssub.s32 %s90, 1
      %p92 = scmp.gt.s32.totalorder %s91, 0
      %s93 = scalar_select %p92, %s91, 0
      %s94 = smul.u32 %s21, 8
      %s95 = ssub.s32 %s94, 1
      %p96 = scmp.gt.s32.totalorder %s95, 0
      %s97 = scalar_select %p96, %s95, 0
      %s98 = ssub.s32 %s93, %s97
      %p99 = scmp.eq.s32.totalorder %s98, 0
      %s101 = sadd.s32 %s100, 1
      %s102 = scalar_select %p99, %s100, %s101
      %p105 = pneg %p99
      %p106 = scmp.eq.s32.totalorder %s14, 1
      %p107 = por %p105, %p106
      %p108 = scmp.ne.s32.totalorder %s100, %s103
      %p109 = scmp.eq.s32.totalorder %s14, 0
      %p110 = por %p108, %p109
      %p111 = scmp.ne.s32.totalorder %s100, %s103
      %p112 = scmp.eq.s32.totalorder %s19, 1
      %p113 = por %p111, %p112
      %p114 = scmp.ne.s32.totalorder %s103, %s104
      %p115 = scmp.eq.s32.totalorder %s19, 0
      %p116 = por %p114, %p115
      %p117 = scmp.ne.s32.totalorder %s103, %s104
      %p118 = scmp.eq.s32.totalorder %s20, 1
      %p119 = por %p117, %p118
      %p121 = scmp.ne.s32.totalorder %s104, %s120
      %p122 = scmp.eq.s32.totalorder %s20, 0
      %p123 = por %p121, %p122
      %s124 = smul.u32 %s14, 8
      %s125 = sadd.s32 %s124, 8
      %p126 = scmp.lt.s32.totalorder %s125, 15
      %s127 = scalar_select %p126, %s125, 15
      %s128 = smul.u32 %s21, 8
      %s129 = sadd.s32 %s128, 8
      %p130 = scmp.lt.s32.totalorder %s129, 15
      %s131 = scalar_select %p130, %s129, 15
      %s132 = ssub.s32 %s127, %s131
      %p133 = scmp.eq.s32.totalorder %s132, 0
      %s135 = sadd.s32 %s134, 1
      %s136 = scalar_select %p133, %s134, %s135
      %p139 = pneg %p133
      %p140 = scmp.eq.s32.totalorder %s14, 1
      %p141 = por %p139, %p140
      %p142 = scmp.ne.s32.totalorder %s134, %s137
      %p143 = scmp.eq.s32.totalorder %s14, 0
      %p144 = por %p142, %p143
      %p145 = scmp.ne.s32.totalorder %s134, %s137
      %p146 = scmp.eq.s32.totalorder %s19, 1
      %p147 = por %p145, %p146
      %p148 = scmp.ne.s32.totalorder %s137, %s138
      %p149 = scmp.eq.s32.totalorder %s19, 0
      %p150 = por %p148, %p149
      %p151 = scmp.ne.s32.totalorder %s137, %s138
      %p152 = scmp.eq.s32.totalorder %s20, 1
      %p153 = por %p151, %p152
      %p155 = scmp.ne.s32.totalorder %s138, %s154
      %p156 = scmp.eq.s32.totalorder %s20, 0
      %p157 = por %p155, %p156
      %s159 = sadd.s32 %s158, 1
      %p162 = scmp.eq.s32.totalorder %s14, 1
      %p163 = scmp.ne.s32.totalorder %s158, %s160
      %p164 = scmp.eq.s32.totalorder %s14, 0
      %p165 = por %p163, %p164
      %p166 = scmp.ne.s32.totalorder %s158, %s160
      %p167 = scmp.eq.s32.totalorder %s19, 1
      %p168 = por %p166, %p167
      %p169 = scmp.ne.s32.totalorder %s160, %s161
      %p170 = scmp.eq.s32.totalorder %s19, 0
      %p171 = por %p169, %p170
      %p172 = scmp.ne.s32.totalorder %s160, %s161
      %p173 = scmp.eq.s32.totalorder %s20, 1
      %p174 = por %p172, %p173
      %p176 = scmp.ne.s32.totalorder %s161, %s175
      %p177 = scmp.eq.s32.totalorder %s20, 0
      %p178 = por %p176, %p177
      %s179 = ssub.s32 %s14, %s21
      %p180 = scmp.eq.s32.totalorder %s179, 0
      %s182 = sadd.s32 %s181, 1
      %s183 = scalar_select %p180, %s181, %s182
      %p186 = pneg %p180
      %p187 = scmp.eq.s32.totalorder %s14, 1
      %p188 = por %p186, %p187
      %p189 = scmp.ne.s32.totalorder %s181, %s184
      %p190 = scmp.eq.s32.totalorder %s14, 0
      %p191 = por %p189, %p190
      %p192 = scmp.ne.s32.totalorder %s181, %s184
      %p193 = scmp.eq.s32.totalorder %s19, 1
      %p194 = por %p192, %p193
      %p195 = scmp.ne.s32.totalorder %s184, %s185
      %p196 = scmp.eq.s32.totalorder %s19, 0
      %p197 = por %p195, %p196
      %p198 = scmp.ne.s32.totalorder %s184, %s185
      %p199 = scmp.eq.s32.totalorder %s20, 1
      %p200 = por %p198, %p199
      %p202 = scmp.ne.s32.totalorder %s185, %s201
      %p203 = scmp.eq.s32.totalorder %s20, 0
      %p204 = por %p202, %p203
      %s205 = ssub.s32 %s14, %s21
      %p206 = scmp.eq.s32.totalorder %s205, 0
      %s208 = sadd.s32 %s207, 1
      %s209 = scalar_select %p206, %s207, %s208
      %p212 = pneg %p206
      %p213 = scmp.eq.s32.totalorder %s14, 1
      %p214 = por %p212, %p213
      %p215 = scmp.ne.s32.totalorder %s207, %s210
      %p216 = scmp.eq.s32.totalorder %s14, 0
      %p217 = por %p215, %p216
      %p218 = scmp.ne.s32.totalorder %s207, %s210
      %p219 = scmp.eq.s32.totalorder %s19, 1
      %p220 = por %p218, %p219
      %p221 = scmp.ne.s32.totalorder %s210, %s211
      %p222 = scmp.eq.s32.totalorder %s19, 0
      %p223 = por %p221, %p222
      %p224 = scmp.ne.s32.totalorder %s210, %s211
      %p225 = scmp.eq.s32.totalorder %s20, 1
      %p226 = por %p224, %p225
      %p228 = scmp.ne.s32.totalorder %s211, %s227
      %p229 = scmp.eq.s32.totalorder %s20, 0
      %p230 = por %p228, %p229
      %p231 = scmp.le.s32.totalorder 1, %s14
      %p232 = scmp.lt.s32.totalorder %s14, 3
      %p233 = pnand %p231, %p232
      %p234 = pneg %p233
      // Predicated region
      $region9: #{double_conv.4} parent=5 // pred_check
        _
      $region10: #{double_conv.4} parent=5 // pred_check_branch
        %236 = sbr.rel (%p233) target = $region12
      $region11: #{double_conv.4} parent=5 // pred_region
        %s237 = ssub.s32 %s14, 1
        // Predicated region
        $region13: #{double_conv.4} parent=11 // pred_check
          %p238 = pneg %p35
        $region14: #{double_conv.4} parent=11 // pred_check_branch
          %240 = sbr.rel (%p238) target = $region16
        $region15: #{double_conv.4} parent=11 // pred_region
          _
        $region16: #{double_conv.4} parent=11 // pred_fallthru
          _
        // Predicated region
        $region17: #{double_conv.4} parent=11 // pred_check
          %p241 = pneg %p56
        $region18: #{double_conv.4} parent=11 // pred_check_branch
          %243 = sbr.rel (%p241) target = $region20
        $region19: #{double_conv.4} parent=11 // pred_region
          _
        $region20: #{double_conv.4} parent=11 // pred_fallthru
          _
        // Predicated region
        $region21: #{double_conv.4} parent=11 // pred_check
          %p244 = pneg %p171
        $region22: #{double_conv.4} parent=11 // pred_check_branch
          %246 = sbr.rel (%p244) target = $region24
        $region23: #{double_conv.4} parent=11 // pred_region
          _
        $region24: #{double_conv.4} parent=11 // pred_fallthru
          _
      $region12: #{double_conv.4} parent=5 // pred_fallthru
        _
      %p247 = scmp.lt.s32.totalorder %s14, 2
      // Predicated region
      $region25: #{double_conv.4} parent=5 // pred_check
        %p248 = pneg %p247
      $region26: #{double_conv.4} parent=5 // pred_check_branch
        %250 = sbr.rel (%p248) target = $region28
      $region27: #{double_conv.4} parent=5 // pred_region
        // Predicated region
        $region29: #{double_conv.4} parent=27 // pred_check
          %p251 = pneg %p76
        $region30: #{double_conv.4} parent=27 // pred_check_branch
          %253 = sbr.rel (%p251) target = $region32
        $region31: #{double_conv.4} parent=27 // pred_region
          %s254 = sand.u32 %s66, 1
          %s255 = sand.u32 %s66, 1
          %s256 = smul.addr %s255, 128
          %s257 = scalar_lea.vmem [#allocation4], %s256
          %s258 = smul.u32 8, %s14
          %s259 = smul.addr %s258, 2
          %s260 = smul.addr %s259, 4
          %s261 = scalar_lea.vmem %s2, %s260
          // Predicated region
          $region33: #{double_conv.4} parent=31 // pred_check
            _
          $region34: #{double_conv.4} parent=31 // pred_check_branch
            %263 = sbr.rel (0) target = $region36
          $region35: #{double_conv.4} parent=31 // pred_region
            // Predicated region
            $region37: #{double_conv.4} parent=35 // pred_check
              _
            $region38: #{double_conv.4} parent=35 // pred_check_branch
              %265 = sbr.rel target = $region40
            $region39: #{double_conv.4} parent=35 // pred_region
              // Predicated region
              $region52: #{double_conv.4} parent=39 // pred_check
                _
              $region53: #{double_conv.4} parent=39 // pred_check_branch
                %342 = sbr.rel (0) target = $region55
              $region54: #{double_conv.4} parent=39 // pred_region
                loop: start=0, step=1, limit=1
                $region56: #{double_conv.4} parent=54 // loop_pre_header
                  _
                $region57: #{double_conv.4} parent=54 // loop_header
                  %s344 = sphi 0, %s348
                  %p345 = scmp.ge.s32.totalorder %s344, 1
                  %s349 = sphi %s261, %s261
                  %s350 = sphi %s257, %s257
                $region58: #{double_conv.4} parent=54 // loop_header_branch
                  %347 = sbr.rel (%p345) target = $region62
                $region59: #{double_conv.4} parent=54 // loop_body
                  _
                $region60: #{double_conv.4} parent=54 // loop_footer
                  %s348 = sadd.s32 1, %s344
                $region61: #{double_conv.4} parent=54 // loop_footer_branch
                  %343 = sbr.rel target = $region57
                $region62: #{double_conv.4} parent=54 // loop_exit
                  _
                loop: start=0, step=1, limit=1
                $region63: #{double_conv.4} parent=54 // loop_pre_header
                  _
                $region64: #{double_conv.4} parent=54 // loop_header
                  %s353 = sphi 0, %s357
                  %p354 = scmp.ge.s32.totalorder %s353, 1
                  %s358 = sphi %s261, %s261
                  %s359 = sphi %s257, %s257
                $region65: #{double_conv.4} parent=54 // loop_header_branch
                  %356 = sbr.rel (%p354) target = $region69
                $region66: #{double_conv.4} parent=54 // loop_body
                  %v360 = vld [vmem:[%s358] sm:$0xf]
                  %361 = vst [vmem:[%s359] sm:$0xf] %v360
                  %v362 = vld [vmem:[%s358 + $0x4] sm:$0xf]
                  %363 = vst [vmem:[%s359 + $0x4] sm:$0xf] %v362
                  %v364 = vld [vmem:[%s358 + $0x8] sm:$0xf]
                  %365 = vst [vmem:[%s359 + $0x8] sm:$0xf] %v364
                  %v366 = vld [vmem:[%s358 + $0xc] sm:$0xf]
                  %367 = vst [vmem:[%s359 + $0xc] sm:$0xf] %v366
                  %v368 = vld [vmem:[%s358 + $0x10] sm:$0xf]
                  %369 = vst [vmem:[%s359 + $0x10] sm:$0xf] %v368
                  %v370 = vld [vmem:[%s358 + $0x14] sm:$0xf]
                  %371 = vst [vmem:[%s359 + $0x14] sm:$0xf] %v370
                  %v372 = vld [vmem:[%s358 + $0x18] sm:$0xf]
                  %373 = vst [vmem:[%s359 + $0x18] sm:$0xf] %v372
                  %v374 = vld [vmem:[%s358 + $0x1c] sm:$0xf]
                  %375 = vst [vmem:[%s359 + $0x1c] sm:$0xf] %v374
                  %v376 = vld [vmem:[%s358 + $0x20] sm:$0xf]
                  %377 = vst [vmem:[%s359 + $0x20] sm:$0xf] %v376
                  %v378 = vld [vmem:[%s358 + $0x24] sm:$0xf]
                  %379 = vst [vmem:[%s359 + $0x24] sm:$0xf] %v378
                  %v380 = vld [vmem:[%s358 + $0x28] sm:$0xf]
                  %381 = vst [vmem:[%s359 + $0x28] sm:$0xf] %v380
                  %v382 = vld [vmem:[%s358 + $0x2c] sm:$0xf]
                  %383 = vst [vmem:[%s359 + $0x2c] sm:$0xf] %v382
                  %v384 = vld [vmem:[%s358 + $0x30] sm:$0xf]
                  %385 = vst [vmem:[%s359 + $0x30] sm:$0xf] %v384
                  %v386 = vld [vmem:[%s358 + $0x34] sm:$0xf]
                  %387 = vst [vmem:[%s359 + $0x34] sm:$0xf] %v386
                  %v388 = vld [vmem:[%s358 + $0x38] sm:$0xf]
                  %389 = vst [vmem:[%s359 + $0x38] sm:$0xf] %v388
                  %v390 = vld [vmem:[%s358 + $0x3c] sm:$0xf]
                  %391 = vst [vmem:[%s359 + $0x3c] sm:$0xf] %v390
                  %v392 = vld [vmem:[%s358 + $0x80] sm:$0xf]
                  %393 = vst [vmem:[%s359 + $0x40] sm:$0xf] %v392
                  %v394 = vld [vmem:[%s358 + $0x84] sm:$0xf]
                  %395 = vst [vmem:[%s359 + $0x44] sm:$0xf] %v394
                  %v396 = vld [vmem:[%s358 + $0x88] sm:$0xf]
                  %397 = vst [vmem:[%s359 + $0x48] sm:$0xf] %v396
                  %v398 = vld [vmem:[%s358 + $0x8c] sm:$0xf]
                  %399 = vst [vmem:[%s359 + $0x4c] sm:$0xf] %v398
                  %v400 = vld [vmem:[%s358 + $0x90] sm:$0xf]
                  %401 = vst [vmem:[%s359 + $0x50] sm:$0xf] %v400
                  %v402 = vld [vmem:[%s358 + $0x94] sm:$0xf]
                  %403 = vst [vmem:[%s359 + $0x54] sm:$0xf] %v402
                  %v404 = vld [vmem:[%s358 + $0x98] sm:$0xf]
                  %405 = vst [vmem:[%s359 + $0x58] sm:$0xf] %v404
                  %v406 = vld [vmem:[%s358 + $0x9c] sm:$0xf]
                  %407 = vst [vmem:[%s359 + $0x5c] sm:$0xf] %v406
                  %v408 = vld [vmem:[%s358 + $0xa0] sm:$0xf]
                  %409 = vst [vmem:[%s359 + $0x60] sm:$0xf] %v408
                  %v410 = vld [vmem:[%s358 + $0xa4] sm:$0xf]
                  %411 = vst [vmem:[%s359 + $0x64] sm:$0xf] %v410
                  %v412 = vld [vmem:[%s358 + $0xa8] sm:$0xf]
                  %413 = vst [vmem:[%s359 + $0x68] sm:$0xf] %v412
                  %v414 = vld [vmem:[%s358 + $0xac] sm:$0xf]
                  %415 = vst [vmem:[%s359 + $0x6c] sm:$0xf] %v414
                  %v416 = vld [vmem:[%s358 + $0xb0] sm:$0xf]
                  %417 = vst [vmem:[%s359 + $0x70] sm:$0xf] %v416
                  %v418 = vld [vmem:[%s358 + $0xb4] sm:$0xf]
                  %419 = vst [vmem:[%s359 + $0x74] sm:$0xf] %v418
                  %v420 = vld [vmem:[%s358 + $0xb8] sm:$0xf]
                  %421 = vst [vmem:[%s359 + $0x78] sm:$0xf] %v420
                  %v422 = vld [vmem:[%s358 + $0xbc] sm:$0xf]
                  %423 = vst [vmem:[%s359 + $0x7c] sm:$0xf] %v422
                $region67: #{double_conv.4} parent=54 // loop_footer
                  %s357 = sadd.s32 1, %s353
                $region68: #{double_conv.4} parent=54 // loop_footer_branch
                  %352 = sbr.rel target = $region64
                $region69: #{double_conv.4} parent=54 // loop_exit
                  _
              $region55: #{double_conv.4} parent=39 // pred_fallthru
                _
            $region40: #{double_conv.4} parent=35 // pred_fallthru
              _
            // Predicated region
            $region41: #{double_conv.4} parent=35 // pred_check
              _
            $region42: #{double_conv.4} parent=35 // pred_check_branch
              %267 = sbr.rel (0) target = $region44
            $region43: #{double_conv.4} parent=35 // pred_region
              loop: start=0, step=1, limit=1
              $region45: #{double_conv.4} parent=43 // loop_pre_header
                _
              $region46: #{double_conv.4} parent=43 // loop_header
                %s270 = sphi 0, %s274
                %p271 = scmp.ge.s32.totalorder %s270, 1
                %s275 = sphi %s261, %s261
                %s276 = sphi %s257, %s257
              $region47: #{double_conv.4} parent=43 // loop_header_branch
                %273 = sbr.rel (%p271) target = $region51
              $region48: #{double_conv.4} parent=43 // loop_body
                %v277 = vld [vmem:[%s275] sm:$0xf]
                %278 = vst [vmem:[%s276] sm:$0xf] %v277
                %v279 = vld [vmem:[%s275 + $0x4] sm:$0xf]
                %280 = vst [vmem:[%s276 + $0x4] sm:$0xf] %v279
                %v281 = vld [vmem:[%s275 + $0x8] sm:$0xf]
                %282 = vst [vmem:[%s276 + $0x8] sm:$0xf] %v281
                %v283 = vld [vmem:[%s275 + $0xc] sm:$0xf]
                %284 = vst [vmem:[%s276 + $0xc] sm:$0xf] %v283
                %v285 = vld [vmem:[%s275 + $0x10] sm:$0xf]
                %286 = vst [vmem:[%s276 + $0x10] sm:$0xf] %v285
                %v287 = vld [vmem:[%s275 + $0x14] sm:$0xf]
                %288 = vst [vmem:[%s276 + $0x14] sm:$0xf] %v287
                %v289 = vld [vmem:[%s275 + $0x18] sm:$0xf]
                %290 = vst [vmem:[%s276 + $0x18] sm:$0xf] %v289
                %v291 = vld [vmem:[%s275 + $0x1c] sm:$0xf]
                %292 = vst [vmem:[%s276 + $0x1c] sm:$0xf] %v291
                %v293 = vld [vmem:[%s275 + $0x20] sm:$0xf]
                %294 = vst [vmem:[%s276 + $0x20] sm:$0xf] %v293
                %v295 = vld [vmem:[%s275 + $0x24] sm:$0xf]
                %296 = vst [vmem:[%s276 + $0x24] sm:$0xf] %v295
                %v297 = vld [vmem:[%s275 + $0x28] sm:$0xf]
                %298 = vst [vmem:[%s276 + $0x28] sm:$0xf] %v297
                %v299 = vld [vmem:[%s275 + $0x2c] sm:$0xf]
                %300 = vst [vmem:[%s276 + $0x2c] sm:$0xf] %v299
                %v301 = vld [vmem:[%s275 + $0x30] sm:$0xf]
                %302 = vst [vmem:[%s276 + $0x30] sm:$0xf] %v301
                %v303 = vld [vmem:[%s275 + $0x34] sm:$0xf]
                %304 = vst [vmem:[%s276 + $0x34] sm:$0xf] %v303
                %v305 = vld [vmem:[%s275 + $0x38] sm:$0xf]
                %306 = vst [vmem:[%s276 + $0x38] sm:$0xf] %v305
                %v307 = vld [vmem:[%s275 + $0x3c] sm:$0xf]
                %308 = vst [vmem:[%s276 + $0x3c] sm:$0xf] %v307
                %v309 = vld [vmem:[%s275 + $0x80] sm:$0xf]
                %310 = vst [vmem:[%s276 + $0x40] sm:$0xf] %v309
                %v311 = vld [vmem:[%s275 + $0x84] sm:$0xf]
                %312 = vst [vmem:[%s276 + $0x44] sm:$0xf] %v311
                %v313 = vld [vmem:[%s275 + $0x88] sm:$0xf]
                %314 = vst [vmem:[%s276 + $0x48] sm:$0xf] %v313
                %v315 = vld [vmem:[%s275 + $0x8c] sm:$0xf]
                %316 = vst [vmem:[%s276 + $0x4c] sm:$0xf] %v315
                %v317 = vld [vmem:[%s275 + $0x90] sm:$0xf]
                %318 = vst [vmem:[%s276 + $0x50] sm:$0xf] %v317
                %v319 = vld [vmem:[%s275 + $0x94] sm:$0xf]
                %320 = vst [vmem:[%s276 + $0x54] sm:$0xf] %v319
                %v321 = vld [vmem:[%s275 + $0x98] sm:$0xf]
                %322 = vst [vmem:[%s276 + $0x58] sm:$0xf] %v321
                %v323 = vld [vmem:[%s275 + $0x9c] sm:$0xf]
                %324 = vst [vmem:[%s276 + $0x5c] sm:$0xf] %v323
                %v325 = vld [vmem:[%s275 + $0xa0] sm:$0xf]
                %326 = vst [vmem:[%s276 + $0x60] sm:$0xf] %v325
                %v327 = vld [vmem:[%s275 + $0xa4] sm:$0xf]
                %328 = vst [vmem:[%s276 + $0x64] sm:$0xf] %v327
                %v329 = vld [vmem:[%s275 + $0xa8] sm:$0xf]
                %330 = vst [vmem:[%s276 + $0x68] sm:$0xf] %v329
                %v331 = vld [vmem:[%s275 + $0xac] sm:$0xf]
                %332 = vst [vmem:[%s276 + $0x6c] sm:$0xf] %v331
                %v333 = vld [vmem:[%s275 + $0xb0] sm:$0xf]
                %334 = vst [vmem:[%s276 + $0x70] sm:$0xf] %v333
                %v335 = vld [vmem:[%s275 + $0xb4] sm:$0xf]
                %336 = vst [vmem:[%s276 + $0x74] sm:$0xf] %v335
                %v337 = vld [vmem:[%s275 + $0xb8] sm:$0xf]
                %338 = vst [vmem:[%s276 + $0x78] sm:$0xf] %v337
                %v339 = vld [vmem:[%s275 + $0xbc] sm:$0xf]
                %340 = vst [vmem:[%s276 + $0x7c] sm:$0xf] %v339
              $region49: #{double_conv.4} parent=43 // loop_footer
                %s274 = sadd.s32 1, %s270
              $region50: #{double_conv.4} parent=43 // loop_footer_branch
                %269 = sbr.rel target = $region46
              $region51: #{double_conv.4} parent=43 // loop_exit
                _
            $region44: #{double_conv.4} parent=35 // pred_fallthru
              _
          $region36: #{double_conv.4} parent=31 // pred_fallthru
            _
          %424 = vnop
        $region32: #{double_conv.4} parent=27 // pred_fallthru
          _
        // Predicated region
        $region70: #{double_conv.4} parent=27 // pred_check
          %p425 = pneg %p110
        $region71: #{double_conv.4} parent=27 // pred_check_branch
          %427 = sbr.rel (%p425) target = $region73
        $region72: #{double_conv.4} parent=27 // pred_region
          %s428 = sand.u32 %s100, 1
          %s429 = sand.u32 %s100, 1
          %s430 = smul.addr %s429, 16
          %s431 = scalar_lea.vmem [#allocation5], %s430
          %s432 = smul.u32 %s14, 8
          %s433 = ssub.s32 %s432, 1
          %p434 = scmp.gt.s32.totalorder %s433, 0
          %s435 = scalar_select %p434, %s433, 0
          %s436 = smul.addr %s435, 2
          %s437 = smul.addr %s436, 4
          %s438 = scalar_lea.vmem %s3, %s437
          // Predicated region
          $region74: #{double_conv.4} parent=72 // pred_check
            _
          $region75: #{double_conv.4} parent=72 // pred_check_branch
            %440 = sbr.rel (0) target = $region77
          $region76: #{double_conv.4} parent=72 // pred_region
            // Predicated region
            $region78: #{double_conv.4} parent=76 // pred_check
              _
            $region79: #{double_conv.4} parent=76 // pred_check_branch
              %442 = sbr.rel target = $region81
            $region80: #{double_conv.4} parent=76 // pred_region
              // Predicated region
              $region93: #{double_conv.4} parent=80 // pred_check
                _
              $region94: #{double_conv.4} parent=80 // pred_check_branch
                %463 = sbr.rel (0) target = $region96
              $region95: #{double_conv.4} parent=80 // pred_region
                loop: start=0, step=1, limit=1
                $region97: #{double_conv.4} parent=95 // loop_pre_header
                  _
                $region98: #{double_conv.4} parent=95 // loop_header
                  %s465 = sphi 0, %s469
                  %p466 = scmp.ge.s32.totalorder %s465, 1
                  %s470 = sphi %s438, %s438
                  %s471 = sphi %s431, %s431
                $region99: #{double_conv.4} parent=95 // loop_header_branch
                  %468 = sbr.rel (%p466) target = $region103
                $region100: #{double_conv.4} parent=95 // loop_body
                  _
                $region101: #{double_conv.4} parent=95 // loop_footer
                  %s469 = sadd.s32 1, %s465
                $region102: #{double_conv.4} parent=95 // loop_footer_branch
                  %464 = sbr.rel target = $region98
                $region103: #{double_conv.4} parent=95 // loop_exit
                  _
                loop: start=0, step=1, limit=1
                $region104: #{double_conv.4} parent=95 // loop_pre_header
                  _
                $region105: #{double_conv.4} parent=95 // loop_header
                  %s474 = sphi 0, %s478
                  %p475 = scmp.ge.s32.totalorder %s474, 1
                  %s479 = sphi %s438, %s438
                  %s480 = sphi %s431, %s431
                $region106: #{double_conv.4} parent=95 // loop_header_branch
                  %477 = sbr.rel (%p475) target = $region110
                $region107: #{double_conv.4} parent=95 // loop_body
                  %v481 = vld [vmem:[%s479] sm:$0xf]
                  %482 = vst [vmem:[%s480] sm:$0xf] %v481
                  %v483 = vld [vmem:[%s479 + $0x4] sm:$0xf]
                  %484 = vst [vmem:[%s480 + $0x4] sm:$0xf] %v483
                  %v485 = vld [vmem:[%s479 + $0x80] sm:$0xf]
                  %486 = vst [vmem:[%s480 + $0x8] sm:$0xf] %v485
                  %v487 = vld [vmem:[%s479 + $0x84] sm:$0xf]
                  %488 = vst [vmem:[%s480 + $0xc] sm:$0xf] %v487
                $region108: #{double_conv.4} parent=95 // loop_footer
                  %s478 = sadd.s32 1, %s474
                $region109: #{double_conv.4} parent=95 // loop_footer_branch
                  %473 = sbr.rel target = $region105
                $region110: #{double_conv.4} parent=95 // loop_exit
                  _
              $region96: #{double_conv.4} parent=80 // pred_fallthru
                _
            $region81: #{double_conv.4} parent=76 // pred_fallthru
              _
            // Predicated region
            $region82: #{double_conv.4} parent=76 // pred_check
              _
            $region83: #{double_conv.4} parent=76 // pred_check_branch
              %444 = sbr.rel (0) target = $region85
            $region84: #{double_conv.4} parent=76 // pred_region
              loop: start=0, step=1, limit=1
              $region86: #{double_conv.4} parent=84 // loop_pre_header
                _
              $region87: #{double_conv.4} parent=84 // loop_header
                %s447 = sphi 0, %s451
                %p448 = scmp.ge.s32.totalorder %s447, 1
                %s452 = sphi %s438, %s438
                %s453 = sphi %s431, %s431
              $region88: #{double_conv.4} parent=84 // loop_header_branch
                %450 = sbr.rel (%p448) target = $region92
              $region89: #{double_conv.4} parent=84 // loop_body
                %v454 = vld [vmem:[%s452] sm:$0xf]
                %455 = vst [vmem:[%s453] sm:$0xf] %v454
                %v456 = vld [vmem:[%s452 + $0x4] sm:$0xf]
                %457 = vst [vmem:[%s453 + $0x4] sm:$0xf] %v456
                %v458 = vld [vmem:[%s452 + $0x80] sm:$0xf]
                %459 = vst [vmem:[%s453 + $0x8] sm:$0xf] %v458
                %v460 = vld [vmem:[%s452 + $0x84] sm:$0xf]
                %461 = vst [vmem:[%s453 + $0xc] sm:$0xf] %v460
              $region90: #{double_conv.4} parent=84 // loop_footer
                %s451 = sadd.s32 1, %s447
              $region91: #{double_conv.4} parent=84 // loop_footer_branch
                %446 = sbr.rel target = $region87
              $region92: #{double_conv.4} parent=84 // loop_exit
                _
            $region85: #{double_conv.4} parent=76 // pred_fallthru
              _
          $region77: #{double_conv.4} parent=72 // pred_fallthru
            _
          %489 = vnop
        $region73: #{double_conv.4} parent=27 // pred_fallthru
          _
        // Predicated region
        $region111: #{double_conv.4} parent=27 // pred_check
          %p490 = pneg %p144
        $region112: #{double_conv.4} parent=27 // pred_check_branch
          %492 = sbr.rel (%p490) target = $region114
        $region113: #{double_conv.4} parent=27 // pred_region
          %s493 = sand.u32 %s134, 1
          %s494 = sand.u32 %s134, 1
          %s495 = smul.addr %s494, 16
          %s496 = scalar_lea.vmem [#allocation6], %s495
          %s497 = smul.u32 %s14, 8
          %s498 = sadd.s32 %s497, 8
          %p499 = scmp.lt.s32.totalorder %s498, 15
          %s500 = scalar_select %p499, %s498, 15
          %s501 = smul.addr %s500, 2
          %s502 = smul.addr %s501, 4
          %s503 = scalar_lea.vmem %s4, %s502
          // Predicated region
          $region115: #{double_conv.4} parent=113 // pred_check
            _
          $region116: #{double_conv.4} parent=113 // pred_check_branch
            %505 = sbr.rel (0) target = $region118
          $region117: #{double_conv.4} parent=113 // pred_region
            // Predicated region
            $region119: #{double_conv.4} parent=117 // pred_check
              _
            $region120: #{double_conv.4} parent=117 // pred_check_branch
              %507 = sbr.rel target = $region122
            $region121: #{double_conv.4} parent=117 // pred_region
              // Predicated region
              $region134: #{double_conv.4} parent=121 // pred_check
                _
              $region135: #{double_conv.4} parent=121 // pred_check_branch
                %528 = sbr.rel (0) target = $region137
              $region136: #{double_conv.4} parent=121 // pred_region
                loop: start=0, step=1, limit=1
                $region138: #{double_conv.4} parent=136 // loop_pre_header
                  _
                $region139: #{double_conv.4} parent=136 // loop_header
                  %s530 = sphi 0, %s534
                  %p531 = scmp.ge.s32.totalorder %s530, 1
                  %s535 = sphi %s503, %s503
                  %s536 = sphi %s496, %s496
                $region140: #{double_conv.4} parent=136 // loop_header_branch
                  %533 = sbr.rel (%p531) target = $region144
                $region141: #{double_conv.4} parent=136 // loop_body
                  _
                $region142: #{double_conv.4} parent=136 // loop_footer
                  %s534 = sadd.s32 1, %s530
                $region143: #{double_conv.4} parent=136 // loop_footer_branch
                  %529 = sbr.rel target = $region139
                $region144: #{double_conv.4} parent=136 // loop_exit
                  _
                loop: start=0, step=1, limit=1
                $region145: #{double_conv.4} parent=136 // loop_pre_header
                  _
                $region146: #{double_conv.4} parent=136 // loop_header
                  %s539 = sphi 0, %s543
                  %p540 = scmp.ge.s32.totalorder %s539, 1
                  %s544 = sphi %s503, %s503
                  %s545 = sphi %s496, %s496
                $region147: #{double_conv.4} parent=136 // loop_header_branch
                  %542 = sbr.rel (%p540) target = $region151
                $region148: #{double_conv.4} parent=136 // loop_body
                  %v546 = vld [vmem:[%s544] sm:$0xf]
                  %547 = vst [vmem:[%s545] sm:$0xf] %v546
                  %v548 = vld [vmem:[%s544 + $0x4] sm:$0xf]
                  %549 = vst [vmem:[%s545 + $0x4] sm:$0xf] %v548
                  %v550 = vld [vmem:[%s544 + $0x80] sm:$0xf]
                  %551 = vst [vmem:[%s545 + $0x8] sm:$0xf] %v550
                  %v552 = vld [vmem:[%s544 + $0x84] sm:$0xf]
                  %553 = vst [vmem:[%s545 + $0xc] sm:$0xf] %v552
                $region149: #{double_conv.4} parent=136 // loop_footer
                  %s543 = sadd.s32 1, %s539
                $region150: #{double_conv.4} parent=136 // loop_footer_branch
                  %538 = sbr.rel target = $region146
                $region151: #{double_conv.4} parent=136 // loop_exit
                  _
              $region137: #{double_conv.4} parent=121 // pred_fallthru
                _
            $region122: #{double_conv.4} parent=117 // pred_fallthru
              _
            // Predicated region
            $region123: #{double_conv.4} parent=117 // pred_check
              _
            $region124: #{double_conv.4} parent=117 // pred_check_branch
              %509 = sbr.rel (0) target = $region126
            $region125: #{double_conv.4} parent=117 // pred_region
              loop: start=0, step=1, limit=1
              $region127: #{double_conv.4} parent=125 // loop_pre_header
                _
              $region128: #{double_conv.4} parent=125 // loop_header
                %s512 = sphi 0, %s516
                %p513 = scmp.ge.s32.totalorder %s512, 1
                %s517 = sphi %s503, %s503
                %s518 = sphi %s496, %s496
              $region129: #{double_conv.4} parent=125 // loop_header_branch
                %515 = sbr.rel (%p513) target = $region133
              $region130: #{double_conv.4} parent=125 // loop_body
                %v519 = vld [vmem:[%s517] sm:$0xf]
                %520 = vst [vmem:[%s518] sm:$0xf] %v519
                %v521 = vld [vmem:[%s517 + $0x4] sm:$0xf]
                %522 = vst [vmem:[%s518 + $0x4] sm:$0xf] %v521
                %v523 = vld [vmem:[%s517 + $0x80] sm:$0xf]
                %524 = vst [vmem:[%s518 + $0x8] sm:$0xf] %v523
                %v525 = vld [vmem:[%s517 + $0x84] sm:$0xf]
                %526 = vst [vmem:[%s518 + $0xc] sm:$0xf] %v525
              $region131: #{double_conv.4} parent=125 // loop_footer
                %s516 = sadd.s32 1, %s512
              $region132: #{double_conv.4} parent=125 // loop_footer_branch
                %511 = sbr.rel target = $region128
              $region133: #{double_conv.4} parent=125 // loop_exit
                _
            $region126: #{double_conv.4} parent=117 // pred_fallthru
              _
          $region118: #{double_conv.4} parent=113 // pred_fallthru
            _
          %554 = vnop
        $region114: #{double_conv.4} parent=27 // pred_fallthru
          _
      $region28: #{double_conv.4} parent=5 // pred_fallthru
        _
      %p555 = scmp.le.s32.totalorder 1, %s14
      %p556 = scmp.lt.s32.totalorder %s14, 3
      %p557 = pnand %p555, %p556
      %p558 = pneg %p557
      // Predicated region
      $region152: #{double_conv.4} parent=5 // pred_check
        _
      $region153: #{double_conv.4} parent=5 // pred_check_branch
        %560 = sbr.rel (%p557) target = $region155
      $region154: #{double_conv.4} parent=5 // pred_region
        %s561 = ssub.s32 %s14, 1
        %s562 = sand.u32 %s69, 1
        %s563 = sand.u32 %s69, 1
        %s564 = smul.addr %s563, 128
        %s565 = scalar_lea.vmem [#allocation4], %s564
        // Predicated region
        $region156: #{double_conv.4} parent=154 // pred_check
          %p566 = pneg %p82
        $region157: #{double_conv.4} parent=154 // pred_check_branch
          %568 = sbr.rel (%p566) target = $region159
        $region158: #{double_conv.4} parent=154 // pred_region
          _
        $region159: #{double_conv.4} parent=154 // pred_fallthru
          _
        %s569 = sand.u32 %s103, 1
        %s570 = sand.u32 %s103, 1
        %s571 = smul.addr %s570, 16
        %s572 = scalar_lea.vmem [#allocation5], %s571
        // Predicated region
        $region160: #{double_conv.4} parent=154 // pred_check
          %p573 = pneg %p116
        $region161: #{double_conv.4} parent=154 // pred_check_branch
          %575 = sbr.rel (%p573) target = $region163
        $region162: #{double_conv.4} parent=154 // pred_region
          _
        $region163: #{double_conv.4} parent=154 // pred_fallthru
          _
        %s576 = sand.u32 %s137, 1
        %s577 = sand.u32 %s137, 1
        %s578 = smul.addr %s577, 16
        %s579 = scalar_lea.vmem [#allocation6], %s578
        // Predicated region
        $region164: #{double_conv.4} parent=154 // pred_check
          %p580 = pneg %p150
        $region165: #{double_conv.4} parent=154 // pred_check_branch
          %582 = sbr.rel (%p580) target = $region167
        $region166: #{double_conv.4} parent=154 // pred_region
          _
        $region167: #{double_conv.4} parent=154 // pred_fallthru
          _
        %p583 = pneg %p35
        %p584 = pneg %p32
        %p585 = pneg %p56
        %p586 = pneg %p53
        %s587 = sand.u32 %s69, 1
        %s588 = sand.u32 %s69, 1
        %s589 = smul.addr %s588, 128
        %s590 = scalar_lea.vmem [#allocation4], %s589
        %p591 = pneg %p82
        %p592 = pneg %p79
        %s593 = sand.u32 %s103, 1
        %s594 = sand.u32 %s103, 1
        %s595 = smul.addr %s594, 16
        %s596 = scalar_lea.vmem [#allocation5], %s595
        %p597 = pneg %p116
        %p598 = pneg %p113
        %s599 = sand.u32 %s137, 1
        %s600 = sand.u32 %s137, 1
        %s601 = smul.addr %s600, 16
        %s602 = scalar_lea.vmem [#allocation6], %s601
        %p603 = pneg %p150
        %p604 = pneg %p147
        %p605 = pneg %p171
        %p606 = pneg %p168
        %p607 = pneg %p197
        %p608 = pneg %p194
        %s609 = sand.u32 %s184, 1
        %s610 = sand.u32 %s184, 1
        %s611 = smul.addr %s610, 128
        %s612 = scalar_lea.vmem [#allocation7], %s611
        %p613 = pneg %p223
        %p614 = pneg %p220
        %p615 = scmp.lt.s32.totalorder %s19, 1
        %s616 = scalar_select %p615, %s19, 1
        %s617 = smul.addr %s616, 2
        %s618 = scalar_lea.vmem %s7, %s617
        %s619 = smul.u32 8, %s19
        %s620 = smul.u32 %s19, 8
        %s621 = ssub.s32 %s620, 1
        %p622 = scmp.gt.s32.totalorder %s621, 0
        %s623 = scalar_select %p622, %s621, 0
        %s624 = smul.u32 %s19, 8
        %s625 = sadd.s32 %s624, 8
        %p626 = scmp.lt.s32.totalorder %s625, 15
        %s627 = scalar_select %p626, %s625, 15
        %s628 = smul.u32 8, %s19
        %p629 = scmp.lt.s32.totalorder %s19, 1
        %s630 = scalar_select %p629, %s19, 1
        %s631 = smul.addr %s630, 2
        %s632 = scalar_lea.vmem %s7, %s631
        %v634 = vld [vmem:[%s565] sm:$0xf]
        %v635 = vld [vmem:[%s565 + $0x4] sm:$0xf]
        %v636 = vld [vmem:[%s565 + $0x8] sm:$0xf]
        %v637 = vld [vmem:[%s565 + $0xc] sm:$0xf]
        %v638 = vld [vmem:[%s565 + $0x10] sm:$0xf]
        %v639 = vld [vmem:[%s565 + $0x14] sm:$0xf]
        %v640 = vld [vmem:[%s565 + $0x18] sm:$0xf]
        %v641 = vld [vmem:[%s565 + $0x1c] sm:$0xf]
        %v642 = vld [vmem:[%s565 + $0x20] sm:$0xf]
        %v643 = vld [vmem:[%s565 + $0x24] sm:$0xf]
        %v644 = vld [vmem:[%s565 + $0x28] sm:$0xf]
        %v645 = vld [vmem:[%s565 + $0x2c] sm:$0xf]
        %v646 = vld [vmem:[%s565 + $0x30] sm:$0xf]
        %v647 = vld [vmem:[%s565 + $0x34] sm:$0xf]
        %v648 = vld [vmem:[%s565 + $0x38] sm:$0xf]
        %v649 = vld [vmem:[%s565 + $0x3c] sm:$0xf]
        %v650 = vld [vmem:[%s565 + $0x40] sm:$0xf]
        %v651 = vld [vmem:[%s565 + $0x44] sm:$0xf]
        %v652 = vld [vmem:[%s565 + $0x48] sm:$0xf]
        %v653 = vld [vmem:[%s565 + $0x4c] sm:$0xf]
        %v654 = vld [vmem:[%s565 + $0x50] sm:$0xf]
        %v655 = vld [vmem:[%s565 + $0x54] sm:$0xf]
        %v656 = vld [vmem:[%s565 + $0x58] sm:$0xf]
        %v657 = vld [vmem:[%s565 + $0x5c] sm:$0xf]
        %v658 = vld [vmem:[%s565 + $0x60] sm:$0xf]
        %v659 = vld [vmem:[%s565 + $0x64] sm:$0xf]
        %v660 = vld [vmem:[%s565 + $0x68] sm:$0xf]
        %v661 = vld [vmem:[%s565 + $0x6c] sm:$0xf]
        %v662 = vld [vmem:[%s565 + $0x70] sm:$0xf]
        %v663 = vld [vmem:[%s565 + $0x74] sm:$0xf]
        %v664 = vld [vmem:[%s565 + $0x78] sm:$0xf]
        %v665 = vld [vmem:[%s565 + $0x7c] sm:$0xf]
        %v666 = vunpack.c.l.bf16 %v634
        %v667 = vunpack.c.l.bf16 %v635
        %v668 = vunpack.c.l.bf16 %v636
        %v669 = vunpack.c.l.bf16 %v637
        %v670 = vunpack.c.l.bf16 %v638
        %v671 = vunpack.c.l.bf16 %v639
        %v672 = vunpack.c.l.bf16 %v640
        %v673 = vunpack.c.l.bf16 %v641
        %v674 = vunpack.c.l.bf16 %v642
        %v675 = vunpack.c.l.bf16 %v643
        %v676 = vunpack.c.l.bf16 %v644
        %v677 = vunpack.c.l.bf16 %v645
        %v678 = vunpack.c.l.bf16 %v646
        %v679 = vunpack.c.l.bf16 %v647
        %v680 = vunpack.c.l.bf16 %v648
        %v681 = vunpack.c.l.bf16 %v649
        %v682 = vunpack.c.l.bf16 %v650
        %v683 = vunpack.c.l.bf16 %v651
        %v684 = vunpack.c.l.bf16 %v652
        %v685 = vunpack.c.l.bf16 %v653
        %v686 = vunpack.c.l.bf16 %v654
        %v687 = vunpack.c.l.bf16 %v655
        %v688 = vunpack.c.l.bf16 %v656
        %v689 = vunpack.c.l.bf16 %v657
        %v690 = vunpack.c.l.bf16 %v658
        %v691 = vunpack.c.l.bf16 %v659
        %v692 = vunpack.c.l.bf16 %v660
        %v693 = vunpack.c.l.bf16 %v661
        %v694 = vunpack.c.l.bf16 %v662
        %v695 = vunpack.c.l.bf16 %v663
        %v696 = vunpack.c.l.bf16 %v664
        %v697 = vunpack.c.l.bf16 %v665
        %v698 = vld [vmem:[%s0] sm:$0x1]
        %v700 = vlaneseq
        %v701 = vshrl.u32 %v700, 7
        %v702 = vsub.s32 0, %v701
        %v703 = vrot.slane %v698, %v702
        %v705 = vmul.f32 %v666, %v703
        %v706 = vmul.f32 %v667, %v703
        %v707 = vmul.f32 %v668, %v703
        %v708 = vmul.f32 %v669, %v703
        %v709 = vmul.f32 %v670, %v703
        %v710 = vmul.f32 %v671, %v703
        %v711 = vmul.f32 %v672, %v703
        %v712 = vmul.f32 %v673, %v703
        %v713 = vmul.f32 %v674, %v703
        %v714 = vmul.f32 %v675, %v703
        %v715 = vmul.f32 %v676, %v703
        %v716 = vmul.f32 %v677, %v703
        %v717 = vmul.f32 %v678, %v703
        %v718 = vmul.f32 %v679, %v703
        %v719 = vmul.f32 %v680, %v703
        %v720 = vmul.f32 %v681, %v703
        %v721 = vmul.f32 %v682, %v703
        %v722 = vmul.f32 %v683, %v703
        %v723 = vmul.f32 %v684, %v703
        %v724 = vmul.f32 %v685, %v703
        %v725 = vmul.f32 %v686, %v703
        %v726 = vmul.f32 %v687, %v703
        %v727 = vmul.f32 %v688, %v703
        %v728 = vmul.f32 %v689, %v703
        %v729 = vmul.f32 %v690, %v703
        %v730 = vmul.f32 %v691, %v703
        %v731 = vmul.f32 %v692, %v703
        %v732 = vmul.f32 %v693, %v703
        %v733 = vmul.f32 %v694, %v703
        %v734 = vmul.f32 %v695, %v703
        %v735 = vmul.f32 %v696, %v703
        %v736 = vmul.f32 %v697, %v703
        %v737 = vld [vmem:[%s1] sm:$0x1]
        %v739 = vlaneseq
        %v740 = vshrl.u32 %v739, 7
        %v741 = vsub.s32 0, %v740
        %v742 = vrot.slane %v737, %v741
        %v744 = vadd.f32 %v705, %v742
        %v745 = vadd.f32 %v706, %v742
        %v746 = vadd.f32 %v707, %v742
        %v747 = vadd.f32 %v708, %v742
        %v748 = vadd.f32 %v709, %v742
        %v749 = vadd.f32 %v710, %v742
        %v750 = vadd.f32 %v711, %v742
        %v751 = vadd.f32 %v712, %v742
        %v752 = vadd.f32 %v713, %v742
        %v753 = vadd.f32 %v714, %v742
        %v754 = vadd.f32 %v715, %v742
        %v755 = vadd.f32 %v716, %v742
        %v756 = vadd.f32 %v717, %v742
        %v757 = vadd.f32 %v718, %v742
        %v758 = vadd.f32 %v719, %v742
        %v759 = vadd.f32 %v720, %v742
        %v760 = vadd.f32 %v721, %v742
        %v761 = vadd.f32 %v722, %v742
        %v762 = vadd.f32 %v723, %v742
        %v763 = vadd.f32 %v724, %v742
        %v764 = vadd.f32 %v725, %v742
        %v765 = vadd.f32 %v726, %v742
        %v766 = vadd.f32 %v727, %v742
        %v767 = vadd.f32 %v728, %v742
        %v768 = vadd.f32 %v729, %v742
        %v769 = vadd.f32 %v730, %v742
        %v770 = vadd.f32 %v731, %v742
        %v771 = vadd.f32 %v732, %v742
        %v772 = vadd.f32 %v733, %v742
        %v773 = vadd.f32 %v734, %v742
        %v774 = vadd.f32 %v735, %v742
        %v775 = vadd.f32 %v736, %v742
        %v776 = vmax.f32 %v744, 0.0
        %v777 = vmax.f32 %v745, 0.0
        %v778 = vmax.f32 %v746, 0.0
        %v779 = vmax.f32 %v747, 0.0
        %v780 = vmax.f32 %v748, 0.0
        %v781 = vmax.f32 %v749, 0.0
        %v782 = vmax.f32 %v750, 0.0
        %v783 = vmax.f32 %v751, 0.0
        %v784 = vmax.f32 %v752, 0.0
        %v785 = vmax.f32 %v753, 0.0
        %v786 = vmax.f32 %v754, 0.0
        %v787 = vmax.f32 %v755, 0.0
        %v788 = vmax.f32 %v756, 0.0
        %v789 = vmax.f32 %v757, 0.0
        %v790 = vmax.f32 %v758, 0.0
        %v791 = vmax.f32 %v759, 0.0
        %v792 = vmax.f32 %v760, 0.0
        %v793 = vmax.f32 %v761, 0.0
        %v794 = vmax.f32 %v762, 0.0
        %v795 = vmax.f32 %v763, 0.0
        %v796 = vmax.f32 %v764, 0.0
        %v797 = vmax.f32 %v765, 0.0
        %v798 = vmax.f32 %v766, 0.0
        %v799 = vmax.f32 %v767, 0.0
        %v800 = vmax.f32 %v768, 0.0
        %v801 = vmax.f32 %v769, 0.0
        %v802 = vmax.f32 %v770, 0.0
        %v803 = vmax.f32 %v771, 0.0
        %v804 = vmax.f32 %v772, 0.0
        %v805 = vmax.f32 %v773, 0.0
        %v806 = vmax.f32 %v774, 0.0
        %v807 = vmax.f32 %v775, 0.0
        %v808 = vpack.c.bf16 %v777, %v776
        %v809 = vpack.c.bf16 %v779, %v778
        %v810 = vpack.c.bf16 %v781, %v780
        %v811 = vpack.c.bf16 %v783, %v782
        %v812 = vpack.c.bf16 %v785, %v784
        %v813 = vpack.c.bf16 %v787, %v786
        %v814 = vpack.c.bf16 %v789, %v788
        %v815 = vpack.c.bf16 %v791, %v790
        %v816 = vpack.c.bf16 %v793, %v792
        %v817 = vpack.c.bf16 %v795, %v794
        %v818 = vpack.c.bf16 %v797, %v796
        %v819 = vpack.c.bf16 %v799, %v798
        %v820 = vpack.c.bf16 %v801, %v800
        %v821 = vpack.c.bf16 %v803, %v802
        %v822 = vpack.c.bf16 %v805, %v804
        %v823 = vpack.c.bf16 %v807, %v806
        %s824 = scalar_lea.vmem [#allocation2], 8
        %825 = vst [vmem:[%s824] sm:$0xff] %v808
        %826 = vst [vmem:[%s824 + $0x8] sm:$0xff] %v809
        %827 = vst [vmem:[%s824 + $0x10] sm:$0xff] %v810
        %828 = vst [vmem:[%s824 + $0x18] sm:$0xff] %v811
        %829 = vst [vmem:[%s824 + $0x20] sm:$0xff] %v812
        %830 = vst [vmem:[%s824 + $0x28] sm:$0xff] %v813
        %831 = vst [vmem:[%s824 + $0x30] sm:$0xff] %v814
        %832 = vst [vmem:[%s824 + $0x38] sm:$0xff] %v815
        %833 = vst [vmem:[%s824 + $0x50] sm:$0xff] %v816
        %834 = vst [vmem:[%s824 + $0x58] sm:$0xff] %v817
        %835 = vst [vmem:[%s824 + $0x60] sm:$0xff] %v818
        %836 = vst [vmem:[%s824 + $0x68] sm:$0xff] %v819
        %837 = vst [vmem:[%s824 + $0x70] sm:$0xff] %v820
        %838 = vst [vmem:[%s824 + $0x78] sm:$0xff] %v821
        %839 = vst [vmem:[%s824 + $0x80] sm:$0xff] %v822
        %840 = vst [vmem:[%s824 + $0x88] sm:$0xff] %v823
        %p841 = scmp.gt.s32.totalorder %s19, 0
        %v842 = vld [vmem:[%s572] sm:$0xf]
        %v843 = vld [vmem:[%s572 + $0x4] sm:$0xf]
        %v844 = vld [vmem:[%s572 + $0x8] sm:$0xf]
        %v845 = vld [vmem:[%s572 + $0xc] sm:$0xf]
        %v846 = vunpack.c.l.bf16 %v842
        %v847 = vunpack.c.l.bf16 %v843
        %v848 = vunpack.c.l.bf16 %v844
        %v849 = vunpack.c.l.bf16 %v845
        %v850 = vld [vmem:[%s0] sm:$0x1]
        %v852 = vlaneseq
        %v853 = vshrl.u32 %v852, 7
        %v854 = vsub.s32 0, %v853
        %v855 = vrot.slane %v850, %v854
        %v857 = vmul.f32 %v846, %v855
        %v858 = vmul.f32 %v847, %v855
        %v859 = vmul.f32 %v848, %v855
        %v860 = vmul.f32 %v849, %v855
        %v861 = vld [vmem:[%s1] sm:$0x1]
        %v863 = vlaneseq
        %v864 = vshrl.u32 %v863, 7
        %v865 = vsub.s32 0, %v864
        %v866 = vrot.slane %v861, %v865
        %v868 = vadd.f32 %v857, %v866
        %v869 = vadd.f32 %v858, %v866
        %v870 = vadd.f32 %v859, %v866
        %v871 = vadd.f32 %v860, %v866
        %v872 = vmax.f32 %v868, 0.0
        %v873 = vmax.f32 %v869, 0.0
        %v874 = vmax.f32 %v870, 0.0
        %v875 = vmax.f32 %v871, 0.0
        %v876 = vpack.c.bf16 %v873, %v872
        %v877 = vpack.c.bf16 %v875, %v874
        %s878 = scalar_select %p841, 1, 0
        %v879 = vstv %s878
        %vm880 = vcmp.eq.s32.totalorder %v879, 1
        %v881 = vsel %vm880, %v876, 0
        %v882 = vsel %vm880, %v877, 0
        %883 = vst [vmem:[#allocation2] sm:$0xff] %v881
        %884 = vst [vmem:[#allocation2 + $0x50] sm:$0xff] %v882
        %s885 = sadd.s32 %s19, 1
        %s886 = smul.u32 %s885, 8
        %p887 = scmp.lt.s32.totalorder %s886, 16
        %v888 = vld [vmem:[%s579] sm:$0xf]
        %v889 = vld [vmem:[%s579 + $0x4] sm:$0xf]
        %v890 = vld [vmem:[%s579 + $0x8] sm:$0xf]
        %v891 = vld [vmem:[%s579 + $0xc] sm:$0xf]
        %v892 = vunpack.c.l.bf16 %v888
        %v893 = vunpack.c.l.bf16 %v889
        %v894 = vunpack.c.l.bf16 %v890
        %v895 = vunpack.c.l.bf16 %v891
        %v896 = vld [vmem:[%s0] sm:$0x1]
        %v898 = vlaneseq
        %v899 = vshrl.u32 %v898, 7
        %v900 = vsub.s32 0, %v899
        %v901 = vrot.slane %v896, %v900
        %v903 = vmul.f32 %v892, %v901
        %v904 = vmul.f32 %v893, %v901
        %v905 = vmul.f32 %v894, %v901
        %v906 = vmul.f32 %v895, %v901
        %v907 = vld [vmem:[%s1] sm:$0x1]
        %v909 = vlaneseq
        %v910 = vshrl.u32 %v909, 7
        %v911 = vsub.s32 0, %v910
        %v912 = vrot.slane %v907, %v911
        %v914 = vadd.f32 %v903, %v912
        %v915 = vadd.f32 %v904, %v912
        %v916 = vadd.f32 %v905, %v912
        %v917 = vadd.f32 %v906, %v912
        %v918 = vmax.f32 %v914, 0.0
        %v919 = vmax.f32 %v915, 0.0
        %v920 = vmax.f32 %v916, 0.0
        %v921 = vmax.f32 %v917, 0.0
        %v922 = vpack.c.bf16 %v919, %v918
        %v923 = vpack.c.bf16 %v921, %v920
        %s924 = scalar_select %p887, 1, 0
        %v925 = vstv %s924
        %vm926 = vcmp.eq.s32.totalorder %v925, 1
        %v927 = vsel %vm926, %v922, 0
        %v928 = vsel %vm926, %v923, 0
        %s929 = scalar_lea.vmem [#allocation2], 72
        %930 = vst [vmem:[%s929] sm:$0xff] %v927
        %931 = vst [vmem:[%s929 + $0x50] sm:$0xff] %v928
        %v932 = vld [vmem:[#allocation2] sm:$0xff]
        %v933 = vld [vmem:[#allocation2 + $0x8] sm:$0xff]
        %v934 = vld [vmem:[#allocation2 + $0x10] sm:$0xff]
        %v935 = vld [vmem:[#allocation2 + $0x18] sm:$0xff]
        %v936 = vld [vmem:[#allocation2 + $0x20] sm:$0xff]
        %v937 = vld [vmem:[#allocation2 + $0x28] sm:$0xff]
        %v938 = vld [vmem:[#allocation2 + $0x30] sm:$0xff]
        %v939 = vld [vmem:[#allocation2 + $0x38] sm:$0xff]
        %v940 = vld [vmem:[#allocation2 + $0x50] sm:$0xff]
        %v941 = vld [vmem:[#allocation2 + $0x58] sm:$0xff]
        %v942 = vld [vmem:[#allocation2 + $0x60] sm:$0xff]
        %v943 = vld [vmem:[#allocation2 + $0x68] sm:$0xff]
        %v944 = vld [vmem:[#allocation2 + $0x70] sm:$0xff]
        %v945 = vld [vmem:[#allocation2 + $0x78] sm:$0xff]
        %v946 = vld [vmem:[#allocation2 + $0x80] sm:$0xff]
        %v947 = vld [vmem:[#allocation2 + $0x88] sm:$0xff]
        %v949 = vshrl.u32 %v932, 16
        %v951 = vrot.slane %v949, 7
        %v952 = vshll.u32 %v932, 16
        %v954 = vor.u32 %v951, %v952
        %v956 = vshrl.u32 %v933, 16
        %v958 = vrot.slane %v956, 7
        %v959 = vshll.u32 %v933, 16
        %v961 = vor.u32 %v958, %v959
        %v963 = vshrl.u32 %v934, 16
        %v965 = vrot.slane %v963, 7
        %v966 = vshll.u32 %v934, 16
        %v968 = vor.u32 %v965, %v966
        %v970 = vshrl.u32 %v935, 16
        %v972 = vrot.slane %v970, 7
        %v973 = vshll.u32 %v935, 16
        %v975 = vor.u32 %v972, %v973
        %v977 = vshrl.u32 %v936, 16
        %v979 = vrot.slane %v977, 7
        %v980 = vshll.u32 %v936, 16
        %v982 = vor.u32 %v979, %v980
        %v984 = vshrl.u32 %v937, 16
        %v986 = vrot.slane %v984, 7
        %v987 = vshll.u32 %v937, 16
        %v989 = vor.u32 %v986, %v987
        %v991 = vshrl.u32 %v938, 16
        %v993 = vrot.slane %v991, 7
        %v994 = vshll.u32 %v938, 16
        %v996 = vor.u32 %v993, %v994
        %v998 = vshrl.u32 %v939, 16
        %v1000 = vrot.slane %v998, 7
        %v1001 = vshll.u32 %v939, 16
        %v1003 = vor.u32 %v1000, %v1001
        %v1005 = vshrl.u32 %v940, 16
        %v1007 = vrot.slane %v1005, 7
        %v1008 = vshll.u32 %v940, 16
        %v1010 = vor.u32 %v1007, %v1008
        %v1012 = vshrl.u32 %v941, 16
        %v1014 = vrot.slane %v1012, 7
        %v1015 = vshll.u32 %v941, 16
        %v1017 = vor.u32 %v1014, %v1015
        %v1019 = vshrl.u32 %v942, 16
        %v1021 = vrot.slane %v1019, 7
        %v1022 = vshll.u32 %v942, 16
        %v1024 = vor.u32 %v1021, %v1022
        %v1026 = vshrl.u32 %v943, 16
        %v1028 = vrot.slane %v1026, 7
        %v1029 = vshll.u32 %v943, 16
        %v1031 = vor.u32 %v1028, %v1029
        %v1033 = vshrl.u32 %v944, 16
        %v1035 = vrot.slane %v1033, 7
        %v1036 = vshll.u32 %v944, 16
        %v1038 = vor.u32 %v1035, %v1036
        %v1040 = vshrl.u32 %v945, 16
        %v1042 = vrot.slane %v1040, 7
        %v1043 = vshll.u32 %v945, 16
        %v1045 = vor.u32 %v1042, %v1043
        %v1047 = vshrl.u32 %v946, 16
        %v1049 = vrot.slane %v1047, 7
        %v1050 = vshll.u32 %v946, 16
        %v1052 = vor.u32 %v1049, %v1050
        %v1054 = vshrl.u32 %v947, 16
        %v1056 = vrot.slane %v1054, 7
        %v1057 = vshll.u32 %v947, 16
        %v1059 = vor.u32 %v1056, %v1057
        %vm1076 = vcmask 1047552
        %vm1077 = vsmask.f32 7938
        %vm1078 = vmand %vm1076, %vm1077
        %v1079 = vld [vmem:[#allocation3] sm:$0xff]
        %v1080 = vsel %vm1078, %v954, %v1079
        %1081 = vst [vmem:[#allocation3] sm:$0xff] %v1080
        %v1082 = vld [vmem:[#allocation3 + $0x48] sm:$0xff]
        %v1083 = vsel %vm1078, %v961, %v1082
        %1084 = vst [vmem:[#allocation3 + $0x48] sm:$0xff] %v1083
        %v1085 = vld [vmem:[#allocation3 + $0x90] sm:$0xff]
        %v1086 = vsel %vm1078, %v968, %v1085
        %1087 = vst [vmem:[#allocation3 + $0x90] sm:$0xff] %v1086
        %v1088 = vld [vmem:[#allocation3 + $0xd8] sm:$0xff]
        %v1089 = vsel %vm1078, %v975, %v1088
        %1090 = vst [vmem:[#allocation3 + $0xd8] sm:$0xff] %v1089
        %v1091 = vld [vmem:[#allocation3 + $0x120] sm:$0xff]
        %v1092 = vsel %vm1078, %v982, %v1091
        %1093 = vst [vmem:[#allocation3 + $0x120] sm:$0xff] %v1092
        %v1094 = vld [vmem:[#allocation3 + $0x168] sm:$0xff]
        %v1095 = vsel %vm1078, %v989, %v1094
        %1096 = vst [vmem:[#allocation3 + $0x168] sm:$0xff] %v1095
        %v1097 = vld [vmem:[#allocation3 + $0x1b0] sm:$0xff]
        %v1098 = vsel %vm1078, %v996, %v1097
        %1099 = vst [vmem:[#allocation3 + $0x1b0] sm:$0xff] %v1098
        %v1100 = vld [vmem:[#allocation3 + $0x1f8] sm:$0xff]
        %v1101 = vsel %vm1078, %v1003, %v1100
        %1102 = vst [vmem:[#allocation3 + $0x1f8] sm:$0xff] %v1101
        %v1103 = vld [vmem:[#allocation3 + $0x240] sm:$0xff]
        %v1104 = vsel %vm1078, %v1010, %v1103
        %1105 = vst [vmem:[#allocation3 + $0x240] sm:$0xff] %v1104
        %v1106 = vld [vmem:[#allocation3 + $0x288] sm:$0xff]
        %v1107 = vsel %vm1078, %v1017, %v1106
        %1108 = vst [vmem:[#allocation3 + $0x288] sm:$0xff] %v1107
        %v1109 = vld [vmem:[#allocation3 + $0x2d0] sm:$0xff]
        %v1110 = vsel %vm1078, %v1024, %v1109
        %1111 = vst [vmem:[#allocation3 + $0x2d0] sm:$0xff] %v1110
        %v1112 = vld [vmem:[#allocation3 + $0x318] sm:$0xff]
        %v1113 = vsel %vm1078, %v1031, %v1112
        %1114 = vst [vmem:[#allocation3 + $0x318] sm:$0xff] %v1113
        %v1115 = vld [vmem:[#allocation3 + $0x360] sm:$0xff]
        %v1116 = vsel %vm1078, %v1038, %v1115
        %1117 = vst [vmem:[#allocation3 + $0x360] sm:$0xff] %v1116
        %v1118 = vld [vmem:[#allocation3 + $0x3a8] sm:$0xff]
        %v1119 = vsel %vm1078, %v1045, %v1118
        %1120 = vst [vmem:[#allocation3 + $0x3a8] sm:$0xff] %v1119
        %v1121 = vld [vmem:[#allocation3 + $0x3f0] sm:$0xff]
        %v1122 = vsel %vm1078, %v1052, %v1121
        %1123 = vst [vmem:[#allocation3 + $0x3f0] sm:$0xff] %v1122
        %v1124 = vld [vmem:[#allocation3 + $0x438] sm:$0xff]
        %v1125 = vsel %vm1078, %v1059, %v1124
        %1126 = vst [vmem:[#allocation3 + $0x438] sm:$0xff] %v1125
        %vm1127 = vcmask 1040384
        %vm1128 = vsmask.f32 256
        %vm1129 = vmand %vm1127, %vm1128
        %v1130 = vld [vmem:[#allocation3] sm:$0x1]
        %v1131 = vsel %vm1129, 0, %v1130
        %1132 = vst [vmem:[#allocation3] sm:$0x1] %v1131
        %v1133 = vld [vmem:[#allocation3 + $0x48] sm:$0x1]
        %v1134 = vsel %vm1129, 0, %v1133
        %1135 = vst [vmem:[#allocation3 + $0x48] sm:$0x1] %v1134
        %v1136 = vld [vmem:[#allocation3 + $0x90] sm:$0x1]
        %v1137 = vsel %vm1129, 0, %v1136
        %1138 = vst [vmem:[#allocation3 + $0x90] sm:$0x1] %v1137
        %v1139 = vld [vmem:[#allocation3 + $0xd8] sm:$0x1]
        %v1140 = vsel %vm1129, 0, %v1139
        %1141 = vst [vmem:[#allocation3 + $0xd8] sm:$0x1] %v1140
        %v1142 = vld [vmem:[#allocation3 + $0x120] sm:$0x1]
        %v1143 = vsel %vm1129, 0, %v1142
        %1144 = vst [vmem:[#allocation3 + $0x120] sm:$0x1] %v1143
        %v1145 = vld [vmem:[#allocation3 + $0x168] sm:$0x1]
        %v1146 = vsel %vm1129, 0, %v1145
        %1147 = vst [vmem:[#allocation3 + $0x168] sm:$0x1] %v1146
        %v1148 = vld [vmem:[#allocation3 + $0x1b0] sm:$0x1]
        %v1149 = vsel %vm1129, 0, %v1148
        %1150 = vst [vmem:[#allocation3 + $0x1b0] sm:$0x1] %v1149
        %v1151 = vld [vmem:[#allocation3 + $0x1f8] sm:$0x1]
        %v1152 = vsel %vm1129, 0, %v1151
        %1153 = vst [vmem:[#allocation3 + $0x1f8] sm:$0x1] %v1152
        %v1154 = vld [vmem:[#allocation3 + $0x240] sm:$0x1]
        %v1155 = vsel %vm1129, 0, %v1154
        %1156 = vst [vmem:[#allocation3 + $0x240] sm:$0x1] %v1155
        %v1157 = vld [vmem:[#allocation3 + $0x288] sm:$0x1]
        %v1158 = vsel %vm1129, 0, %v1157
        %1159 = vst [vmem:[#allocation3 + $0x288] sm:$0x1] %v1158
        %v1160 = vld [vmem:[#allocation3 + $0x2d0] sm:$0x1]
        %v1161 = vsel %vm1129, 0, %v1160
        %1162 = vst [vmem:[#allocation3 + $0x2d0] sm:$0x1] %v1161
        %v1163 = vld [vmem:[#allocation3 + $0x318] sm:$0x1]
        %v1164 = vsel %vm1129, 0, %v1163
        %1165 = vst [vmem:[#allocation3 + $0x318] sm:$0x1] %v1164
        %v1166 = vld [vmem:[#allocation3 + $0x360] sm:$0x1]
        %v1167 = vsel %vm1129, 0, %v1166
        %1168 = vst [vmem:[#allocation3 + $0x360] sm:$0x1] %v1167
        %v1169 = vld [vmem:[#allocation3 + $0x3a8] sm:$0x1]
        %v1170 = vsel %vm1129, 0, %v1169
        %1171 = vst [vmem:[#allocation3 + $0x3a8] sm:$0x1] %v1170
        %v1172 = vld [vmem:[#allocation3 + $0x3f0] sm:$0x1]
        %v1173 = vsel %vm1129, 0, %v1172
        %1174 = vst [vmem:[#allocation3 + $0x3f0] sm:$0x1] %v1173
        %v1175 = vld [vmem:[#allocation3 + $0x438] sm:$0x1]
        %v1176 = vsel %vm1129, 0, %v1175
        %1177 = vst [vmem:[#allocation3 + $0x438] sm:$0x1] %v1176
        %v1178 = vld [vmem:[#allocation2] sm:$0xff]
        %v1179 = vld [vmem:[#allocation2 + $0x8] sm:$0xff]
        %v1180 = vld [vmem:[#allocation2 + $0x10] sm:$0xff]
        %v1181 = vld [vmem:[#allocation2 + $0x18] sm:$0xff]
        %v1182 = vld [vmem:[#allocation2 + $0x20] sm:$0xff]
        %v1183 = vld [vmem:[#allocation2 + $0x28] sm:$0xff]
        %v1184 = vld [vmem:[#allocation2 + $0x30] sm:$0xff]
        %v1185 = vld [vmem:[#allocation2 + $0x38] sm:$0xff]
        %v1186 = vld [vmem:[#allocation2 + $0x50] sm:$0xff]
        %v1187 = vld [vmem:[#allocation2 + $0x58] sm:$0xff]
        %v1188 = vld [vmem:[#allocation2 + $0x60] sm:$0xff]
        %v1189 = vld [vmem:[#allocation2 + $0x68] sm:$0xff]
        %v1190 = vld [vmem:[#allocation2 + $0x70] sm:$0xff]
        %v1191 = vld [vmem:[#allocation2 + $0x78] sm:$0xff]
        %v1192 = vld [vmem:[#allocation2 + $0x80] sm:$0xff]
        %v1193 = vld [vmem:[#allocation2 + $0x88] sm:$0xff]
        %1194 = vst [vmem:[#allocation3 + $0x8] sm:$0xff] %v1178
        %1195 = vst [vmem:[#allocation3 + $0x50] sm:$0xff] %v1179
        %1196 = vst [vmem:[#allocation3 + $0x98] sm:$0xff] %v1180
        %1197 = vst [vmem:[#allocation3 + $0xe0] sm:$0xff] %v1181
        %1198 = vst [vmem:[#allocation3 + $0x128] sm:$0xff] %v1182
        %1199 = vst [vmem:[#allocation3 + $0x170] sm:$0xff] %v1183
        %1200 = vst [vmem:[#allocation3 + $0x1b8] sm:$0xff] %v1184
        %1201 = vst [vmem:[#allocation3 + $0x200] sm:$0xff] %v1185
        %1202 = vst [vmem:[#allocation3 + $0x248] sm:$0xff] %v1186
        %1203 = vst [vmem:[#allocation3 + $0x290] sm:$0xff] %v1187
        %1204 = vst [vmem:[#allocation3 + $0x2d8] sm:$0xff] %v1188
        %1205 = vst [vmem:[#allocation3 + $0x320] sm:$0xff] %v1189
        %1206 = vst [vmem:[#allocation3 + $0x368] sm:$0xff] %v1190
        %1207 = vst [vmem:[#allocation3 + $0x3b0] sm:$0xff] %v1191
        %1208 = vst [vmem:[#allocation3 + $0x3f8] sm:$0xff] %v1192
        %1209 = vst [vmem:[#allocation3 + $0x440] sm:$0xff] %v1193
        %v1210 = vld [vmem:[#allocation2] sm:$0xff]
        %v1211 = vld [vmem:[#allocation2 + $0x8] sm:$0xff]
        %v1212 = vld [vmem:[#allocation2 + $0x10] sm:$0xff]
        %v1213 = vld [vmem:[#allocation2 + $0x18] sm:$0xff]
        %v1214 = vld [vmem:[#allocation2 + $0x20] sm:$0xff]
        %v1215 = vld [vmem:[#allocation2 + $0x28] sm:$0xff]
        %v1216 = vld [vmem:[#allocation2 + $0x30] sm:$0xff]
        %v1217 = vld [vmem:[#allocation2 + $0x38] sm:$0xff]
        %v1218 = vld [vmem:[#allocation2 + $0x50] sm:$0xff]
        %v1219 = vld [vmem:[#allocation2 + $0x58] sm:$0xff]
        %v1220 = vld [vmem:[#allocation2 + $0x60] sm:$0xff]
        %v1221 = vld [vmem:[#allocation2 + $0x68] sm:$0xff]
        %v1222 = vld [vmem:[#allocation2 + $0x70] sm:$0xff]
        %v1223 = vld [vmem:[#allocation2 + $0x78] sm:$0xff]
        %v1224 = vld [vmem:[#allocation2 + $0x80] sm:$0xff]
        %v1225 = vld [vmem:[#allocation2 + $0x88] sm:$0xff]
        %v1227 = vshrl.u32 %v1210, 16
        %v1229 = vshll.u32 %v1210, 16
        %v1231 = vrot.slane %v1229, 1
        %v1232 = vor.u32 %v1227, %v1231
        %v1234 = vshrl.u32 %v1211, 16
        %v1236 = vshll.u32 %v1211, 16
        %v1238 = vrot.slane %v1236, 1
        %v1239 = vor.u32 %v1234, %v1238
        %v1241 = vshrl.u32 %v1212, 16
        %v1243 = vshll.u32 %v1212, 16
        %v1245 = vrot.slane %v1243, 1
        %v1246 = vor.u32 %v1241, %v1245
        %v1248 = vshrl.u32 %v1213, 16
        %v1250 = vshll.u32 %v1213, 16
        %v1252 = vrot.slane %v1250, 1
        %v1253 = vor.u32 %v1248, %v1252
        %v1255 = vshrl.u32 %v1214, 16
        %v1257 = vshll.u32 %v1214, 16
        %v1259 = vrot.slane %v1257, 1
        %v1260 = vor.u32 %v1255, %v1259
        %v1262 = vshrl.u32 %v1215, 16
        %v1264 = vshll.u32 %v1215, 16
        %v1266 = vrot.slane %v1264, 1
        %v1267 = vor.u32 %v1262, %v1266
        %v1269 = vshrl.u32 %v1216, 16
        %v1271 = vshll.u32 %v1216, 16
        %v1273 = vrot.slane %v1271, 1
        %v1274 = vor.u32 %v1269, %v1273
        %v1276 = vshrl.u32 %v1217, 16
        %v1278 = vshll.u32 %v1217, 16
        %v1280 = vrot.slane %v1278, 1
        %v1281 = vor.u32 %v1276, %v1280
        %v1283 = vshrl.u32 %v1218, 16
        %v1285 = vshll.u32 %v1218, 16
        %v1287 = vrot.slane %v1285, 1
        %v1288 = vor.u32 %v1283, %v1287
        %v1290 = vshrl.u32 %v1219, 16
        %v1292 = vshll.u32 %v1219, 16
        %v1294 = vrot.slane %v1292, 1
        %v1295 = vor.u32 %v1290, %v1294
        %v1297 = vshrl.u32 %v1220, 16
        %v1299 = vshll.u32 %v1220, 16
        %v1301 = vrot.slane %v1299, 1
        %v1302 = vor.u32 %v1297, %v1301
        %v1304 = vshrl.u32 %v1221, 16
        %v1306 = vshll.u32 %v1221, 16
        %v1308 = vrot.slane %v1306, 1
        %v1309 = vor.u32 %v1304, %v1308
        %v1311 = vshrl.u32 %v1222, 16
        %v1313 = vshll.u32 %v1222, 16
        %v1315 = vrot.slane %v1313, 1
        %v1316 = vor.u32 %v1311, %v1315
        %v1318 = vshrl.u32 %v1223, 16
        %v1320 = vshll.u32 %v1223, 16
        %v1322 = vrot.slane %v1320, 1
        %v1323 = vor.u32 %v1318, %v1322
        %v1325 = vshrl.u32 %v1224, 16
        %v1327 = vshll.u32 %v1224, 16
        %v1329 = vrot.slane %v1327, 1
        %v1330 = vor.u32 %v1325, %v1329
        %v1332 = vshrl.u32 %v1225, 16
        %v1334 = vshll.u32 %v1225, 16
        %v1336 = vrot.slane %v1334, 1
        %v1337 = vor.u32 %v1332, %v1336
        %vm1354 = vsmask.f32 7424
        %vm1355 = vmand %vm1076, %vm1354
        %v1356 = vld [vmem:[#allocation3 + $0x10] sm:$0xff]
        %v1357 = vsel %vm1355, %v1232, %v1356
        %1358 = vst [vmem:[#allocation3 + $0x10] sm:$0xff] %v1357
        %v1359 = vld [vmem:[#allocation3 + $0x58] sm:$0xff]
        %v1360 = vsel %vm1355, %v1239, %v1359
        %1361 = vst [vmem:[#allocation3 + $0x58] sm:$0xff] %v1360
        %v1362 = vld [vmem:[#allocation3 + $0xa0] sm:$0xff]
        %v1363 = vsel %vm1355, %v1246, %v1362
        %1364 = vst [vmem:[#allocation3 + $0xa0] sm:$0xff] %v1363
        %v1365 = vld [vmem:[#allocation3 + $0xe8] sm:$0xff]
        %v1366 = vsel %vm1355, %v1253, %v1365
        %1367 = vst [vmem:[#allocation3 + $0xe8] sm:$0xff] %v1366
        %v1368 = vld [vmem:[#allocation3 + $0x130] sm:$0xff]
        %v1369 = vsel %vm1355, %v1260, %v1368
        %1370 = vst [vmem:[#allocation3 + $0x130] sm:$0xff] %v1369
        %v1371 = vld [vmem:[#allocation3 + $0x178] sm:$0xff]
        %v1372 = vsel %vm1355, %v1267, %v1371
        %1373 = vst [vmem:[#allocation3 + $0x178] sm:$0xff] %v1372
        %v1374 = vld [vmem:[#allocation3 + $0x1c0] sm:$0xff]
        %v1375 = vsel %vm1355, %v1274, %v1374
        %1376 = vst [vmem:[#allocation3 + $0x1c0] sm:$0xff] %v1375
        %v1377 = vld [vmem:[#allocation3 + $0x208] sm:$0xff]
        %v1378 = vsel %vm1355, %v1281, %v1377
        %1379 = vst [vmem:[#allocation3 + $0x208] sm:$0xff] %v1378
        %v1380 = vld [vmem:[#allocation3 + $0x250] sm:$0xff]
        %v1381 = vsel %vm1355, %v1288, %v1380
        %1382 = vst [vmem:[#allocation3 + $0x250] sm:$0xff] %v1381
        %v1383 = vld [vmem:[#allocation3 + $0x298] sm:$0xff]
        %v1384 = vsel %vm1355, %v1295, %v1383
        %1385 = vst [vmem:[#allocation3 + $0x298] sm:$0xff] %v1384
        %v1386 = vld [vmem:[#allocation3 + $0x2e0] sm:$0xff]
        %v1387 = vsel %vm1355, %v1302, %v1386
        %1388 = vst [vmem:[#allocation3 + $0x2e0] sm:$0xff] %v1387
        %v1389 = vld [vmem:[#allocation3 + $0x328] sm:$0xff]
        %v1390 = vsel %vm1355, %v1309, %v1389
        %1391 = vst [vmem:[#allocation3 + $0x328] sm:$0xff] %v1390
        %v1392 = vld [vmem:[#allocation3 + $0x370] sm:$0xff]
        %v1393 = vsel %vm1355, %v1316, %v1392
        %1394 = vst [vmem:[#allocation3 + $0x370] sm:$0xff] %v1393
        %v1395 = vld [vmem:[#allocation3 + $0x3b8] sm:$0xff]
        %v1396 = vsel %vm1355, %v1323, %v1395
        %1397 = vst [vmem:[#allocation3 + $0x3b8] sm:$0xff] %v1396
        %v1398 = vld [vmem:[#allocation3 + $0x400] sm:$0xff]
        %v1399 = vsel %vm1355, %v1330, %v1398
        %1400 = vst [vmem:[#allocation3 + $0x400] sm:$0xff] %v1399
        %v1401 = vld [vmem:[#allocation3 + $0x448] sm:$0xff]
        %v1402 = vsel %vm1355, %v1337, %v1401
        %1403 = vst [vmem:[#allocation3 + $0x448] sm:$0xff] %v1402
        %vm1404 = vcmask 1047559
        %vm1405 = vsmask.f32 7966
        %vm1406 = vmand %vm1404, %vm1405
        %v1407 = vld [vmem:[#allocation3 + $0x10] sm:$0x80]
        %v1408 = vsel %vm1406, 0, %v1407
        %1409 = vst [vmem:[#allocation3 + $0x10] sm:$0x80] %v1408
        %v1410 = vld [vmem:[#allocation3 + $0x58] sm:$0x80]
        %v1411 = vsel %vm1406, 0, %v1410
        %1412 = vst [vmem:[#allocation3 + $0x58] sm:$0x80] %v1411
        %v1413 = vld [vmem:[#allocation3 + $0xa0] sm:$0x80]
        %v1414 = vsel %vm1406, 0, %v1413
        %1415 = vst [vmem:[#allocation3 + $0xa0] sm:$0x80] %v1414
        %v1416 = vld [vmem:[#allocation3 + $0xe8] sm:$0x80]
        %v1417 = vsel %vm1406, 0, %v1416
        %1418 = vst [vmem:[#allocation3 + $0xe8] sm:$0x80] %v1417
        %v1419 = vld [vmem:[#allocation3 + $0x130] sm:$0x80]
        %v1420 = vsel %vm1406, 0, %v1419
        %1421 = vst [vmem:[#allocation3 + $0x130] sm:$0x80] %v1420
        %v1422 = vld [vmem:[#allocation3 + $0x178] sm:$0x80]
        %v1423 = vsel %vm1406, 0, %v1422
        %1424 = vst [vmem:[#allocation3 + $0x178] sm:$0x80] %v1423
        %v1425 = vld [vmem:[#allocation3 + $0x1c0] sm:$0x80]
        %v1426 = vsel %vm1406, 0, %v1425
        %1427 = vst [vmem:[#allocation3 + $0x1c0] sm:$0x80] %v1426
        %v1428 = vld [vmem:[#allocation3 + $0x208] sm:$0x80]
        %v1429 = vsel %vm1406, 0, %v1428
        %1430 = vst [vmem:[#allocation3 + $0x208] sm:$0x80] %v1429
        %v1431 = vld [vmem:[#allocation3 + $0x250] sm:$0x80]
        %v1432 = vsel %vm1406, 0, %v1431
        %1433 = vst [vmem:[#allocation3 + $0x250] sm:$0x80] %v1432
        %v1434 = vld [vmem:[#allocation3 + $0x298] sm:$0x80]
        %v1435 = vsel %vm1406, 0, %v1434
        %1436 = vst [vmem:[#allocation3 + $0x298] sm:$0x80] %v1435
        %v1437 = vld [vmem:[#allocation3 + $0x2e0] sm:$0x80]
        %v1438 = vsel %vm1406, 0, %v1437
        %1439 = vst [vmem:[#allocation3 + $0x2e0] sm:$0x80] %v1438
        %v1440 = vld [vmem:[#allocation3 + $0x328] sm:$0x80]
        %v1441 = vsel %vm1406, 0, %v1440
        %1442 = vst [vmem:[#allocation3 + $0x328] sm:$0x80] %v1441
        %v1443 = vld [vmem:[#allocation3 + $0x370] sm:$0x80]
        %v1444 = vsel %vm1406, 0, %v1443
        %1445 = vst [vmem:[#allocation3 + $0x370] sm:$0x80] %v1444
        %v1446 = vld [vmem:[#allocation3 + $0x3b8] sm:$0x80]
        %v1447 = vsel %vm1406, 0, %v1446
        %1448 = vst [vmem:[#allocation3 + $0x3b8] sm:$0x80] %v1447
        %v1449 = vld [vmem:[#allocation3 + $0x400] sm:$0x80]
        %v1450 = vsel %vm1406, 0, %v1449
        %1451 = vst [vmem:[#allocation3 + $0x400] sm:$0x80] %v1450
        %v1452 = vld [vmem:[#allocation3 + $0x448] sm:$0x80]
        %v1453 = vsel %vm1406, 0, %v1452
        %1454 = vst [vmem:[#allocation3 + $0x448] sm:$0x80] %v1453
        %v1455 = vld [vmem:[%s824] sm:$0xff]
        %v1456 = vld [vmem:[%s824 + $0x8] sm:$0xff]
        %v1457 = vld [vmem:[%s824 + $0x10] sm:$0xff]
        %v1458 = vld [vmem:[%s824 + $0x18] sm:$0xff]
        %v1459 = vld [vmem:[%s824 + $0x20] sm:$0xff]
        %v1460 = vld [vmem:[%s824 + $0x28] sm:$0xff]
        %v1461 = vld [vmem:[%s824 + $0x30] sm:$0xff]
        %v1462 = vld [vmem:[%s824 + $0x38] sm:$0xff]
        %v1463 = vld [vmem:[%s824 + $0x50] sm:$0xff]
        %v1464 = vld [vmem:[%s824 + $0x58] sm:$0xff]
        %v1465 = vld [vmem:[%s824 + $0x60] sm:$0xff]
        %v1466 = vld [vmem:[%s824 + $0x68] sm:$0xff]
        %v1467 = vld [vmem:[%s824 + $0x70] sm:$0xff]
        %v1468 = vld [vmem:[%s824 + $0x78] sm:$0xff]
        %v1469 = vld [vmem:[%s824 + $0x80] sm:$0xff]
        %v1470 = vld [vmem:[%s824 + $0x88] sm:$0xff]
        %v1472 = vshrl.u32 %v1455, 16
        %v1474 = vrot.slane %v1472, 7
        %v1475 = vshll.u32 %v1455, 16
        %v1477 = vor.u32 %v1474, %v1475
        %v1479 = vshrl.u32 %v1456, 16
        %v1481 = vrot.slane %v1479, 7
        %v1482 = vshll.u32 %v1456, 16
        %v1484 = vor.u32 %v1481, %v1482
        %v1486 = vshrl.u32 %v1457, 16
        %v1488 = vrot.slane %v1486, 7
        %v1489 = vshll.u32 %v1457, 16
        %v1491 = vor.u32 %v1488, %v1489
        %v1493 = vshrl.u32 %v1458, 16
        %v1495 = vrot.slane %v1493, 7
        %v1496 = vshll.u32 %v1458, 16
        %v1498 = vor.u32 %v1495, %v1496
        %v1500 = vshrl.u32 %v1459, 16
        %v1502 = vrot.slane %v1500, 7
        %v1503 = vshll.u32 %v1459, 16
        %v1505 = vor.u32 %v1502, %v1503
        %v1507 = vshrl.u32 %v1460, 16
        %v1509 = vrot.slane %v1507, 7
        %v1510 = vshll.u32 %v1460, 16
        %v1512 = vor.u32 %v1509, %v1510
        %v1514 = vshrl.u32 %v1461, 16
        %v1516 = vrot.slane %v1514, 7
        %v1517 = vshll.u32 %v1461, 16
        %v1519 = vor.u32 %v1516, %v1517
        %v1521 = vshrl.u32 %v1462, 16
        %v1523 = vrot.slane %v1521, 7
        %v1524 = vshll.u32 %v1462, 16
        %v1526 = vor.u32 %v1523, %v1524
        %v1528 = vshrl.u32 %v1463, 16
        %v1530 = vrot.slane %v1528, 7
        %v1531 = vshll.u32 %v1463, 16
        %v1533 = vor.u32 %v1530, %v1531
        %v1535 = vshrl.u32 %v1464, 16
        %v1537 = vrot.slane %v1535, 7
        %v1538 = vshll.u32 %v1464, 16
        %v1540 = vor.u32 %v1537, %v1538
        %v1542 = vshrl.u32 %v1465, 16
        %v1544 = vrot.slane %v1542, 7
        %v1545 = vshll.u32 %v1465, 16
        %v1547 = vor.u32 %v1544, %v1545
        %v1549 = vshrl.u32 %v1466, 16
        %v1551 = vrot.slane %v1549, 7
        %v1552 = vshll.u32 %v1466, 16
        %v1554 = vor.u32 %v1551, %v1552
        %v1556 = vshrl.u32 %v1467, 16
        %v1558 = vrot.slane %v1556, 7
        %v1559 = vshll.u32 %v1467, 16
        %v1561 = vor.u32 %v1558, %v1559
        %v1563 = vshrl.u32 %v1468, 16
        %v1565 = vrot.slane %v1563, 7
        %v1566 = vshll.u32 %v1468, 16
        %v1568 = vor.u32 %v1565, %v1566
        %v1570 = vshrl.u32 %v1469, 16
        %v1572 = vrot.slane %v1570, 7
        %v1573 = vshll.u32 %v1469, 16
        %v1575 = vor.u32 %v1572, %v1573
        %v1577 = vshrl.u32 %v1470, 16
        %v1579 = vrot.slane %v1577, 7
        %v1580 = vshll.u32 %v1470, 16
        %v1582 = vor.u32 %v1579, %v1580
        %v1599 = vld [vmem:[#allocation3 + $0x18] sm:$0xff]
        %v1600 = vsel %vm1078, %v1477, %v1599
        %1601 = vst [vmem:[#allocation3 + $0x18] sm:$0xff] %v1600
        %v1602 = vld [vmem:[#allocation3 + $0x60] sm:$0xff]
        %v1603 = vsel %vm1078, %v1484, %v1602
        %1604 = vst [vmem:[#allocation3 + $0x60] sm:$0xff] %v1603
        %v1605 = vld [vmem:[#allocation3 + $0xa8] sm:$0xff]
        %v1606 = vsel %vm1078, %v1491, %v1605
        %1607 = vst [vmem:[#allocation3 + $0xa8] sm:$0xff] %v1606
        %v1608 = vld [vmem:[#allocation3 + $0xf0] sm:$0xff]
        %v1609 = vsel %vm1078, %v1498, %v1608
        %1610 = vst [vmem:[#allocation3 + $0xf0] sm:$0xff] %v1609
        %v1611 = vld [vmem:[#allocation3 + $0x138] sm:$0xff]
        %v1612 = vsel %vm1078, %v1505, %v1611
        %1613 = vst [vmem:[#allocation3 + $0x138] sm:$0xff] %v1612
        %v1614 = vld [vmem:[#allocation3 + $0x180] sm:$0xff]
        %v1615 = vsel %vm1078, %v1512, %v1614
        %1616 = vst [vmem:[#allocation3 + $0x180] sm:$0xff] %v1615
        %v1617 = vld [vmem:[#allocation3 + $0x1c8] sm:$0xff]
        %v1618 = vsel %vm1078, %v1519, %v1617
        %1619 = vst [vmem:[#allocation3 + $0x1c8] sm:$0xff] %v1618
        %v1620 = vld [vmem:[#allocation3 + $0x210] sm:$0xff]
        %v1621 = vsel %vm1078, %v1526, %v1620
        %1622 = vst [vmem:[#allocation3 + $0x210] sm:$0xff] %v1621
        %v1623 = vld [vmem:[#allocation3 + $0x258] sm:$0xff]
        %v1624 = vsel %vm1078, %v1533, %v1623
        %1625 = vst [vmem:[#allocation3 + $0x258] sm:$0xff] %v1624
        %v1626 = vld [vmem:[#allocation3 + $0x2a0] sm:$0xff]
        %v1627 = vsel %vm1078, %v1540, %v1626
        %1628 = vst [vmem:[#allocation3 + $0x2a0] sm:$0xff] %v1627
        %v1629 = vld [vmem:[#allocation3 + $0x2e8] sm:$0xff]
        %v1630 = vsel %vm1078, %v1547, %v1629
        %1631 = vst [vmem:[#allocation3 + $0x2e8] sm:$0xff] %v1630
        %v1632 = vld [vmem:[#allocation3 + $0x330] sm:$0xff]
        %v1633 = vsel %vm1078, %v1554, %v1632
        %1634 = vst [vmem:[#allocation3 + $0x330] sm:$0xff] %v1633
        %v1635 = vld [vmem:[#allocation3 + $0x378] sm:$0xff]
        %v1636 = vsel %vm1078, %v1561, %v1635
        %1637 = vst [vmem:[#allocation3 + $0x378] sm:$0xff] %v1636
        %v1638 = vld [vmem:[#allocation3 + $0x3c0] sm:$0xff]
        %v1639 = vsel %vm1078, %v1568, %v1638
        %1640 = vst [vmem:[#allocation3 + $0x3c0] sm:$0xff] %v1639
        %v1641 = vld [vmem:[#allocation3 + $0x408] sm:$0xff]
        %v1642 = vsel %vm1078, %v1575, %v1641
        %1643 = vst [vmem:[#allocation3 + $0x408] sm:$0xff] %v1642
        %v1644 = vld [vmem:[#allocation3 + $0x450] sm:$0xff]
        %v1645 = vsel %vm1078, %v1582, %v1644
        %1646 = vst [vmem:[#allocation3 + $0x450] sm:$0xff] %v1645
        %v1647 = vld [vmem:[#allocation3 + $0x18] sm:$0x1]
        %v1648 = vsel %vm1129, 0, %v1647
        %1649 = vst [vmem:[#allocation3 + $0x18] sm:$0x1] %v1648
        %v1650 = vld [vmem:[#allocation3 + $0x60] sm:$0x1]
        %v1651 = vsel %vm1129, 0, %v1650
        %1652 = vst [vmem:[#allocation3 + $0x60] sm:$0x1] %v1651
        %v1653 = vld [vmem:[#allocation3 + $0xa8] sm:$0x1]
        %v1654 = vsel %vm1129, 0, %v1653
        %1655 = vst [vmem:[#allocation3 + $0xa8] sm:$0x1] %v1654
        %v1656 = vld [vmem:[#allocation3 + $0xf0] sm:$0x1]
        %v1657 = vsel %vm1129, 0, %v1656
        %1658 = vst [vmem:[#allocation3 + $0xf0] sm:$0x1] %v1657
        %v1659 = vld [vmem:[#allocation3 + $0x138] sm:$0x1]
        %v1660 = vsel %vm1129, 0, %v1659
        %1661 = vst [vmem:[#allocation3 + $0x138] sm:$0x1] %v1660
        %v1662 = vld [vmem:[#allocation3 + $0x180] sm:$0x1]
        %v1663 = vsel %vm1129, 0, %v1662
        %1664 = vst [vmem:[#allocation3 + $0x180] sm:$0x1] %v1663
        %v1665 = vld [vmem:[#allocation3 + $0x1c8] sm:$0x1]
        %v1666 = vsel %vm1129, 0, %v1665
        %1667 = vst [vmem:[#allocation3 + $0x1c8] sm:$0x1] %v1666
        %v1668 = vld [vmem:[#allocation3 + $0x210] sm:$0x1]
        %v1669 = vsel %vm1129, 0, %v1668
        %1670 = vst [vmem:[#allocation3 + $0x210] sm:$0x1] %v1669
        %v1671 = vld [vmem:[#allocation3 + $0x258] sm:$0x1]
        %v1672 = vsel %vm1129, 0, %v1671
        %1673 = vst [vmem:[#allocation3 + $0x258] sm:$0x1] %v1672
        %v1674 = vld [vmem:[#allocation3 + $0x2a0] sm:$0x1]
        %v1675 = vsel %vm1129, 0, %v1674
        %1676 = vst [vmem:[#allocation3 + $0x2a0] sm:$0x1] %v1675
        %v1677 = vld [vmem:[#allocation3 + $0x2e8] sm:$0x1]
        %v1678 = vsel %vm1129, 0, %v1677
        %1679 = vst [vmem:[#allocation3 + $0x2e8] sm:$0x1] %v1678
        %v1680 = vld [vmem:[#allocation3 + $0x330] sm:$0x1]
        %v1681 = vsel %vm1129, 0, %v1680
        %1682 = vst [vmem:[#allocation3 + $0x330] sm:$0x1] %v1681
        %v1683 = vld [vmem:[#allocation3 + $0x378] sm:$0x1]
        %v1684 = vsel %vm1129, 0, %v1683
        %1685 = vst [vmem:[#allocation3 + $0x378] sm:$0x1] %v1684
        %v1686 = vld [vmem:[#allocation3 + $0x3c0] sm:$0x1]
        %v1687 = vsel %vm1129, 0, %v1686
        %1688 = vst [vmem:[#allocation3 + $0x3c0] sm:$0x1] %v1687
        %v1689 = vld [vmem:[#allocation3 + $0x408] sm:$0x1]
        %v1690 = vsel %vm1129, 0, %v1689
        %1691 = vst [vmem:[#allocation3 + $0x408] sm:$0x1] %v1690
        %v1692 = vld [vmem:[#allocation3 + $0x450] sm:$0x1]
        %v1693 = vsel %vm1129, 0, %v1692
        %1694 = vst [vmem:[#allocation3 + $0x450] sm:$0x1] %v1693
        %v1695 = vld [vmem:[%s824] sm:$0xff]
        %v1696 = vld [vmem:[%s824 + $0x8] sm:$0xff]
        %v1697 = vld [vmem:[%s824 + $0x10] sm:$0xff]
        %v1698 = vld [vmem:[%s824 + $0x18] sm:$0xff]
        %v1699 = vld [vmem:[%s824 + $0x20] sm:$0xff]
        %v1700 = vld [vmem:[%s824 + $0x28] sm:$0xff]
        %v1701 = vld [vmem:[%s824 + $0x30] sm:$0xff]
        %v1702 = vld [vmem:[%s824 + $0x38] sm:$0xff]
        %v1703 = vld [vmem:[%s824 + $0x50] sm:$0xff]
        %v1704 = vld [vmem:[%s824 + $0x58] sm:$0xff]
        %v1705 = vld [vmem:[%s824 + $0x60] sm:$0xff]
        %v1706 = vld [vmem:[%s824 + $0x68] sm:$0xff]
        %v1707 = vld [vmem:[%s824 + $0x70] sm:$0xff]
        %v1708 = vld [vmem:[%s824 + $0x78] sm:$0xff]
        %v1709 = vld [vmem:[%s824 + $0x80] sm:$0xff]
        %v1710 = vld [vmem:[%s824 + $0x88] sm:$0xff]
        %1711 = vst [vmem:[#allocation3 + $0x20] sm:$0xff] %v1695
        %1712 = vst [vmem:[#allocation3 + $0x68] sm:$0xff] %v1696
        %1713 = vst [vmem:[#allocation3 + $0xb0] sm:$0xff] %v1697
        %1714 = vst [vmem:[#allocation3 + $0xf8] sm:$0xff] %v1698
        %1715 = vst [vmem:[#allocation3 + $0x140] sm:$0xff] %v1699
        %1716 = vst [vmem:[#allocation3 + $0x188] sm:$0xff] %v1700
        %1717 = vst [vmem:[#allocation3 + $0x1d0] sm:$0xff] %v1701
        %1718 = vst [vmem:[#allocation3 + $0x218] sm:$0xff] %v1702
        %1719 = vst [vmem:[#allocation3 + $0x260] sm:$0xff] %v1703
        %1720 = vst [vmem:[#allocation3 + $0x2a8] sm:$0xff] %v1704
        %1721 = vst [vmem:[#allocation3 + $0x2f0] sm:$0xff] %v1705
        %1722 = vst [vmem:[#allocation3 + $0x338] sm:$0xff] %v1706
        %1723 = vst [vmem:[#allocation3 + $0x380] sm:$0xff] %v1707
        %1724 = vst [vmem:[#allocation3 + $0x3c8] sm:$0xff] %v1708
        %1725 = vst [vmem:[#allocation3 + $0x410] sm:$0xff] %v1709
        %1726 = vst [vmem:[#allocation3 + $0x458] sm:$0xff] %v1710
        %v1727 = vld [vmem:[%s824] sm:$0xff]
        %v1728 = vld [vmem:[%s824 + $0x8] sm:$0xff]
        %v1729 = vld [vmem:[%s824 + $0x10] sm:$0xff]
        %v1730 = vld [vmem:[%s824 + $0x18] sm:$0xff]
        %v1731 = vld [vmem:[%s824 + $0x20] sm:$0xff]
        %v1732 = vld [vmem:[%s824 + $0x28] sm:$0xff]
        %v1733 = vld [vmem:[%s824 + $0x30] sm:$0xff]
        %v1734 = vld [vmem:[%s824 + $0x38] sm:$0xff]
        %v1735 = vld [vmem:[%s824 + $0x50] sm:$0xff]
        %v1736 = vld [vmem:[%s824 + $0x58] sm:$0xff]
        %v1737 = vld [vmem:[%s824 + $0x60] sm:$0xff]
        %v1738 = vld [vmem:[%s824 + $0x68] sm:$0xff]
        %v1739 = vld [vmem:[%s824 + $0x70] sm:$0xff]
        %v1740 = vld [vmem:[%s824 + $0x78] sm:$0xff]
        %v1741 = vld [vmem:[%s824 + $0x80] sm:$0xff]
        %v1742 = vld [vmem:[%s824 + $0x88] sm:$0xff]
        %v1744 = vshrl.u32 %v1727, 16
        %v1746 = vshll.u32 %v1727, 16
        %v1748 = vrot.slane %v1746, 1
        %v1749 = vor.u32 %v1744, %v1748
        %v1751 = vshrl.u32 %v1728, 16
        %v1753 = vshll.u32 %v1728, 16
        %v1755 = vrot.slane %v1753, 1
        %v1756 = vor.u32 %v1751, %v1755
        %v1758 = vshrl.u32 %v1729, 16
        %v1760 = vshll.u32 %v1729, 16
        %v1762 = vrot.slane %v1760, 1
        %v1763 = vor.u32 %v1758, %v1762
        %v1765 = vshrl.u32 %v1730, 16
        %v1767 = vshll.u32 %v1730, 16
        %v1769 = vrot.slane %v1767, 1
        %v1770 = vor.u32 %v1765, %v1769
        %v1772 = vshrl.u32 %v1731, 16
        %v1774 = vshll.u32 %v1731, 16
        %v1776 = vrot.slane %v1774, 1
        %v1777 = vor.u32 %v1772, %v1776
        %v1779 = vshrl.u32 %v1732, 16
        %v1781 = vshll.u32 %v1732, 16
        %v1783 = vrot.slane %v1781, 1
        %v1784 = vor.u32 %v1779, %v1783
        %v1786 = vshrl.u32 %v1733, 16
        %v1788 = vshll.u32 %v1733, 16
        %v1790 = vrot.slane %v1788, 1
        %v1791 = vor.u32 %v1786, %v1790
        %v1793 = vshrl.u32 %v1734, 16
        %v1795 = vshll.u32 %v1734, 16
        %v1797 = vrot.slane %v1795, 1
        %v1798 = vor.u32 %v1793, %v1797
        %v1800 = vshrl.u32 %v1735, 16
        %v1802 = vshll.u32 %v1735, 16
        %v1804 = vrot.slane %v1802, 1
        %v1805 = vor.u32 %v1800, %v1804
        %v1807 = vshrl.u32 %v1736, 16
        %v1809 = vshll.u32 %v1736, 16
        %v1811 = vrot.slane %v1809, 1
        %v1812 = vor.u32 %v1807, %v1811
        %v1814 = vshrl.u32 %v1737, 16
        %v1816 = vshll.u32 %v1737, 16
        %v1818 = vrot.slane %v1816, 1
        %v1819 = vor.u32 %v1814, %v1818
        %v1821 = vshrl.u32 %v1738, 16
        %v1823 = vshll.u32 %v1738, 16
        %v1825 = vrot.slane %v1823, 1
        %v1826 = vor.u32 %v1821, %v1825
        %v1828 = vshrl.u32 %v1739, 16
        %v1830 = vshll.u32 %v1739, 16
        %v1832 = vrot.slane %v1830, 1
        %v1833 = vor.u32 %v1828, %v1832
        %v1835 = vshrl.u32 %v1740, 16
        %v1837 = vshll.u32 %v1740, 16
        %v1839 = vrot.slane %v1837, 1
        %v1840 = vor.u32 %v1835, %v1839
        %v1842 = vshrl.u32 %v1741, 16
        %v1844 = vshll.u32 %v1741, 16
        %v1846 = vrot.slane %v1844, 1
        %v1847 = vor.u32 %v1842, %v1846
        %v1849 = vshrl.u32 %v1742, 16
        %v1851 = vshll.u32 %v1742, 16
        %v1853 = vrot.slane %v1851, 1
        %v1854 = vor.u32 %v1849, %v1853
        %v1871 = vld [vmem:[#allocation3 + $0x28] sm:$0xff]
        %v1872 = vsel %vm1355, %v1749, %v1871
        %1873 = vst [vmem:[#allocation3 + $0x28] sm:$0xff] %v1872
        %v1874 = vld [vmem:[#allocation3 + $0x70] sm:$0xff]
        %v1875 = vsel %vm1355, %v1756, %v1874
        %1876 = vst [vmem:[#allocation3 + $0x70] sm:$0xff] %v1875
        %v1877 = vld [vmem:[#allocation3 + $0xb8] sm:$0xff]
        %v1878 = vsel %vm1355, %v1763, %v1877
        %1879 = vst [vmem:[#allocation3 + $0xb8] sm:$0xff] %v1878
        %v1880 = vld [vmem:[#allocation3 + $0x100] sm:$0xff]
        %v1881 = vsel %vm1355, %v1770, %v1880
        %1882 = vst [vmem:[#allocation3 + $0x100] sm:$0xff] %v1881
        %v1883 = vld [vmem:[#allocation3 + $0x148] sm:$0xff]
        %v1884 = vsel %vm1355, %v1777, %v1883
        %1885 = vst [vmem:[#allocation3 + $0x148] sm:$0xff] %v1884
        %v1886 = vld [vmem:[#allocation3 + $0x190] sm:$0xff]
        %v1887 = vsel %vm1355, %v1784, %v1886
        %1888 = vst [vmem:[#allocation3 + $0x190] sm:$0xff] %v1887
        %v1889 = vld [vmem:[#allocation3 + $0x1d8] sm:$0xff]
        %v1890 = vsel %vm1355, %v1791, %v1889
        %1891 = vst [vmem:[#allocation3 + $0x1d8] sm:$0xff] %v1890
        %v1892 = vld [vmem:[#allocation3 + $0x220] sm:$0xff]
        %v1893 = vsel %vm1355, %v1798, %v1892
        %1894 = vst [vmem:[#allocation3 + $0x220] sm:$0xff] %v1893
        %v1895 = vld [vmem:[#allocation3 + $0x268] sm:$0xff]
        %v1896 = vsel %vm1355, %v1805, %v1895
        %1897 = vst [vmem:[#allocation3 + $0x268] sm:$0xff] %v1896
        %v1898 = vld [vmem:[#allocation3 + $0x2b0] sm:$0xff]
        %v1899 = vsel %vm1355, %v1812, %v1898
        %1900 = vst [vmem:[#allocation3 + $0x2b0] sm:$0xff] %v1899
        %v1901 = vld [vmem:[#allocation3 + $0x2f8] sm:$0xff]
        %v1902 = vsel %vm1355, %v1819, %v1901
        %1903 = vst [vmem:[#allocation3 + $0x2f8] sm:$0xff] %v1902
        %v1904 = vld [vmem:[#allocation3 + $0x340] sm:$0xff]
        %v1905 = vsel %vm1355, %v1826, %v1904
        %1906 = vst [vmem:[#allocation3 + $0x340] sm:$0xff] %v1905
        %v1907 = vld [vmem:[#allocation3 + $0x388] sm:$0xff]
        %v1908 = vsel %vm1355, %v1833, %v1907
        %1909 = vst [vmem:[#allocation3 + $0x388] sm:$0xff] %v1908
        %v1910 = vld [vmem:[#allocation3 + $0x3d0] sm:$0xff]
        %v1911 = vsel %vm1355, %v1840, %v1910
        %1912 = vst [vmem:[#allocation3 + $0x3d0] sm:$0xff] %v1911
        %v1913 = vld [vmem:[#allocation3 + $0x418] sm:$0xff]
        %v1914 = vsel %vm1355, %v1847, %v1913
        %1915 = vst [vmem:[#allocation3 + $0x418] sm:$0xff] %v1914
        %v1916 = vld [vmem:[#allocation3 + $0x460] sm:$0xff]
        %v1917 = vsel %vm1355, %v1854, %v1916
        %1918 = vst [vmem:[#allocation3 + $0x460] sm:$0xff] %v1917
        %v1919 = vld [vmem:[#allocation3 + $0x28] sm:$0x80]
        %v1920 = vsel %vm1406, 0, %v1919
        %1921 = vst [vmem:[#allocation3 + $0x28] sm:$0x80] %v1920
        %v1922 = vld [vmem:[#allocation3 + $0x70] sm:$0x80]
        %v1923 = vsel %vm1406, 0, %v1922
        %1924 = vst [vmem:[#allocation3 + $0x70] sm:$0x80] %v1923
        %v1925 = vld [vmem:[#allocation3 + $0xb8] sm:$0x80]
        %v1926 = vsel %vm1406, 0, %v1925
        %1927 = vst [vmem:[#allocation3 + $0xb8] sm:$0x80] %v1926
        %v1928 = vld [vmem:[#allocation3 + $0x100] sm:$0x80]
        %v1929 = vsel %vm1406, 0, %v1928
        %1930 = vst [vmem:[#allocation3 + $0x100] sm:$0x80] %v1929
        %v1931 = vld [vmem:[#allocation3 + $0x148] sm:$0x80]
        %v1932 = vsel %vm1406, 0, %v1931
        %1933 = vst [vmem:[#allocation3 + $0x148] sm:$0x80] %v1932
        %v1934 = vld [vmem:[#allocation3 + $0x190] sm:$0x80]
        %v1935 = vsel %vm1406, 0, %v1934
        %1936 = vst [vmem:[#allocation3 + $0x190] sm:$0x80] %v1935
        %v1937 = vld [vmem:[#allocation3 + $0x1d8] sm:$0x80]
        %v1938 = vsel %vm1406, 0, %v1937
        %1939 = vst [vmem:[#allocation3 + $0x1d8] sm:$0x80] %v1938
        %v1940 = vld [vmem:[#allocation3 + $0x220] sm:$0x80]
        %v1941 = vsel %vm1406, 0, %v1940
        %1942 = vst [vmem:[#allocation3 + $0x220] sm:$0x80] %v1941
        %v1943 = vld [vmem:[#allocation3 + $0x268] sm:$0x80]
        %v1944 = vsel %vm1406, 0, %v1943
        %1945 = vst [vmem:[#allocation3 + $0x268] sm:$0x80] %v1944
        %v1946 = vld [vmem:[#allocation3 + $0x2b0] sm:$0x80]
        %v1947 = vsel %vm1406, 0, %v1946
        %1948 = vst [vmem:[#allocation3 + $0x2b0] sm:$0x80] %v1947
        %v1949 = vld [vmem:[#allocation3 + $0x2f8] sm:$0x80]
        %v1950 = vsel %vm1406, 0, %v1949
        %1951 = vst [vmem:[#allocation3 + $0x2f8] sm:$0x80] %v1950
        %v1952 = vld [vmem:[#allocation3 + $0x340] sm:$0x80]
        %v1953 = vsel %vm1406, 0, %v1952
        %1954 = vst [vmem:[#allocation3 + $0x340] sm:$0x80] %v1953
        %v1955 = vld [vmem:[#allocation3 + $0x388] sm:$0x80]
        %v1956 = vsel %vm1406, 0, %v1955
        %1957 = vst [vmem:[#allocation3 + $0x388] sm:$0x80] %v1956
        %v1958 = vld [vmem:[#allocation3 + $0x3d0] sm:$0x80]
        %v1959 = vsel %vm1406, 0, %v1958
        %1960 = vst [vmem:[#allocation3 + $0x3d0] sm:$0x80] %v1959
        %v1961 = vld [vmem:[#allocation3 + $0x418] sm:$0x80]
        %v1962 = vsel %vm1406, 0, %v1961
        %1963 = vst [vmem:[#allocation3 + $0x418] sm:$0x80] %v1962
        %v1964 = vld [vmem:[#allocation3 + $0x460] sm:$0x80]
        %v1965 = vsel %vm1406, 0, %v1964
        %1966 = vst [vmem:[#allocation3 + $0x460] sm:$0x80] %v1965
        %s1967 = scalar_lea.vmem [#allocation2], 16
        %v1968 = vld [vmem:[%s1967] sm:$0xff]
        %v1969 = vld [vmem:[%s1967 + $0x8] sm:$0xff]
        %v1970 = vld [vmem:[%s1967 + $0x10] sm:$0xff]
        %v1971 = vld [vmem:[%s1967 + $0x18] sm:$0xff]
        %v1972 = vld [vmem:[%s1967 + $0x20] sm:$0xff]
        %v1973 = vld [vmem:[%s1967 + $0x28] sm:$0xff]
        %v1974 = vld [vmem:[%s1967 + $0x30] sm:$0xff]
        %v1975 = vld [vmem:[%s1967 + $0x38] sm:$0xff]
        %v1976 = vld [vmem:[%s1967 + $0x50] sm:$0xff]
        %v1977 = vld [vmem:[%s1967 + $0x58] sm:$0xff]
        %v1978 = vld [vmem:[%s1967 + $0x60] sm:$0xff]
        %v1979 = vld [vmem:[%s1967 + $0x68] sm:$0xff]
        %v1980 = vld [vmem:[%s1967 + $0x70] sm:$0xff]
        %v1981 = vld [vmem:[%s1967 + $0x78] sm:$0xff]
        %v1982 = vld [vmem:[%s1967 + $0x80] sm:$0xff]
        %v1983 = vld [vmem:[%s1967 + $0x88] sm:$0xff]
        %v1985 = vshrl.u32 %v1968, 16
        %v1987 = vrot.slane %v1985, 7
        %v1988 = vshll.u32 %v1968, 16
        %v1990 = vor.u32 %v1987, %v1988
        %v1992 = vshrl.u32 %v1969, 16
        %v1994 = vrot.slane %v1992, 7
        %v1995 = vshll.u32 %v1969, 16
        %v1997 = vor.u32 %v1994, %v1995
        %v1999 = vshrl.u32 %v1970, 16
        %v2001 = vrot.slane %v1999, 7
        %v2002 = vshll.u32 %v1970, 16
        %v2004 = vor.u32 %v2001, %v2002
        %v2006 = vshrl.u32 %v1971, 16
        %v2008 = vrot.slane %v2006, 7
        %v2009 = vshll.u32 %v1971, 16
        %v2011 = vor.u32 %v2008, %v2009
        %v2013 = vshrl.u32 %v1972, 16
        %v2015 = vrot.slane %v2013, 7
        %v2016 = vshll.u32 %v1972, 16
        %v2018 = vor.u32 %v2015, %v2016
        %v2020 = vshrl.u32 %v1973, 16
        %v2022 = vrot.slane %v2020, 7
        %v2023 = vshll.u32 %v1973, 16
        %v2025 = vor.u32 %v2022, %v2023
        %v2027 = vshrl.u32 %v1974, 16
        %v2029 = vrot.slane %v2027, 7
        %v2030 = vshll.u32 %v1974, 16
        %v2032 = vor.u32 %v2029, %v2030
        %v2034 = vshrl.u32 %v1975, 16
        %v2036 = vrot.slane %v2034, 7
        %v2037 = vshll.u32 %v1975, 16
        %v2039 = vor.u32 %v2036, %v2037
        %v2041 = vshrl.u32 %v1976, 16
        %v2043 = vrot.slane %v2041, 7
        %v2044 = vshll.u32 %v1976, 16
        %v2046 = vor.u32 %v2043, %v2044
        %v2048 = vshrl.u32 %v1977, 16
        %v2050 = vrot.slane %v2048, 7
        %v2051 = vshll.u32 %v1977, 16
        %v2053 = vor.u32 %v2050, %v2051
        %v2055 = vshrl.u32 %v1978, 16
        %v2057 = vrot.slane %v2055, 7
        %v2058 = vshll.u32 %v1978, 16
        %v2060 = vor.u32 %v2057, %v2058
        %v2062 = vshrl.u32 %v1979, 16
        %v2064 = vrot.slane %v2062, 7
        %v2065 = vshll.u32 %v1979, 16
        %v2067 = vor.u32 %v2064, %v2065
        %v2069 = vshrl.u32 %v1980, 16
        %v2071 = vrot.slane %v2069, 7
        %v2072 = vshll.u32 %v1980, 16
        %v2074 = vor.u32 %v2071, %v2072
        %v2076 = vshrl.u32 %v1981, 16
        %v2078 = vrot.slane %v2076, 7
        %v2079 = vshll.u32 %v1981, 16
        %v2081 = vor.u32 %v2078, %v2079
        %v2083 = vshrl.u32 %v1982, 16
        %v2085 = vrot.slane %v2083, 7
        %v2086 = vshll.u32 %v1982, 16
        %v2088 = vor.u32 %v2085, %v2086
        %v2090 = vshrl.u32 %v1983, 16
        %v2092 = vrot.slane %v2090, 7
        %v2093 = vshll.u32 %v1983, 16
        %v2095 = vor.u32 %v2092, %v2093
        %v2112 = vld [vmem:[#allocation3 + $0x30] sm:$0xff]
        %v2113 = vsel %vm1078, %v1990, %v2112
        %2114 = vst [vmem:[#allocation3 + $0x30] sm:$0xff] %v2113
        %v2115 = vld [vmem:[#allocation3 + $0x78] sm:$0xff]
        %v2116 = vsel %vm1078, %v1997, %v2115
        %2117 = vst [vmem:[#allocation3 + $0x78] sm:$0xff] %v2116
        %v2118 = vld [vmem:[#allocation3 + $0xc0] sm:$0xff]
        %v2119 = vsel %vm1078, %v2004, %v2118
        %2120 = vst [vmem:[#allocation3 + $0xc0] sm:$0xff] %v2119
        %v2121 = vld [vmem:[#allocation3 + $0x108] sm:$0xff]
        %v2122 = vsel %vm1078, %v2011, %v2121
        %2123 = vst [vmem:[#allocation3 + $0x108] sm:$0xff] %v2122
        %v2124 = vld [vmem:[#allocation3 + $0x150] sm:$0xff]
        %v2125 = vsel %vm1078, %v2018, %v2124
        %2126 = vst [vmem:[#allocation3 + $0x150] sm:$0xff] %v2125
        %v2127 = vld [vmem:[#allocation3 + $0x198] sm:$0xff]
        %v2128 = vsel %vm1078, %v2025, %v2127
        %2129 = vst [vmem:[#allocation3 + $0x198] sm:$0xff] %v2128
        %v2130 = vld [vmem:[#allocation3 + $0x1e0] sm:$0xff]
        %v2131 = vsel %vm1078, %v2032, %v2130
        %2132 = vst [vmem:[#allocation3 + $0x1e0] sm:$0xff] %v2131
        %v2133 = vld [vmem:[#allocation3 + $0x228] sm:$0xff]
        %v2134 = vsel %vm1078, %v2039, %v2133
        %2135 = vst [vmem:[#allocation3 + $0x228] sm:$0xff] %v2134
        %v2136 = vld [vmem:[#allocation3 + $0x270] sm:$0xff]
        %v2137 = vsel %vm1078, %v2046, %v2136
        %2138 = vst [vmem:[#allocation3 + $0x270] sm:$0xff] %v2137
        %v2139 = vld [vmem:[#allocation3 + $0x2b8] sm:$0xff]
        %v2140 = vsel %vm1078, %v2053, %v2139
        %2141 = vst [vmem:[#allocation3 + $0x2b8] sm:$0xff] %v2140
        %v2142 = vld [vmem:[#allocation3 + $0x300] sm:$0xff]
        %v2143 = vsel %vm1078, %v2060, %v2142
        %2144 = vst [vmem:[#allocation3 + $0x300] sm:$0xff] %v2143
        %v2145 = vld [vmem:[#allocation3 + $0x348] sm:$0xff]
        %v2146 = vsel %vm1078, %v2067, %v2145
        %2147 = vst [vmem:[#allocation3 + $0x348] sm:$0xff] %v2146
        %v2148 = vld [vmem:[#allocation3 + $0x390] sm:$0xff]
        %v2149 = vsel %vm1078, %v2074, %v2148
        %2150 = vst [vmem:[#allocation3 + $0x390] sm:$0xff] %v2149
        %v2151 = vld [vmem:[#allocation3 + $0x3d8] sm:$0xff]
        %v2152 = vsel %vm1078, %v2081, %v2151
        %2153 = vst [vmem:[#allocation3 + $0x3d8] sm:$0xff] %v2152
        %v2154 = vld [vmem:[#allocation3 + $0x420] sm:$0xff]
        %v2155 = vsel %vm1078, %v2088, %v2154
        %2156 = vst [vmem:[#allocation3 + $0x420] sm:$0xff] %v2155
        %v2157 = vld [vmem:[#allocation3 + $0x468] sm:$0xff]
        %v2158 = vsel %vm1078, %v2095, %v2157
        %2159 = vst [vmem:[#allocation3 + $0x468] sm:$0xff] %v2158
        %v2160 = vld [vmem:[#allocation3 + $0x30] sm:$0x1]
        %v2161 = vsel %vm1129, 0, %v2160
        %2162 = vst [vmem:[#allocation3 + $0x30] sm:$0x1] %v2161
        %v2163 = vld [vmem:[#allocation3 + $0x78] sm:$0x1]
        %v2164 = vsel %vm1129, 0, %v2163
        %2165 = vst [vmem:[#allocation3 + $0x78] sm:$0x1] %v2164
        %v2166 = vld [vmem:[#allocation3 + $0xc0] sm:$0x1]
        %v2167 = vsel %vm1129, 0, %v2166
        %2168 = vst [vmem:[#allocation3 + $0xc0] sm:$0x1] %v2167
        %v2169 = vld [vmem:[#allocation3 + $0x108] sm:$0x1]
        %v2170 = vsel %vm1129, 0, %v2169
        %2171 = vst [vmem:[#allocation3 + $0x108] sm:$0x1] %v2170
        %v2172 = vld [vmem:[#allocation3 + $0x150] sm:$0x1]
        %v2173 = vsel %vm1129, 0, %v2172
        %2174 = vst [vmem:[#allocation3 + $0x150] sm:$0x1] %v2173
        %v2175 = vld [vmem:[#allocation3 + $0x198] sm:$0x1]
        %v2176 = vsel %vm1129, 0, %v2175
        %2177 = vst [vmem:[#allocation3 + $0x198] sm:$0x1] %v2176
        %v2178 = vld [vmem:[#allocation3 + $0x1e0] sm:$0x1]
        %v2179 = vsel %vm1129, 0, %v2178
        %2180 = vst [vmem:[#allocation3 + $0x1e0] sm:$0x1] %v2179
        %v2181 = vld [vmem:[#allocation3 + $0x228] sm:$0x1]
        %v2182 = vsel %vm1129, 0, %v2181
        %2183 = vst [vmem:[#allocation3 + $0x228] sm:$0x1] %v2182
        %v2184 = vld [vmem:[#allocation3 + $0x270] sm:$0x1]
        %v2185 = vsel %vm1129, 0, %v2184
        %2186 = vst [vmem:[#allocation3 + $0x270] sm:$0x1] %v2185
        %v2187 = vld [vmem:[#allocation3 + $0x2b8] sm:$0x1]
        %v2188 = vsel %vm1129, 0, %v2187
        %2189 = vst [vmem:[#allocation3 + $0x2b8] sm:$0x1] %v2188
        %v2190 = vld [vmem:[#allocation3 + $0x300] sm:$0x1]
        %v2191 = vsel %vm1129, 0, %v2190
        %2192 = vst [vmem:[#allocation3 + $0x300] sm:$0x1] %v2191
        %v2193 = vld [vmem:[#allocation3 + $0x348] sm:$0x1]
        %v2194 = vsel %vm1129, 0, %v2193
        %2195 = vst [vmem:[#allocation3 + $0x348] sm:$0x1] %v2194
        %v2196 = vld [vmem:[#allocation3 + $0x390] sm:$0x1]
        %v2197 = vsel %vm1129, 0, %v2196
        %2198 = vst [vmem:[#allocation3 + $0x390] sm:$0x1] %v2197
        %v2199 = vld [vmem:[#allocation3 + $0x3d8] sm:$0x1]
        %v2200 = vsel %vm1129, 0, %v2199
        %2201 = vst [vmem:[#allocation3 + $0x3d8] sm:$0x1] %v2200
        %v2202 = vld [vmem:[#allocation3 + $0x420] sm:$0x1]
        %v2203 = vsel %vm1129, 0, %v2202
        %2204 = vst [vmem:[#allocation3 + $0x420] sm:$0x1] %v2203
        %v2205 = vld [vmem:[#allocation3 + $0x468] sm:$0x1]
        %v2206 = vsel %vm1129, 0, %v2205
        %2207 = vst [vmem:[#allocation3 + $0x468] sm:$0x1] %v2206
        %v2208 = vld [vmem:[%s1967] sm:$0xff]
        %v2209 = vld [vmem:[%s1967 + $0x8] sm:$0xff]
        %v2210 = vld [vmem:[%s1967 + $0x10] sm:$0xff]
        %v2211 = vld [vmem:[%s1967 + $0x18] sm:$0xff]
        %v2212 = vld [vmem:[%s1967 + $0x20] sm:$0xff]
        %v2213 = vld [vmem:[%s1967 + $0x28] sm:$0xff]
        %v2214 = vld [vmem:[%s1967 + $0x30] sm:$0xff]
        %v2215 = vld [vmem:[%s1967 + $0x38] sm:$0xff]
        %v2216 = vld [vmem:[%s1967 + $0x50] sm:$0xff]
        %v2217 = vld [vmem:[%s1967 + $0x58] sm:$0xff]
        %v2218 = vld [vmem:[%s1967 + $0x60] sm:$0xff]
        %v2219 = vld [vmem:[%s1967 + $0x68] sm:$0xff]
        %v2220 = vld [vmem:[%s1967 + $0x70] sm:$0xff]
        %v2221 = vld [vmem:[%s1967 + $0x78] sm:$0xff]
        %v2222 = vld [vmem:[%s1967 + $0x80] sm:$0xff]
        %v2223 = vld [vmem:[%s1967 + $0x88] sm:$0xff]
        %2224 = vst [vmem:[#allocation3 + $0x38] sm:$0xff] %v2208
        %2225 = vst [vmem:[#allocation3 + $0x80] sm:$0xff] %v2209
        %2226 = vst [vmem:[#allocation3 + $0xc8] sm:$0xff] %v2210
        %2227 = vst [vmem:[#allocation3 + $0x110] sm:$0xff] %v2211
        %2228 = vst [vmem:[#allocation3 + $0x158] sm:$0xff] %v2212
        %2229 = vst [vmem:[#allocation3 + $0x1a0] sm:$0xff] %v2213
        %2230 = vst [vmem:[#allocation3 + $0x1e8] sm:$0xff] %v2214
        %2231 = vst [vmem:[#allocation3 + $0x230] sm:$0xff] %v2215
        %2232 = vst [vmem:[#allocation3 + $0x278] sm:$0xff] %v2216
        %2233 = vst [vmem:[#allocation3 + $0x2c0] sm:$0xff] %v2217
        %2234 = vst [vmem:[#allocation3 + $0x308] sm:$0xff] %v2218
        %2235 = vst [vmem:[#allocation3 + $0x350] sm:$0xff] %v2219
        %2236 = vst [vmem:[#allocation3 + $0x398] sm:$0xff] %v2220
        %2237 = vst [vmem:[#allocation3 + $0x3e0] sm:$0xff] %v2221
        %2238 = vst [vmem:[#allocation3 + $0x428] sm:$0xff] %v2222
        %2239 = vst [vmem:[#allocation3 + $0x470] sm:$0xff] %v2223
        %v2240 = vld [vmem:[%s1967] sm:$0xff]
        %v2241 = vld [vmem:[%s1967 + $0x8] sm:$0xff]
        %v2242 = vld [vmem:[%s1967 + $0x10] sm:$0xff]
        %v2243 = vld [vmem:[%s1967 + $0x18] sm:$0xff]
        %v2244 = vld [vmem:[%s1967 + $0x20] sm:$0xff]
        %v2245 = vld [vmem:[%s1967 + $0x28] sm:$0xff]
        %v2246 = vld [vmem:[%s1967 + $0x30] sm:$0xff]
        %v2247 = vld [vmem:[%s1967 + $0x38] sm:$0xff]
        %v2248 = vld [vmem:[%s1967 + $0x50] sm:$0xff]
        %v2249 = vld [vmem:[%s1967 + $0x58] sm:$0xff]
        %v2250 = vld [vmem:[%s1967 + $0x60] sm:$0xff]
        %v2251 = vld [vmem:[%s1967 + $0x68] sm:$0xff]
        %v2252 = vld [vmem:[%s1967 + $0x70] sm:$0xff]
        %v2253 = vld [vmem:[%s1967 + $0x78] sm:$0xff]
        %v2254 = vld [vmem:[%s1967 + $0x80] sm:$0xff]
        %v2255 = vld [vmem:[%s1967 + $0x88] sm:$0xff]
        %v2257 = vshrl.u32 %v2240, 16
        %v2259 = vshll.u32 %v2240, 16
        %v2261 = vrot.slane %v2259, 1
        %v2262 = vor.u32 %v2257, %v2261
        %v2264 = vshrl.u32 %v2241, 16
        %v2266 = vshll.u32 %v2241, 16
        %v2268 = vrot.slane %v2266, 1
        %v2269 = vor.u32 %v2264, %v2268
        %v2271 = vshrl.u32 %v2242, 16
        %v2273 = vshll.u32 %v2242, 16
        %v2275 = vrot.slane %v2273, 1
        %v2276 = vor.u32 %v2271, %v2275
        %v2278 = vshrl.u32 %v2243, 16
        %v2280 = vshll.u32 %v2243, 16
        %v2282 = vrot.slane %v2280, 1
        %v2283 = vor.u32 %v2278, %v2282
        %v2285 = vshrl.u32 %v2244, 16
        %v2287 = vshll.u32 %v2244, 16
        %v2289 = vrot.slane %v2287, 1
        %v2290 = vor.u32 %v2285, %v2289
        %v2292 = vshrl.u32 %v2245, 16
        %v2294 = vshll.u32 %v2245, 16
        %v2296 = vrot.slane %v2294, 1
        %v2297 = vor.u32 %v2292, %v2296
        %v2299 = vshrl.u32 %v2246, 16
        %v2301 = vshll.u32 %v2246, 16
        %v2303 = vrot.slane %v2301, 1
        %v2304 = vor.u32 %v2299, %v2303
        %v2306 = vshrl.u32 %v2247, 16
        %v2308 = vshll.u32 %v2247, 16
        %v2310 = vrot.slane %v2308, 1
        %v2311 = vor.u32 %v2306, %v2310
        %v2313 = vshrl.u32 %v2248, 16
        %v2315 = vshll.u32 %v2248, 16
        %v2317 = vrot.slane %v2315, 1
        %v2318 = vor.u32 %v2313, %v2317
        %v2320 = vshrl.u32 %v2249, 16
        %v2322 = vshll.u32 %v2249, 16
        %v2324 = vrot.slane %v2322, 1
        %v2325 = vor.u32 %v2320, %v2324
        %v2327 = vshrl.u32 %v2250, 16
        %v2329 = vshll.u32 %v2250, 16
        %v2331 = vrot.slane %v2329, 1
        %v2332 = vor.u32 %v2327, %v2331
        %v2334 = vshrl.u32 %v2251, 16
        %v2336 = vshll.u32 %v2251, 16
        %v2338 = vrot.slane %v2336, 1
        %v2339 = vor.u32 %v2334, %v2338
        %v2341 = vshrl.u32 %v2252, 16
        %v2343 = vshll.u32 %v2252, 16
        %v2345 = vrot.slane %v2343, 1
        %v2346 = vor.u32 %v2341, %v2345
        %v2348 = vshrl.u32 %v2253, 16
        %v2350 = vshll.u32 %v2253, 16
        %v2352 = vrot.slane %v2350, 1
        %v2353 = vor.u32 %v2348, %v2352
        %v2355 = vshrl.u32 %v2254, 16
        %v2357 = vshll.u32 %v2254, 16
        %v2359 = vrot.slane %v2357, 1
        %v2360 = vor.u32 %v2355, %v2359
        %v2362 = vshrl.u32 %v2255, 16
        %v2364 = vshll.u32 %v2255, 16
        %v2366 = vrot.slane %v2364, 1
        %v2367 = vor.u32 %v2362, %v2366
        %v2384 = vld [vmem:[#allocation3 + $0x40] sm:$0xff]
        %v2385 = vsel %vm1355, %v2262, %v2384
        %2386 = vst [vmem:[#allocation3 + $0x40] sm:$0xff] %v2385
        %v2387 = vld [vmem:[#allocation3 + $0x88] sm:$0xff]
        %v2388 = vsel %vm1355, %v2269, %v2387
        %2389 = vst [vmem:[#allocation3 + $0x88] sm:$0xff] %v2388
        %v2390 = vld [vmem:[#allocation3 + $0xd0] sm:$0xff]
        %v2391 = vsel %vm1355, %v2276, %v2390
        %2392 = vst [vmem:[#allocation3 + $0xd0] sm:$0xff] %v2391
        %v2393 = vld [vmem:[#allocation3 + $0x118] sm:$0xff]
        %v2394 = vsel %vm1355, %v2283, %v2393
        %2395 = vst [vmem:[#allocation3 + $0x118] sm:$0xff] %v2394
        %v2396 = vld [vmem:[#allocation3 + $0x160] sm:$0xff]
        %v2397 = vsel %vm1355, %v2290, %v2396
        %2398 = vst [vmem:[#allocation3 + $0x160] sm:$0xff] %v2397
        %v2399 = vld [vmem:[#allocation3 + $0x1a8] sm:$0xff]
        %v2400 = vsel %vm1355, %v2297, %v2399
        %2401 = vst [vmem:[#allocation3 + $0x1a8] sm:$0xff] %v2400
        %v2402 = vld [vmem:[#allocation3 + $0x1f0] sm:$0xff]
        %v2403 = vsel %vm1355, %v2304, %v2402
        %2404 = vst [vmem:[#allocation3 + $0x1f0] sm:$0xff] %v2403
        %v2405 = vld [vmem:[#allocation3 + $0x238] sm:$0xff]
        %v2406 = vsel %vm1355, %v2311, %v2405
        %2407 = vst [vmem:[#allocation3 + $0x238] sm:$0xff] %v2406
        %v2408 = vld [vmem:[#allocation3 + $0x280] sm:$0xff]
        %v2409 = vsel %vm1355, %v2318, %v2408
        %2410 = vst [vmem:[#allocation3 + $0x280] sm:$0xff] %v2409
        %v2411 = vld [vmem:[#allocation3 + $0x2c8] sm:$0xff]
        %v2412 = vsel %vm1355, %v2325, %v2411
        %2413 = vst [vmem:[#allocation3 + $0x2c8] sm:$0xff] %v2412
        %v2414 = vld [vmem:[#allocation3 + $0x310] sm:$0xff]
        %v2415 = vsel %vm1355, %v2332, %v2414
        %2416 = vst [vmem:[#allocation3 + $0x310] sm:$0xff] %v2415
        %v2417 = vld [vmem:[#allocation3 + $0x358] sm:$0xff]
        %v2418 = vsel %vm1355, %v2339, %v2417
        %2419 = vst [vmem:[#allocation3 + $0x358] sm:$0xff] %v2418
        %v2420 = vld [vmem:[#allocation3 + $0x3a0] sm:$0xff]
        %v2421 = vsel %vm1355, %v2346, %v2420
        %2422 = vst [vmem:[#allocation3 + $0x3a0] sm:$0xff] %v2421
        %v2423 = vld [vmem:[#allocation3 + $0x3e8] sm:$0xff]
        %v2424 = vsel %vm1355, %v2353, %v2423
        %2425 = vst [vmem:[#allocation3 + $0x3e8] sm:$0xff] %v2424
        %v2426 = vld [vmem:[#allocation3 + $0x430] sm:$0xff]
        %v2427 = vsel %vm1355, %v2360, %v2426
        %2428 = vst [vmem:[#allocation3 + $0x430] sm:$0xff] %v2427
        %v2429 = vld [vmem:[#allocation3 + $0x478] sm:$0xff]
        %v2430 = vsel %vm1355, %v2367, %v2429
        %2431 = vst [vmem:[#allocation3 + $0x478] sm:$0xff] %v2430
        %v2432 = vld [vmem:[#allocation3 + $0x40] sm:$0x80]
        %v2433 = vsel %vm1406, 0, %v2432
        %2434 = vst [vmem:[#allocation3 + $0x40] sm:$0x80] %v2433
        %v2435 = vld [vmem:[#allocation3 + $0x88] sm:$0x80]
        %v2436 = vsel %vm1406, 0, %v2435
        %2437 = vst [vmem:[#allocation3 + $0x88] sm:$0x80] %v2436
        %v2438 = vld [vmem:[#allocation3 + $0xd0] sm:$0x80]
        %v2439 = vsel %vm1406, 0, %v2438
        %2440 = vst [vmem:[#allocation3 + $0xd0] sm:$0x80] %v2439
        %v2441 = vld [vmem:[#allocation3 + $0x118] sm:$0x80]
        %v2442 = vsel %vm1406, 0, %v2441
        %2443 = vst [vmem:[#allocation3 + $0x118] sm:$0x80] %v2442
        %v2444 = vld [vmem:[#allocation3 + $0x160] sm:$0x80]
        %v2445 = vsel %vm1406, 0, %v2444
        %2446 = vst [vmem:[#allocation3 + $0x160] sm:$0x80] %v2445
        %v2447 = vld [vmem:[#allocation3 + $0x1a8] sm:$0x80]
        %v2448 = vsel %vm1406, 0, %v2447
        %2449 = vst [vmem:[#allocation3 + $0x1a8] sm:$0x80] %v2448
        %v2450 = vld [vmem:[#allocation3 + $0x1f0] sm:$0x80]
        %v2451 = vsel %vm1406, 0, %v2450
        %2452 = vst [vmem:[#allocation3 + $0x1f0] sm:$0x80] %v2451
        %v2453 = vld [vmem:[#allocation3 + $0x238] sm:$0x80]
        %v2454 = vsel %vm1406, 0, %v2453
        %2455 = vst [vmem:[#allocation3 + $0x238] sm:$0x80] %v2454
        %v2456 = vld [vmem:[#allocation3 + $0x280] sm:$0x80]
        %v2457 = vsel %vm1406, 0, %v2456
        %2458 = vst [vmem:[#allocation3 + $0x280] sm:$0x80] %v2457
        %v2459 = vld [vmem:[#allocation3 + $0x2c8] sm:$0x80]
        %v2460 = vsel %vm1406, 0, %v2459
        %2461 = vst [vmem:[#allocation3 + $0x2c8] sm:$0x80] %v2460
        %v2462 = vld [vmem:[#allocation3 + $0x310] sm:$0x80]
        %v2463 = vsel %vm1406, 0, %v2462
        %2464 = vst [vmem:[#allocation3 + $0x310] sm:$0x80] %v2463
        %v2465 = vld [vmem:[#allocation3 + $0x358] sm:$0x80]
        %v2466 = vsel %vm1406, 0, %v2465
        %2467 = vst [vmem:[#allocation3 + $0x358] sm:$0x80] %v2466
        %v2468 = vld [vmem:[#allocation3 + $0x3a0] sm:$0x80]
        %v2469 = vsel %vm1406, 0, %v2468
        %2470 = vst [vmem:[#allocation3 + $0x3a0] sm:$0x80] %v2469
        %v2471 = vld [vmem:[#allocation3 + $0x3e8] sm:$0x80]
        %v2472 = vsel %vm1406, 0, %v2471
        %2473 = vst [vmem:[#allocation3 + $0x3e8] sm:$0x80] %v2472
        %v2474 = vld [vmem:[#allocation3 + $0x430] sm:$0x80]
        %v2475 = vsel %vm1406, 0, %v2474
        %2476 = vst [vmem:[#allocation3 + $0x430] sm:$0x80] %v2475
        %v2477 = vld [vmem:[#allocation3 + $0x478] sm:$0x80]
        %v2478 = vsel %vm1406, 0, %v2477
        %2479 = vst [vmem:[#allocation3 + $0x478] sm:$0x80] %v2478
        %v2480 = vld [vmem:[#allocation3] sm:$0xff]
        %v2481 = vld [vmem:[#allocation3 + $0x8] sm:$0xff]
        %v2482 = vld [vmem:[#allocation3 + $0x10] sm:$0xff]
        %v2483 = vld [vmem:[#allocation3 + $0x18] sm:$0xff]
        %v2484 = vld [vmem:[#allocation3 + $0x20] sm:$0xff]
        %v2485 = vld [vmem:[#allocation3 + $0x28] sm:$0xff]
        %v2486 = vld [vmem:[#allocation3 + $0x30] sm:$0xff]
        %v2487 = vld [vmem:[#allocation3 + $0x38] sm:$0xff]
        %v2488 = vld [vmem:[#allocation3 + $0x40] sm:$0xff]
        %v2489 = vld [vmem:[#allocation3 + $0x48] sm:$0xff]
        %v2490 = vld [vmem:[#allocation3 + $0x50] sm:$0xff]
        %v2491 = vld [vmem:[#allocation3 + $0x58] sm:$0xff]
        %v2492 = vld [vmem:[#allocation3 + $0x60] sm:$0xff]
        %v2493 = vld [vmem:[#allocation3 + $0x68] sm:$0xff]
        %v2494 = vld [vmem:[#allocation3 + $0x70] sm:$0xff]
        %v2495 = vld [vmem:[#allocation3 + $0x78] sm:$0xff]
        %v2496 = vld [vmem:[#allocation3 + $0x80] sm:$0xff]
        %v2497 = vld [vmem:[#allocation3 + $0x88] sm:$0xff]
        %v2498 = vld [vmem:[#allocation3 + $0x90] sm:$0xff]
        %v2499 = vld [vmem:[#allocation3 + $0x98] sm:$0xff]
        %v2500 = vld [vmem:[#allocation3 + $0xa0] sm:$0xff]
        %v2501 = vld [vmem:[#allocation3 + $0xa8] sm:$0xff]
        %v2502 = vld [vmem:[#allocation3 + $0xb0] sm:$0xff]
        %v2503 = vld [vmem:[#allocation3 + $0xb8] sm:$0xff]
        %v2504 = vld [vmem:[#allocation3 + $0xc0] sm:$0xff]
        %v2505 = vld [vmem:[#allocation3 + $0xc8] sm:$0xff]
        %v2506 = vld [vmem:[#allocation3 + $0xd0] sm:$0xff]
        %v2507 = vld [vmem:[#allocation3 + $0xd8] sm:$0xff]
        %v2508 = vld [vmem:[#allocation3 + $0xe0] sm:$0xff]
        %v2509 = vld [vmem:[#allocation3 + $0xe8] sm:$0xff]
        %v2510 = vld [vmem:[#allocation3 + $0xf0] sm:$0xff]
        %v2511 = vld [vmem:[#allocation3 + $0xf8] sm:$0xff]
        %v2512 = vld [vmem:[#allocation3 + $0x100] sm:$0xff]
        %v2513 = vld [vmem:[#allocation3 + $0x108] sm:$0xff]
        %v2514 = vld [vmem:[#allocation3 + $0x110] sm:$0xff]
        %v2515 = vld [vmem:[#allocation3 + $0x118] sm:$0xff]
        %v2516 = vld [vmem:[#allocation3 + $0x120] sm:$0xff]
        %v2517 = vld [vmem:[#allocation3 + $0x128] sm:$0xff]
        %v2518 = vld [vmem:[#allocation3 + $0x130] sm:$0xff]
        %v2519 = vld [vmem:[#allocation3 + $0x138] sm:$0xff]
        %v2520 = vld [vmem:[#allocation3 + $0x140] sm:$0xff]
        %v2521 = vld [vmem:[#allocation3 + $0x148] sm:$0xff]
        %v2522 = vld [vmem:[#allocation3 + $0x150] sm:$0xff]
        %v2523 = vld [vmem:[#allocation3 + $0x158] sm:$0xff]
        %v2524 = vld [vmem:[#allocation3 + $0x160] sm:$0xff]
        %v2525 = vld [vmem:[#allocation3 + $0x168] sm:$0xff]
        %v2526 = vld [vmem:[#allocation3 + $0x170] sm:$0xff]
        %v2527 = vld [vmem:[#allocation3 + $0x178] sm:$0xff]
        %v2528 = vld [vmem:[#allocation3 + $0x180] sm:$0xff]
        %v2529 = vld [vmem:[#allocation3 + $0x188] sm:$0xff]
        %v2530 = vld [vmem:[#allocation3 + $0x190] sm:$0xff]
        %v2531 = vld [vmem:[#allocation3 + $0x198] sm:$0xff]
        %v2532 = vld [vmem:[#allocation3 + $0x1a0] sm:$0xff]
        %v2533 = vld [vmem:[#allocation3 + $0x1a8] sm:$0xff]
        %v2534 = vld [vmem:[#allocation3 + $0x1b0] sm:$0xff]
        %v2535 = vld [vmem:[#allocation3 + $0x1b8] sm:$0xff]
        %v2536 = vld [vmem:[#allocation3 + $0x1c0] sm:$0xff]
        %v2537 = vld [vmem:[#allocation3 + $0x1c8] sm:$0xff]
        %v2538 = vld [vmem:[#allocation3 + $0x1d0] sm:$0xff]
        %v2539 = vld [vmem:[#allocation3 + $0x1d8] sm:$0xff]
        %v2540 = vld [vmem:[#allocation3 + $0x1e0] sm:$0xff]
        %v2541 = vld [vmem:[#allocation3 + $0x1e8] sm:$0xff]
        %v2542 = vld [vmem:[#allocation3 + $0x1f0] sm:$0xff]
        %v2543 = vld [vmem:[#allocation3 + $0x1f8] sm:$0xff]
        %v2544 = vld [vmem:[#allocation3 + $0x200] sm:$0xff]
        %v2545 = vld [vmem:[#allocation3 + $0x208] sm:$0xff]
        %v2546 = vld [vmem:[#allocation3 + $0x210] sm:$0xff]
        %v2547 = vld [vmem:[#allocation3 + $0x218] sm:$0xff]
        %v2548 = vld [vmem:[#allocation3 + $0x220] sm:$0xff]
        %v2549 = vld [vmem:[#allocation3 + $0x228] sm:$0xff]
        %v2550 = vld [vmem:[#allocation3 + $0x230] sm:$0xff]
        %v2551 = vld [vmem:[#allocation3 + $0x238] sm:$0xff]
        %v2552 = vld [vmem:[#allocation3 + $0x240] sm:$0xff]
        %v2553 = vld [vmem:[#allocation3 + $0x248] sm:$0xff]
        %v2554 = vld [vmem:[#allocation3 + $0x250] sm:$0xff]
        %v2555 = vld [vmem:[#allocation3 + $0x258] sm:$0xff]
        %v2556 = vld [vmem:[#allocation3 + $0x260] sm:$0xff]
        %v2557 = vld [vmem:[#allocation3 + $0x268] sm:$0xff]
        %v2558 = vld [vmem:[#allocation3 + $0x270] sm:$0xff]
        %v2559 = vld [vmem:[#allocation3 + $0x278] sm:$0xff]
        %v2560 = vld [vmem:[#allocation3 + $0x280] sm:$0xff]
        %v2561 = vld [vmem:[#allocation3 + $0x288] sm:$0xff]
        %v2562 = vld [vmem:[#allocation3 + $0x290] sm:$0xff]
        %v2563 = vld [vmem:[#allocation3 + $0x298] sm:$0xff]
        %v2564 = vld [vmem:[#allocation3 + $0x2a0] sm:$0xff]
        %v2565 = vld [vmem:[#allocation3 + $0x2a8] sm:$0xff]
        %v2566 = vld [vmem:[#allocation3 + $0x2b0] sm:$0xff]
        %v2567 = vld [vmem:[#allocation3 + $0x2b8] sm:$0xff]
        %v2568 = vld [vmem:[#allocation3 + $0x2c0] sm:$0xff]
        %v2569 = vld [vmem:[#allocation3 + $0x2c8] sm:$0xff]
        %v2570 = vld [vmem:[#allocation3 + $0x2d0] sm:$0xff]
        %v2571 = vld [vmem:[#allocation3 + $0x2d8] sm:$0xff]
        %v2572 = vld [vmem:[#allocation3 + $0x2e0] sm:$0xff]
        %v2573 = vld [vmem:[#allocation3 + $0x2e8] sm:$0xff]
        %v2574 = vld [vmem:[#allocation3 + $0x2f0] sm:$0xff]
        %v2575 = vld [vmem:[#allocation3 + $0x2f8] sm:$0xff]
        %v2576 = vld [vmem:[#allocation3 + $0x300] sm:$0xff]
        %v2577 = vld [vmem:[#allocation3 + $0x308] sm:$0xff]
        %v2578 = vld [vmem:[#allocation3 + $0x310] sm:$0xff]
        %v2579 = vld [vmem:[#allocation3 + $0x318] sm:$0xff]
        %v2580 = vld [vmem:[#allocation3 + $0x320] sm:$0xff]
        %v2581 = vld [vmem:[#allocation3 + $0x328] sm:$0xff]
        %v2582 = vld [vmem:[#allocation3 + $0x330] sm:$0xff]
        %v2583 = vld [vmem:[#allocation3 + $0x338] sm:$0xff]
        %v2584 = vld [vmem:[#allocation3 + $0x340] sm:$0xff]
        %v2585 = vld [vmem:[#allocation3 + $0x348] sm:$0xff]
        %v2586 = vld [vmem:[#allocation3 + $0x350] sm:$0xff]
        %v2587 = vld [vmem:[#allocation3 + $0x358] sm:$0xff]
        %v2588 = vld [vmem:[#allocation3 + $0x360] sm:$0xff]
        %v2589 = vld [vmem:[#allocation3 + $0x368] sm:$0xff]
        %v2590 = vld [vmem:[#allocation3 + $0x370] sm:$0xff]
        %v2591 = vld [vmem:[#allocation3 + $0x378] sm:$0xff]
        %v2592 = vld [vmem:[#allocation3 + $0x380] sm:$0xff]
        %v2593 = vld [vmem:[#allocation3 + $0x388] sm:$0xff]
        %v2594 = vld [vmem:[#allocation3 + $0x390] sm:$0xff]
        %v2595 = vld [vmem:[#allocation3 + $0x398] sm:$0xff]
        %v2596 = vld [vmem:[#allocation3 + $0x3a0] sm:$0xff]
        %v2597 = vld [vmem:[#allocation3 + $0x3a8] sm:$0xff]
        %v2598 = vld [vmem:[#allocation3 + $0x3b0] sm:$0xff]
        %v2599 = vld [vmem:[#allocation3 + $0x3b8] sm:$0xff]
        %v2600 = vld [vmem:[#allocation3 + $0x3c0] sm:$0xff]
        %v2601 = vld [vmem:[#allocation3 + $0x3c8] sm:$0xff]
        %v2602 = vld [vmem:[#allocation3 + $0x3d0] sm:$0xff]
        %v2603 = vld [vmem:[#allocation3 + $0x3d8] sm:$0xff]
        %v2604 = vld [vmem:[#allocation3 + $0x3e0] sm:$0xff]
        %v2605 = vld [vmem:[#allocation3 + $0x3e8] sm:$0xff]
        %v2606 = vld [vmem:[#allocation3 + $0x3f0] sm:$0xff]
        %v2607 = vld [vmem:[#allocation3 + $0x3f8] sm:$0xff]
        %v2608 = vld [vmem:[#allocation3 + $0x400] sm:$0xff]
        %v2609 = vld [vmem:[#allocation3 + $0x408] sm:$0xff]
        %v2610 = vld [vmem:[#allocation3 + $0x410] sm:$0xff]
        %v2611 = vld [vmem:[#allocation3 + $0x418] sm:$0xff]
        %v2612 = vld [vmem:[#allocation3 + $0x420] sm:$0xff]
        %v2613 = vld [vmem:[#allocation3 + $0x428] sm:$0xff]
        %v2614 = vld [vmem:[#allocation3 + $0x430] sm:$0xff]
        %v2615 = vld [vmem:[#allocation3 + $0x438] sm:$0xff]
        %v2616 = vld [vmem:[#allocation3 + $0x440] sm:$0xff]
        %v2617 = vld [vmem:[#allocation3 + $0x448] sm:$0xff]
        %v2618 = vld [vmem:[#allocation3 + $0x450] sm:$0xff]
        %v2619 = vld [vmem:[#allocation3 + $0x458] sm:$0xff]
        %v2620 = vld [vmem:[#allocation3 + $0x460] sm:$0xff]
        %v2621 = vld [vmem:[#allocation3 + $0x468] sm:$0xff]
        %v2622 = vld [vmem:[#allocation3 + $0x470] sm:$0xff]
        %v2623 = vld [vmem:[#allocation3 + $0x478] sm:$0xff]
        %v2624 = vld [vmem:[%s5] sm:$0xf]
        %v2625 = vld [vmem:[%s5 + $0x4] sm:$0xf]
        %v2626 = vld [vmem:[%s5 + $0x8] sm:$0xf]
        %v2627 = vld [vmem:[%s5 + $0xc] sm:$0xf]
        %v2628 = vld [vmem:[%s5 + $0x10] sm:$0xf]
        %v2629 = vld [vmem:[%s5 + $0x14] sm:$0xf]
        %v2630 = vld [vmem:[%s5 + $0x18] sm:$0xf]
        %v2631 = vld [vmem:[%s5 + $0x1c] sm:$0xf]
        %v2632 = vld [vmem:[%s5 + $0x20] sm:$0xf]
        %v2633 = vld [vmem:[%s5 + $0x24] sm:$0xf]
        %v2634 = vld [vmem:[%s5 + $0x28] sm:$0xf]
        %v2635 = vld [vmem:[%s5 + $0x2c] sm:$0xf]
        %v2636 = vld [vmem:[%s5 + $0x30] sm:$0xf]
        %v2637 = vld [vmem:[%s5 + $0x34] sm:$0xf]
        %v2638 = vld [vmem:[%s5 + $0x38] sm:$0xf]
        %v2639 = vld [vmem:[%s5 + $0x3c] sm:$0xf]
        %v2640 = vld [vmem:[%s5 + $0x40] sm:$0xf]
        %v2641 = vld [vmem:[%s5 + $0x44] sm:$0xf]
        %v2642 = vld [vmem:[%s5 + $0x48] sm:$0xf]
        %v2643 = vld [vmem:[%s5 + $0x4c] sm:$0xf]
        %v2644 = vld [vmem:[%s5 + $0x50] sm:$0xf]
        %v2645 = vld [vmem:[%s5 + $0x54] sm:$0xf]
        %v2646 = vld [vmem:[%s5 + $0x58] sm:$0xf]
        %v2647 = vld [vmem:[%s5 + $0x5c] sm:$0xf]
        %v2648 = vld [vmem:[%s5 + $0x60] sm:$0xf]
        %v2649 = vld [vmem:[%s5 + $0x64] sm:$0xf]
        %v2650 = vld [vmem:[%s5 + $0x68] sm:$0xf]
        %v2651 = vld [vmem:[%s5 + $0x6c] sm:$0xf]
        %v2652 = vld [vmem:[%s5 + $0x70] sm:$0xf]
        %v2653 = vld [vmem:[%s5 + $0x74] sm:$0xf]
        %v2654 = vld [vmem:[%s5 + $0x78] sm:$0xf]
        %v2655 = vld [vmem:[%s5 + $0x7c] sm:$0xf]
        %v2656 = vld [vmem:[%s5 + $0x80] sm:$0xf]
        %v2657 = vld [vmem:[%s5 + $0x84] sm:$0xf]
        %v2658 = vld [vmem:[%s5 + $0x88] sm:$0xf]
        %v2659 = vld [vmem:[%s5 + $0x8c] sm:$0xf]
        %v2660 = vld [vmem:[%s5 + $0x90] sm:$0xf]
        %v2661 = vld [vmem:[%s5 + $0x94] sm:$0xf]
        %v2662 = vld [vmem:[%s5 + $0x98] sm:$0xf]
        %v2663 = vld [vmem:[%s5 + $0x9c] sm:$0xf]
        %v2664 = vld [vmem:[%s5 + $0xa0] sm:$0xf]
        %v2665 = vld [vmem:[%s5 + $0xa4] sm:$0xf]
        %v2666 = vld [vmem:[%s5 + $0xa8] sm:$0xf]
        %v2667 = vld [vmem:[%s5 + $0xac] sm:$0xf]
        %v2668 = vld [vmem:[%s5 + $0xb0] sm:$0xf]
        %v2669 = vld [vmem:[%s5 + $0xb4] sm:$0xf]
        %v2670 = vld [vmem:[%s5 + $0xb8] sm:$0xf]
        %v2671 = vld [vmem:[%s5 + $0xbc] sm:$0xf]
        %v2672 = vld [vmem:[%s5 + $0xc0] sm:$0xf]
        %v2673 = vld [vmem:[%s5 + $0xc4] sm:$0xf]
        %v2674 = vld [vmem:[%s5 + $0xc8] sm:$0xf]
        %v2675 = vld [vmem:[%s5 + $0xcc] sm:$0xf]
        %v2676 = vld [vmem:[%s5 + $0xd0] sm:$0xf]
        %v2677 = vld [vmem:[%s5 + $0xd4] sm:$0xf]
        %v2678 = vld [vmem:[%s5 + $0xd8] sm:$0xf]
        %v2679 = vld [vmem:[%s5 + $0xdc] sm:$0xf]
        %v2680 = vld [vmem:[%s5 + $0xe0] sm:$0xf]
        %v2681 = vld [vmem:[%s5 + $0xe4] sm:$0xf]
        %v2682 = vld [vmem:[%s5 + $0xe8] sm:$0xf]
        %v2683 = vld [vmem:[%s5 + $0xec] sm:$0xf]
        %v2684 = vld [vmem:[%s5 + $0xf0] sm:$0xf]
        %v2685 = vld [vmem:[%s5 + $0xf4] sm:$0xf]
        %v2686 = vld [vmem:[%s5 + $0xf8] sm:$0xf]
        %v2687 = vld [vmem:[%s5 + $0xfc] sm:$0xf]
        %v2688 = vld [vmem:[%s5 + $0x100] sm:$0xf]
        %v2689 = vld [vmem:[%s5 + $0x104] sm:$0xf]
        %v2690 = vld [vmem:[%s5 + $0x108] sm:$0xf]
        %v2691 = vld [vmem:[%s5 + $0x10c] sm:$0xf]
        %v2692 = vld [vmem:[%s5 + $0x110] sm:$0xf]
        %v2693 = vld [vmem:[%s5 + $0x114] sm:$0xf]
        %v2694 = vld [vmem:[%s5 + $0x118] sm:$0xf]
        %v2695 = vld [vmem:[%s5 + $0x11c] sm:$0xf]
        %v2696 = vld [vmem:[%s5 + $0x120] sm:$0xf]
        %v2697 = vld [vmem:[%s5 + $0x124] sm:$0xf]
        %v2698 = vld [vmem:[%s5 + $0x128] sm:$0xf]
        %v2699 = vld [vmem:[%s5 + $0x12c] sm:$0xf]
        %v2700 = vld [vmem:[%s5 + $0x130] sm:$0xf]
        %v2701 = vld [vmem:[%s5 + $0x134] sm:$0xf]
        %v2702 = vld [vmem:[%s5 + $0x138] sm:$0xf]
        %v2703 = vld [vmem:[%s5 + $0x13c] sm:$0xf]
        %v2704 = vld [vmem:[%s5 + $0x140] sm:$0xf]
        %v2705 = vld [vmem:[%s5 + $0x144] sm:$0xf]
        %v2706 = vld [vmem:[%s5 + $0x148] sm:$0xf]
        %v2707 = vld [vmem:[%s5 + $0x14c] sm:$0xf]
        %v2708 = vld [vmem:[%s5 + $0x150] sm:$0xf]
        %v2709 = vld [vmem:[%s5 + $0x154] sm:$0xf]
        %v2710 = vld [vmem:[%s5 + $0x158] sm:$0xf]
        %v2711 = vld [vmem:[%s5 + $0x15c] sm:$0xf]
        %v2712 = vld [vmem:[%s5 + $0x160] sm:$0xf]
        %v2713 = vld [vmem:[%s5 + $0x164] sm:$0xf]
        %v2714 = vld [vmem:[%s5 + $0x168] sm:$0xf]
        %v2715 = vld [vmem:[%s5 + $0x16c] sm:$0xf]
        %v2716 = vld [vmem:[%s5 + $0x170] sm:$0xf]
        %v2717 = vld [vmem:[%s5 + $0x174] sm:$0xf]
        %v2718 = vld [vmem:[%s5 + $0x178] sm:$0xf]
        %v2719 = vld [vmem:[%s5 + $0x17c] sm:$0xf]
        %v2720 = vld [vmem:[%s5 + $0x180] sm:$0xf]
        %v2721 = vld [vmem:[%s5 + $0x184] sm:$0xf]
        %v2722 = vld [vmem:[%s5 + $0x188] sm:$0xf]
        %v2723 = vld [vmem:[%s5 + $0x18c] sm:$0xf]
        %v2724 = vld [vmem:[%s5 + $0x190] sm:$0xf]
        %v2725 = vld [vmem:[%s5 + $0x194] sm:$0xf]
        %v2726 = vld [vmem:[%s5 + $0x198] sm:$0xf]
        %v2727 = vld [vmem:[%s5 + $0x19c] sm:$0xf]
        %v2728 = vld [vmem:[%s5 + $0x1a0] sm:$0xf]
        %v2729 = vld [vmem:[%s5 + $0x1a4] sm:$0xf]
        %v2730 = vld [vmem:[%s5 + $0x1a8] sm:$0xf]
        %v2731 = vld [vmem:[%s5 + $0x1ac] sm:$0xf]
        %v2732 = vld [vmem:[%s5 + $0x1b0] sm:$0xf]
        %v2733 = vld [vmem:[%s5 + $0x1b4] sm:$0xf]
        %v2734 = vld [vmem:[%s5 + $0x1b8] sm:$0xf]
        %v2735 = vld [vmem:[%s5 + $0x1bc] sm:$0xf]
        %v2736 = vld [vmem:[%s5 + $0x1c0] sm:$0xf]
        %v2737 = vld [vmem:[%s5 + $0x1c4] sm:$0xf]
        %v2738 = vld [vmem:[%s5 + $0x1c8] sm:$0xf]
        %v2739 = vld [vmem:[%s5 + $0x1cc] sm:$0xf]
        %v2740 = vld [vmem:[%s5 + $0x1d0] sm:$0xf]
        %v2741 = vld [vmem:[%s5 + $0x1d4] sm:$0xf]
        %v2742 = vld [vmem:[%s5 + $0x1d8] sm:$0xf]
        %v2743 = vld [vmem:[%s5 + $0x1dc] sm:$0xf]
        %v2744 = vld [vmem:[%s5 + $0x1e0] sm:$0xf]
        %v2745 = vld [vmem:[%s5 + $0x1e4] sm:$0xf]
        %v2746 = vld [vmem:[%s5 + $0x1e8] sm:$0xf]
        %v2747 = vld [vmem:[%s5 + $0x1ec] sm:$0xf]
        %v2748 = vld [vmem:[%s5 + $0x1f0] sm:$0xf]
        %v2749 = vld [vmem:[%s5 + $0x1f4] sm:$0xf]
        %v2750 = vld [vmem:[%s5 + $0x1f8] sm:$0xf]
        %v2751 = vld [vmem:[%s5 + $0x1fc] sm:$0xf]
        %v2752 = vld [vmem:[%s5 + $0x200] sm:$0xf]
        %v2753 = vld [vmem:[%s5 + $0x204] sm:$0xf]
        %v2754 = vld [vmem:[%s5 + $0x208] sm:$0xf]
        %v2755 = vld [vmem:[%s5 + $0x20c] sm:$0xf]
        %v2756 = vld [vmem:[%s5 + $0x210] sm:$0xf]
        %v2757 = vld [vmem:[%s5 + $0x214] sm:$0xf]
        %v2758 = vld [vmem:[%s5 + $0x218] sm:$0xf]
        %v2759 = vld [vmem:[%s5 + $0x21c] sm:$0xf]
        %v2760 = vld [vmem:[%s5 + $0x220] sm:$0xf]
        %v2761 = vld [vmem:[%s5 + $0x224] sm:$0xf]
        %v2762 = vld [vmem:[%s5 + $0x228] sm:$0xf]
        %v2763 = vld [vmem:[%s5 + $0x22c] sm:$0xf]
        %v2764 = vld [vmem:[%s5 + $0x230] sm:$0xf]
        %v2765 = vld [vmem:[%s5 + $0x234] sm:$0xf]
        %v2766 = vld [vmem:[%s5 + $0x238] sm:$0xf]
        %v2767 = vld [vmem:[%s5 + $0x23c] sm:$0xf]
        %v2912 = vunpack.c.l.b16 %v2624
        %v2913 = vunpack.c.l.b16 %v2625
        %v2914 = vunpack.c.l.b16 %v2626
        %v2915 = vunpack.c.l.b16 %v2627
        %v2916 = vunpack.c.l.b16 %v2628
        %v2917 = vunpack.c.l.b16 %v2629
        %v2918 = vunpack.c.l.b16 %v2630
        %v2919 = vunpack.c.l.b16 %v2631
        %v2920 = vunpack.c.l.b16 %v2632
        %v2921 = vunpack.c.l.b16 %v2633
        %v2922 = vunpack.c.l.b16 %v2634
        %v2923 = vunpack.c.l.b16 %v2635
        %v2924 = vunpack.c.l.b16 %v2636
        %v2925 = vunpack.c.l.b16 %v2637
        %v2926 = vunpack.c.l.b16 %v2638
        %v2927 = vunpack.c.l.b16 %v2639
        %v2928 = vunpack.c.l.b16 %v2640
        %v2929 = vunpack.c.l.b16 %v2641
        %v2930 = vunpack.c.l.b16 %v2642
        %v2931 = vunpack.c.l.b16 %v2643
        %v2932 = vunpack.c.l.b16 %v2644
        %v2933 = vunpack.c.l.b16 %v2645
        %v2934 = vunpack.c.l.b16 %v2646
        %v2935 = vunpack.c.l.b16 %v2647
        %v2936 = vunpack.c.l.b16 %v2648
        %v2937 = vunpack.c.l.b16 %v2649
        %v2938 = vunpack.c.l.b16 %v2650
        %v2939 = vunpack.c.l.b16 %v2651
        %v2940 = vunpack.c.l.b16 %v2652
        %v2941 = vunpack.c.l.b16 %v2653
        %v2942 = vunpack.c.l.b16 %v2654
        %v2943 = vunpack.c.l.b16 %v2655
        %v2944 = vunpack.c.l.b16 %v2656
        %v2945 = vunpack.c.l.b16 %v2657
        %v2946 = vunpack.c.l.b16 %v2658
        %v2947 = vunpack.c.l.b16 %v2659
        %v2948 = vunpack.c.l.b16 %v2660
        %v2949 = vunpack.c.l.b16 %v2661
        %v2950 = vunpack.c.l.b16 %v2662
        %v2951 = vunpack.c.l.b16 %v2663
        %v2952 = vunpack.c.l.b16 %v2664
        %v2953 = vunpack.c.l.b16 %v2665
        %v2954 = vunpack.c.l.b16 %v2666
        %v2955 = vunpack.c.l.b16 %v2667
        %v2956 = vunpack.c.l.b16 %v2668
        %v2957 = vunpack.c.l.b16 %v2669
        %v2958 = vunpack.c.l.b16 %v2670
        %v2959 = vunpack.c.l.b16 %v2671
        %v2960 = vunpack.c.l.b16 %v2672
        %v2961 = vunpack.c.l.b16 %v2673
        %v2962 = vunpack.c.l.b16 %v2674
        %v2963 = vunpack.c.l.b16 %v2675
        %v2964 = vunpack.c.l.b16 %v2676
        %v2965 = vunpack.c.l.b16 %v2677
        %v2966 = vunpack.c.l.b16 %v2678
        %v2967 = vunpack.c.l.b16 %v2679
        %v2968 = vunpack.c.l.b16 %v2680
        %v2969 = vunpack.c.l.b16 %v2681
        %v2970 = vunpack.c.l.b16 %v2682
        %v2971 = vunpack.c.l.b16 %v2683
        %v2972 = vunpack.c.l.b16 %v2684
        %v2973 = vunpack.c.l.b16 %v2685
        %v2974 = vunpack.c.l.b16 %v2686
        %v2975 = vunpack.c.l.b16 %v2687
        %v2976 = vunpack.c.l.b16 %v2688
        %v2977 = vunpack.c.l.b16 %v2689
        %v2978 = vunpack.c.l.b16 %v2690
        %v2979 = vunpack.c.l.b16 %v2691
        %v2980 = vunpack.c.l.b16 %v2692
        %v2981 = vunpack.c.l.b16 %v2693
        %v2982 = vunpack.c.l.b16 %v2694
        %v2983 = vunpack.c.l.b16 %v2695
        %v2984 = vunpack.c.l.b16 %v2696
        %v2985 = vunpack.c.l.b16 %v2697
        %v2986 = vunpack.c.l.b16 %v2698
        %v2987 = vunpack.c.l.b16 %v2699
        %v2988 = vunpack.c.l.b16 %v2700
        %v2989 = vunpack.c.l.b16 %v2701
        %v2990 = vunpack.c.l.b16 %v2702
        %v2991 = vunpack.c.l.b16 %v2703
        %v2992 = vunpack.c.l.b16 %v2704
        %v2993 = vunpack.c.l.b16 %v2705
        %v2994 = vunpack.c.l.b16 %v2706
        %v2995 = vunpack.c.l.b16 %v2707
        %v2996 = vunpack.c.l.b16 %v2708
        %v2997 = vunpack.c.l.b16 %v2709
        %v2998 = vunpack.c.l.b16 %v2710
        %v2999 = vunpack.c.l.b16 %v2711
        %v3000 = vunpack.c.l.b16 %v2712
        %v3001 = vunpack.c.l.b16 %v2713
        %v3002 = vunpack.c.l.b16 %v2714
        %v3003 = vunpack.c.l.b16 %v2715
        %v3004 = vunpack.c.l.b16 %v2716
        %v3005 = vunpack.c.l.b16 %v2717
        %v3006 = vunpack.c.l.b16 %v2718
        %v3007 = vunpack.c.l.b16 %v2719
        %v3008 = vunpack.c.l.b16 %v2720
        %v3009 = vunpack.c.l.b16 %v2721
        %v3010 = vunpack.c.l.b16 %v2722
        %v3011 = vunpack.c.l.b16 %v2723
        %v3012 = vunpack.c.l.b16 %v2724
        %v3013 = vunpack.c.l.b16 %v2725
        %v3014 = vunpack.c.l.b16 %v2726
        %v3015 = vunpack.c.l.b16 %v2727
        %v3016 = vunpack.c.l.b16 %v2728
        %v3017 = vunpack.c.l.b16 %v2729
        %v3018 = vunpack.c.l.b16 %v2730
        %v3019 = vunpack.c.l.b16 %v2731
        %v3020 = vunpack.c.l.b16 %v2732
        %v3021 = vunpack.c.l.b16 %v2733
        %v3022 = vunpack.c.l.b16 %v2734
        %v3023 = vunpack.c.l.b16 %v2735
        %v3024 = vunpack.c.l.b16 %v2736
        %v3025 = vunpack.c.l.b16 %v2737
        %v3026 = vunpack.c.l.b16 %v2738
        %v3027 = vunpack.c.l.b16 %v2739
        %v3028 = vunpack.c.l.b16 %v2740
        %v3029 = vunpack.c.l.b16 %v2741
        %v3030 = vunpack.c.l.b16 %v2742
        %v3031 = vunpack.c.l.b16 %v2743
        %v3032 = vunpack.c.l.b16 %v2744
        %v3033 = vunpack.c.l.b16 %v2745
        %v3034 = vunpack.c.l.b16 %v2746
        %v3035 = vunpack.c.l.b16 %v2747
        %v3036 = vunpack.c.l.b16 %v2748
        %v3037 = vunpack.c.l.b16 %v2749
        %v3038 = vunpack.c.l.b16 %v2750
        %v3039 = vunpack.c.l.b16 %v2751
        %v3040 = vunpack.c.l.b16 %v2752
        %v3041 = vunpack.c.l.b16 %v2753
        %v3042 = vunpack.c.l.b16 %v2754
        %v3043 = vunpack.c.l.b16 %v2755
        %v3044 = vunpack.c.l.b16 %v2756
        %v3045 = vunpack.c.l.b16 %v2757
        %v3046 = vunpack.c.l.b16 %v2758
        %v3047 = vunpack.c.l.b16 %v2759
        %v3048 = vunpack.c.l.b16 %v2760
        %v3049 = vunpack.c.l.b16 %v2761
        %v3050 = vunpack.c.l.b16 %v2762
        %v3051 = vunpack.c.l.b16 %v2763
        %v3052 = vunpack.c.l.b16 %v2764
        %v3053 = vunpack.c.l.b16 %v2765
        %v3054 = vunpack.c.l.b16 %v2766
        %v3055 = vunpack.c.l.b16 %v2767
        %v3056 = vpack.c.b16 %v2913, %v2912
        %v3057 = vpack.c.b16 %v2915, %v2914
        %v3058 = vpack.c.b16 %v2917, %v2916
        %v3059 = vpack.c.b16 %v2919, %v2918
        %v3060 = vpack.c.b16 %v2921, %v2920
        %v3061 = vpack.c.b16 %v2923, %v2922
        %v3062 = vpack.c.b16 %v2925, %v2924
        %v3063 = vpack.c.b16 %v2927, %v2926
        %v3064 = vpack.c.b16 %v2929, %v2928
        %v3065 = vpack.c.b16 %v2931, %v2930
        %v3066 = vpack.c.b16 %v2933, %v2932
        %v3067 = vpack.c.b16 %v2935, %v2934
        %v3068 = vpack.c.b16 %v2937, %v2936
        %v3069 = vpack.c.b16 %v2939, %v2938
        %v3070 = vpack.c.b16 %v2941, %v2940
        %v3071 = vpack.c.b16 %v2943, %v2942
        %v3072 = vpack.c.b16 %v2945, %v2944
        %v3073 = vpack.c.b16 %v2947, %v2946
        %v3074 = vpack.c.b16 %v2949, %v2948
        %v3075 = vpack.c.b16 %v2951, %v2950
        %v3076 = vpack.c.b16 %v2953, %v2952
        %v3077 = vpack.c.b16 %v2955, %v2954
        %v3078 = vpack.c.b16 %v2957, %v2956
        %v3079 = vpack.c.b16 %v2959, %v2958
        %v3080 = vpack.c.b16 %v2961, %v2960
        %v3081 = vpack.c.b16 %v2963, %v2962
        %v3082 = vpack.c.b16 %v2965, %v2964
        %v3083 = vpack.c.b16 %v2967, %v2966
        %v3084 = vpack.c.b16 %v2969, %v2968
        %v3085 = vpack.c.b16 %v2971, %v2970
        %v3086 = vpack.c.b16 %v2973, %v2972
        %v3087 = vpack.c.b16 %v2975, %v2974
        %v3088 = vpack.c.b16 %v2977, %v2976
        %v3089 = vpack.c.b16 %v2979, %v2978
        %v3090 = vpack.c.b16 %v2981, %v2980
        %v3091 = vpack.c.b16 %v2983, %v2982
        %v3092 = vpack.c.b16 %v2985, %v2984
        %v3093 = vpack.c.b16 %v2987, %v2986
        %v3094 = vpack.c.b16 %v2989, %v2988
        %v3095 = vpack.c.b16 %v2991, %v2990
        %v3096 = vpack.c.b16 %v2993, %v2992
        %v3097 = vpack.c.b16 %v2995, %v2994
        %v3098 = vpack.c.b16 %v2997, %v2996
        %v3099 = vpack.c.b16 %v2999, %v2998
        %v3100 = vpack.c.b16 %v3001, %v3000
        %v3101 = vpack.c.b16 %v3003, %v3002
        %v3102 = vpack.c.b16 %v3005, %v3004
        %v3103 = vpack.c.b16 %v3007, %v3006
        %v3104 = vpack.c.b16 %v3009, %v3008
        %v3105 = vpack.c.b16 %v3011, %v3010
        %v3106 = vpack.c.b16 %v3013, %v3012
        %v3107 = vpack.c.b16 %v3015, %v3014
        %v3108 = vpack.c.b16 %v3017, %v3016
        %v3109 = vpack.c.b16 %v3019, %v3018
        %v3110 = vpack.c.b16 %v3021, %v3020
        %v3111 = vpack.c.b16 %v3023, %v3022
        %v3112 = vpack.c.b16 %v3025, %v3024
        %v3113 = vpack.c.b16 %v3027, %v3026
        %v3114 = vpack.c.b16 %v3029, %v3028
        %v3115 = vpack.c.b16 %v3031, %v3030
        %v3116 = vpack.c.b16 %v3033, %v3032
        %v3117 = vpack.c.b16 %v3035, %v3034
        %v3118 = vpack.c.b16 %v3037, %v3036
        %v3119 = vpack.c.b16 %v3039, %v3038
        %v3120 = vpack.c.b16 %v3041, %v3040
        %v3121 = vpack.c.b16 %v3043, %v3042
        %v3122 = vpack.c.b16 %v3045, %v3044
        %v3123 = vpack.c.b16 %v3047, %v3046
        %v3124 = vpack.c.b16 %v3049, %v3048
        %v3125 = vpack.c.b16 %v3051, %v3050
        %v3126 = vpack.c.b16 %v3053, %v3052
        %v3127 = vpack.c.b16 %v3055, %v3054
        %3200 = vmatprep.subr.bf16.mxu0 0
        %3201 = vmatpush1.bf16.msra.mxu0 %v3056
        %3202 = vmatprep.subr.bf16.mxu0 0
        %3203 = vmatpush1.bf16.msra.mxu0 %v3057
        %3204 = vmatprep.subr.bf16.mxu0 0
        %3205 = vmatpush1.bf16.msra.mxu0 %v3058
        %3206 = vmatprep.subr.bf16.mxu0 0
        %3207 = vmatpush1.bf16.msra.mxu0 %v3059
        %3208 = vmatprep.subr.bf16.mxu0 0
        %3209 = vmatpush1.bf16.msra.mxu0 %v3060
        %3210 = vmatprep.subr.bf16.mxu0 0
        %3211 = vmatpush1.bf16.msra.mxu0 %v3061
        %3212 = vmatprep.subr.bf16.mxu0 0
        %3213 = vmatpush1.bf16.msra.mxu0 %v3062
        %3214 = vmatprep.subr.bf16.mxu0 0
        %3215 = vmatpush1.bf16.msra.mxu0 %v3063
        %3216 = vmatprep.subr.bf16.mxu0 0
        %3217 = vmatpush1.bf16.msra.mxu0 %v3064
        %3218 = vmatprep.subr.bf16.mxu0 0
        %3219 = vmatpush1.bf16.msra.mxu0 %v3065
        %3220 = vmatprep.subr.bf16.mxu0 0
        %3221 = vmatpush1.bf16.msra.mxu0 %v3066
        %3222 = vmatprep.subr.bf16.mxu0 0
        %3223 = vmatpush1.bf16.msra.mxu0 %v3067
        %3224 = vmatprep.subr.bf16.mxu0 0
        %3225 = vmatpush1.bf16.msra.mxu0 %v3068
        %3226 = vmatprep.subr.bf16.mxu0 0
        %3227 = vmatpush1.bf16.msra.mxu0 %v3069
        %3228 = vmatprep.subr.bf16.mxu0 0
        %3229 = vmatpush1.bf16.msra.mxu0 %v3070
        %3230 = vmatprep.subr.bf16.mxu0 0
        %3231 = vmatpush1.bf16.msra.mxu0 %v3071
        %3232 = vmatprep.mubr.bf16.mxu0 %v2481
        %3233 = vmatmul.mubr.bf16.gmra.mrb[0].mxu0 %v2480
        %v3234 = vpop.f32.mrb[0].mxu0
        %v3235 = vadd.f32 0.0, %v3234
        %v3236 = vpop.f32.mrb[0].mxu0
        %v3237 = vpop.f32.mrb[0].mxu0
        %v3238 = vadd.f32 0.0, %v3237
        %v3239 = vpop.f32.mrb[0].mxu0
        %3240 = vmatprep.mubr.bf16.mxu0 %v2490
        %3241 = vmatmul.mubr.bf16.gmra.mrb[0].mxu0 %v2489
        %v3242 = vpop.f32.mrb[0].mxu0
        %v3243 = vadd.f32 0.0, %v3242
        %v3244 = vpop.f32.mrb[0].mxu0
        %v3245 = vpop.f32.mrb[0].mxu0
        %v3246 = vadd.f32 0.0, %v3245
        %v3247 = vpop.f32.mrb[0].mxu0
        %3248 = vmatprep.mubr.bf16.mxu0 %v2499
        %3249 = vmatmul.mubr.bf16.gmra.mrb[0].mxu0 %v2498
        %v3250 = vpop.f32.mrb[0].mxu0
        %v3251 = vadd.f32 0.0, %v3250
        %v3252 = vpop.f32.mrb[0].mxu0
        %v3253 = vpop.f32.mrb[0].mxu0
        %v3254 = vadd.f32 0.0, %v3253
        %v3255 = vpop.f32.mrb[0].mxu0
        %3256 = vmatprep.mubr.bf16.mxu0 %v2508
        %3257 = vmatmul.mubr.bf16.gmra.mrb[0].mxu0 %v2507
        %v3258 = vpop.f32.mrb[0].mxu0
        %v3259 = vadd.f32 0.0, %v3258
        %v3260 = vpop.f32.mrb[0].mxu0
        %v3261 = vpop.f32.mrb[0].mxu0
        %v3262 = vadd.f32 0.0, %v3261
        %v3263 = vpop.f32.mrb[0].mxu0
        %3264 = vmatprep.mubr.bf16.mxu0 %v2517
        %3265 = vmatmul.mubr.bf16.gmra.mrb[0].mxu0 %v2516
        %v3266 = vpop.f32.mrb[0].mxu0
        %v3267 = vadd.f32 0.0, %v3266
        %v3268 = vpop.f32.mrb[0].mxu0
        %v3269 = vpop.f32.mrb[0].mxu0
        %v3270 = vadd.f32 0.0, %v3269
        %v3271 = vpop.f32.mrb[0].mxu0
        %3272 = vmatprep.mubr.bf16.mxu0 %v2526
        %3273 = vmatmul.mubr.bf16.gmra.mrb[0].mxu0 %v2525
        %v3274 = vpop.f32.mrb[0].mxu0
        %v3275 = vadd.f32 0.0, %v3274
        %v3276 = vpop.f32.mrb[0].mxu0
        %v3277 = vpop.f32.mrb[0].mxu0
        %v3278 = vadd.f32 0.0, %v3277
        %v3279 = vpop.f32.mrb[0].mxu0
        %3280 = vmatprep.mubr.bf16.mxu0 %v2535
        %3281 = vmatmul.mubr.bf16.gmra.mrb[0].mxu0 %v2534
        %v3282 = vpop.f32.mrb[0].mxu0
        %v3283 = vadd.f32 0.0, %v3282
        %v3284 = vpop.f32.mrb[0].mxu0
        %v3285 = vpop.f32.mrb[0].mxu0
        %v3286 = vadd.f32 0.0, %v3285
        %v3287 = vpop.f32.mrb[0].mxu0
        %3288 = vmatprep.mubr.bf16.mxu0 %v2544
        %3289 = vmatmul.mubr.bf16.gmra.mrb[0].mxu0 %v2543
        %v3290 = vpop.f32.mrb[0].mxu0
        %v3291 = vadd.f32 0.0, %v3290
        %v3292 = vpop.f32.mrb[0].mxu0
        %v3293 = vpop.f32.mrb[0].mxu0
        %v3294 = vadd.f32 0.0, %v3293
        %v3295 = vpop.f32.mrb[0].mxu0
        %3296 = vmatprep.mubr.bf16.mxu0 %v2553
        %3297 = vmatmul.mubr.bf16.gmra.mrb[0].mxu0 %v2552
        %v3298 = vpop.f32.mrb[0].mxu0
        %v3299 = vadd.f32 0.0, %v3298
        %v3300 = vpop.f32.mrb[0].mxu0
        %v3301 = vpop.f32.mrb[0].mxu0
        %v3302 = vadd.f32 0.0, %v3301
        %v3303 = vpop.f32.mrb[0].mxu0
        %3304 = vmatprep.mubr.bf16.mxu0 %v2562
        %3305 = vmatmul.mubr.bf16.gmra.mrb[0].mxu0 %v2561
        %v3306 = vpop.f32.mrb[0].mxu0
        %v3307 = vadd.f32 0.0, %v3306
        %v3308 = vpop.f32.mrb[0].mxu0
        %v3309 = vpop.f32.mrb[0].mxu0
        %v3310 = vadd.f32 0.0, %v3309
        %v3311 = vpop.f32.mrb[0].mxu0
        %3312 = vmatprep.mubr.bf16.mxu0 %v2571
        %3313 = vmatmul.mubr.bf16.gmra.mrb[0].mxu0 %v2570
        %v3314 = vpop.f32.mrb[0].mxu0
        %v3315 = vadd.f32 0.0, %v3314
        %v3316 = vpop.f32.mrb[0].mxu0
        %v3317 = vpop.f32.mrb[0].mxu0
        %v3318 = vadd.f32 0.0, %v3317
        %v3319 = vpop.f32.mrb[0].mxu0
        %3320 = vmatprep.mubr.bf16.mxu0 %v2580
        %3321 = vmatmul.mubr.bf16.gmra.mrb[0].mxu0 %v2579
        %v3322 = vpop.f32.mrb[0].mxu0
        %v3323 = vadd.f32 0.0, %v3322
        %v3324 = vpop.f32.mrb[0].mxu0
        %v3325 = vpop.f32.mrb[0].mxu0
        %v3326 = vadd.f32 0.0, %v3325
        %v3327 = vpop.f32.mrb[0].mxu0
        %3328 = vmatprep.mubr.bf16.mxu0 %v2589
        %3329 = vmatmul.mubr.bf16.gmra.mrb[0].mxu0 %v2588
        %v3330 = vpop.f32.mrb[0].mxu0
        %v3331 = vadd.f32 0.0, %v3330
        %v3332 = vpop.f32.mrb[0].mxu0
        %v3333 = vpop.f32.mrb[0].mxu0
        %v3334 = vadd.f32 0.0, %v3333
        %v3335 = vpop.f32.mrb[0].mxu0
        %3336 = vmatprep.mubr.bf16.mxu0 %v2598
        %3337 = vmatmul.mubr.bf16.gmra.mrb[0].mxu0 %v2597
        %v3338 = vpop.f32.mrb[0].mxu0
        %v3339 = vadd.f32 0.0, %v3338
        %v3340 = vpop.f32.mrb[0].mxu0
        %v3341 = vpop.f32.mrb[0].mxu0
        %v3342 = vadd.f32 0.0, %v3341
        %v3343 = vpop.f32.mrb[0].mxu0
        %3344 = vmatprep.mubr.bf16.mxu0 %v2607
        %3345 = vmatmul.mubr.bf16.gmra.mrb[0].mxu0 %v2606
        %v3346 = vpop.f32.mrb[0].mxu0
        %v3347 = vadd.f32 0.0, %v3346
        %v3348 = vpop.f32.mrb[0].mxu0
        %v3349 = vpop.f32.mrb[0].mxu0
        %v3350 = vadd.f32 0.0, %v3349
        %v3351 = vpop.f32.mrb[0].mxu0
        %3352 = vmatprep.mubr.bf16.mxu0 %v2616
        %3353 = vmatmul.mubr.bf16.gmra.mrb[0].mxu0 %v2615
        %v3354 = vpop.f32.mrb[0].mxu0
        %v3355 = vadd.f32 0.0, %v3354
        %v3356 = vpop.f32.mrb[0].mxu0
        %v3357 = vpop.f32.mrb[0].mxu0
        %v3358 = vadd.f32 0.0, %v3357
        %v3359 = vpop.f32.mrb[0].mxu0
        %3360 = vdwg.mxu0
        %3361 = vmatprep.subr.bf16.mxu0 0
        %3362 = vmatpush1.bf16.msra.mxu0 %v3072
        %3363 = vmatprep.subr.bf16.mxu0 0
        %3364 = vmatpush1.bf16.msra.mxu0 %v3073
        %3365 = vmatprep.subr.bf16.mxu0 0
        %3366 = vmatpush1.bf16.msra.mxu0 %v3074
        %3367 = vmatprep.subr.bf16.mxu0 0
        %3368 = vmatpush1.bf16.msra.mxu0 %v3075
        %3369 = vmatprep.subr.bf16.mxu0 0
        %3370 = vmatpush1.bf16.msra.mxu0 %v3076
        %3371 = vmatprep.subr.bf16.mxu0 0
        %3372 = vmatpush1.bf16.msra.mxu0 %v3077
        %3373 = vmatprep.subr.bf16.mxu0 0
        %3374 = vmatpush1.bf16.msra.mxu0 %v3078
        %3375 = vmatprep.subr.bf16.mxu0 0
        %3376 = vmatpush1.bf16.msra.mxu0 %v3079
        %3377 = vmatprep.subr.bf16.mxu0 0
        %3378 = vmatpush1.bf16.msra.mxu0 %v3080
        %3379 = vmatprep.subr.bf16.mxu0 0
        %3380 = vmatpush1.bf16.msra.mxu0 %v3081
        %3381 = vmatprep.subr.bf16.mxu0 0
        %3382 = vmatpush1.bf16.msra.mxu0 %v3082
        %3383 = vmatprep.subr.bf16.mxu0 0
        %3384 = vmatpush1.bf16.msra.mxu0 %v3083
        %3385 = vmatprep.subr.bf16.mxu0 0
        %3386 = vmatpush1.bf16.msra.mxu0 %v3084
        %3387 = vmatprep.subr.bf16.mxu0 0
        %3388 = vmatpush1.bf16.msra.mxu0 %v3085
        %3389 = vmatprep.subr.bf16.mxu0 0
        %3390 = vmatpush1.bf16.msra.mxu0 %v3086
        %3391 = vmatprep.subr.bf16.mxu0 0
        %3392 = vmatpush1.bf16.msra.mxu0 %v3087
        %3393 = vmatprep.mubr.bf16.mxu0 %v2483
        %3394 = vmatmul.mubr.bf16.gmra.mrb[0].mxu0 %v2482
        %v3395 = vpop.f32.mrb[0].mxu0
        %v3396 = vadd.f32 %v3235, %v3395
        %v3397 = vpop.f32.mrb[0].mxu0
        %v3398 = vpop.f32.mrb[0].mxu0
        %v3399 = vadd.f32 %v3238, %v3398
        %v3400 = vpop.f32.mrb[0].mxu0
        %3401 = vmatprep.mubr.bf16.mxu0 %v2492
        %3402 = vmatmul.mubr.bf16.gmra.mrb[0].mxu0 %v2491
        %v3403 = vpop.f32.mrb[0].mxu0
        %v3404 = vadd.f32 %v3243, %v3403
        %v3405 = vpop.f32.mrb[0].mxu0
        %v3406 = vpop.f32.mrb[0].mxu0
        %v3407 = vadd.f32 %v3246, %v3406
        %v3408 = vpop.f32.mrb[0].mxu0
        %3409 = vmatprep.mubr.bf16.mxu0 %v2501
        %3410 = vmatmul.mubr.bf16.gmra.mrb[0].mxu0 %v2500
        %v3411 = vpop.f32.mrb[0].mxu0
        %v3412 = vadd.f32 %v3251, %v3411
        %v3413 = vpop.f32.mrb[0].mxu0
        %v3414 = vpop.f32.mrb[0].mxu0
        %v3415 = vadd.f32 %v3254, %v3414
        %v3416 = vpop.f32.mrb[0].mxu0
        %3417 = vmatprep.mubr.bf16.mxu0 %v2510
        %3418 = vmatmul.mubr.bf16.gmra.mrb[0].mxu0 %v2509
        %v3419 = vpop.f32.mrb[0].mxu0
        %v3420 = vadd.f32 %v3259, %v3419
        %v3421 = vpop.f32.mrb[0].mxu0
        %v3422 = vpop.f32.mrb[0].mxu0
        %v3423 = vadd.f32 %v3262, %v3422
        %v3424 = vpop.f32.mrb[0].mxu0
        %3425 = vmatprep.mubr.bf16.mxu0 %v2519
        %3426 = vmatmul.mubr.bf16.gmra.mrb[0].mxu0 %v2518
        %v3427 = vpop.f32.mrb[0].mxu0
        %v3428 = vadd.f32 %v3267, %v3427
        %v3429 = vpop.f32.mrb[0].mxu0
        %v3430 = vpop.f32.mrb[0].mxu0
        %v3431 = vadd.f32 %v3270, %v3430
        %v3432 = vpop.f32.mrb[0].mxu0
        %3433 = vmatprep.mubr.bf16.mxu0 %v2528
        %3434 = vmatmul.mubr.bf16.gmra.mrb[0].mxu0 %v2527
        %v3435 = vpop.f32.mrb[0].mxu0
        %v3436 = vadd.f32 %v3275, %v3435
        %v3437 = vpop.f32.mrb[0].mxu0
        %v3438 = vpop.f32.mrb[0].mxu0
        %v3439 = vadd.f32 %v3278, %v3438
        %v3440 = vpop.f32.mrb[0].mxu0
        %3441 = vmatprep.mubr.bf16.mxu0 %v2537
        %3442 = vmatmul.mubr.bf16.gmra.mrb[0].mxu0 %v2536
        %v3443 = vpop.f32.mrb[0].mxu0
        %v3444 = vadd.f32 %v3283, %v3443
        %v3445 = vpop.f32.mrb[0].mxu0
        %v3446 = vpop.f32.mrb[0].mxu0
        %v3447 = vadd.f32 %v3286, %v3446
        %v3448 = vpop.f32.mrb[0].mxu0
        %3449 = vmatprep.mubr.bf16.mxu0 %v2546
        %3450 = vmatmul.mubr.bf16.gmra.mrb[0].mxu0 %v2545
        %v3451 = vpop.f32.mrb[0].mxu0
        %v3452 = vadd.f32 %v3291, %v3451
        %v3453 = vpop.f32.mrb[0].mxu0
        %v3454 = vpop.f32.mrb[0].mxu0
        %v3455 = vadd.f32 %v3294, %v3454
        %v3456 = vpop.f32.mrb[0].mxu0
        %3457 = vmatprep.mubr.bf16.mxu0 %v2555
        %3458 = vmatmul.mubr.bf16.gmra.mrb[0].mxu0 %v2554
        %v3459 = vpop.f32.mrb[0].mxu0
        %v3460 = vadd.f32 %v3299, %v3459
        %v3461 = vpop.f32.mrb[0].mxu0
        %v3462 = vpop.f32.mrb[0].mxu0
        %v3463 = vadd.f32 %v3302, %v3462
        %v3464 = vpop.f32.mrb[0].mxu0
        %3465 = vmatprep.mubr.bf16.mxu0 %v2564
        %3466 = vmatmul.mubr.bf16.gmra.mrb[0].mxu0 %v2563
        %v3467 = vpop.f32.mrb[0].mxu0
        %v3468 = vadd.f32 %v3307, %v3467
        %v3469 = vpop.f32.mrb[0].mxu0
        %v3470 = vpop.f32.mrb[0].mxu0
        %v3471 = vadd.f32 %v3310, %v3470
        %v3472 = vpop.f32.mrb[0].mxu0
        %3473 = vmatprep.mubr.bf16.mxu0 %v2573
        %3474 = vmatmul.mubr.bf16.gmra.mrb[0].mxu0 %v2572
        %v3475 = vpop.f32.mrb[0].mxu0
        %v3476 = vadd.f32 %v3315, %v3475
        %v3477 = vpop.f32.mrb[0].mxu0
        %v3478 = vpop.f32.mrb[0].mxu0
        %v3479 = vadd.f32 %v3318, %v3478
        %v3480 = vpop.f32.mrb[0].mxu0
        %3481 = vmatprep.mubr.bf16.mxu0 %v2582
        %3482 = vmatmul.mubr.bf16.gmra.mrb[0].mxu0 %v2581
        %v3483 = vpop.f32.mrb[0].mxu0
        %v3484 = vadd.f32 %v3323, %v3483
        %v3485 = vpop.f32.mrb[0].mxu0
        %v3486 = vpop.f32.mrb[0].mxu0
        %v3487 = vadd.f32 %v3326, %v3486
        %v3488 = vpop.f32.mrb[0].mxu0
        %3489 = vmatprep.mubr.bf16.mxu0 %v2591
        %3490 = vmatmul.mubr.bf16.gmra.mrb[0].mxu0 %v2590
        %v3491 = vpop.f32.mrb[0].mxu0
        %v3492 = vadd.f32 %v3331, %v3491
        %v3493 = vpop.f32.mrb[0].mxu0
        %v3494 = vpop.f32.mrb[0].mxu0
        %v3495 = vadd.f32 %v3334, %v3494
        %v3496 = vpop.f32.mrb[0].mxu0
        %3497 = vmatprep.mubr.bf16.mxu0 %v2600
        %3498 = vmatmul.mubr.bf16.gmra.mrb[0].mxu0 %v2599
        %v3499 = vpop.f32.mrb[0].mxu0
        %v3500 = vadd.f32 %v3339, %v3499
        %v3501 = vpop.f32.mrb[0].mxu0
        %v3502 = vpop.f32.mrb[0].mxu0
        %v3503 = vadd.f32 %v3342, %v3502
        %v3504 = vpop.f32.mrb[0].mxu0
        %3505 = vmatprep.mubr.bf16.mxu0 %v2609
        %3506 = vmatmul.mubr.bf16.gmra.mrb[0].mxu0 %v2608
        %v3507 = vpop.f32.mrb[0].mxu0
        %v3508 = vadd.f32 %v3347, %v3507
        %v3509 = vpop.f32.mrb[0].mxu0
        %v3510 = vpop.f32.mrb[0].mxu0
        %v3511 = vadd.f32 %v3350, %v3510
        %v3512 = vpop.f32.mrb[0].mxu0
        %3513 = vmatprep.mubr.bf16.mxu0 %v2618
        %3514 = vmatmul.mubr.bf16.gmra.mrb[0].mxu0 %v2617
        %v3515 = vpop.f32.mrb[0].mxu0
        %v3516 = vadd.f32 %v3355, %v3515
        %v3517 = vpop.f32.mrb[0].mxu0
        %v3518 = vpop.f32.mrb[0].mxu0
        %v3519 = vadd.f32 %v3358, %v3518
        %v3520 = vpop.f32.mrb[0].mxu0
        %3521 = vdwg.mxu0
        %3522 = vmatprep.subr.bf16.mxu0 0
        %3523 = vmatpush1.bf16.msra.mxu0 %v3088
        %3524 = vmatprep.subr.bf16.mxu0 0
        %3525 = vmatpush1.bf16.msra.mxu0 %v3089
        %3526 = vmatprep.subr.bf16.mxu0 0
        %3527 = vmatpush1.bf16.msra.mxu0 %v3090
        %3528 = vmatprep.subr.bf16.mxu0 0
        %3529 = vmatpush1.bf16.msra.mxu0 %v3091
        %3530 = vmatprep.subr.bf16.mxu0 0
        %3531 = vmatpush1.bf16.msra.mxu0 %v3092
        %3532 = vmatprep.subr.bf16.mxu0 0
        %3533 = vmatpush1.bf16.msra.mxu0 %v3093
        %3534 = vmatprep.subr.bf16.mxu0 0
        %3535 = vmatpush1.bf16.msra.mxu0 %v3094
        %3536 = vmatprep.subr.bf16.mxu0 0
        %3537 = vmatpush1.bf16.msra.mxu0 %v3095
        %3538 = vmatprep.subr.bf16.mxu0 0
        %3539 = vmatpush1.bf16.msra.mxu0 %v3096
        %3540 = vmatprep.subr.bf16.mxu0 0
        %3541 = vmatpush1.bf16.msra.mxu0 %v3097
        %3542 = vmatprep.subr.bf16.mxu0 0
        %3543 = vmatpush1.bf16.msra.mxu0 %v3098
        %3544 = vmatprep.subr.bf16.mxu0 0
        %3545 = vmatpush1.bf16.msra.mxu0 %v3099
        %3546 = vmatprep.subr.bf16.mxu0 0
        %3547 = vmatpush1.bf16.msra.mxu0 %v3100
        %3548 = vmatprep.subr.bf16.mxu0 0
        %3549 = vmatpush1.bf16.msra.mxu0 %v3101
        %3550 = vmatprep.subr.bf16.mxu0 0
        %3551 = vmatpush1.bf16.msra.mxu0 %v3102
        %3552 = vmatprep.subr.bf16.mxu0 0
        %3553 = vmatpush1.bf16.msra.mxu0 %v3103
        %3554 = vmatprep.mubr.bf16.mxu0 %v2485
        %3555 = vmatmul.mubr.bf16.gmra.mrb[0].mxu0 %v2484
        %v3556 = vpop.f32.mrb[0].mxu0
        %v3557 = vadd.f32 %v3396, %v3556
        %v3558 = vpop.f32.mrb[0].mxu0
        %v3559 = vpop.f32.mrb[0].mxu0
        %v3560 = vadd.f32 %v3399, %v3559
        %v3561 = vpop.f32.mrb[0].mxu0
        %3562 = vmatprep.mubr.bf16.mxu0 %v2494
        %3563 = vmatmul.mubr.bf16.gmra.mrb[0].mxu0 %v2493
        %v3564 = vpop.f32.mrb[0].mxu0
        %v3565 = vadd.f32 %v3404, %v3564
        %v3566 = vpop.f32.mrb[0].mxu0
        %v3567 = vpop.f32.mrb[0].mxu0
        %v3568 = vadd.f32 %v3407, %v3567
        %v3569 = vpop.f32.mrb[0].mxu0
        %3570 = vmatprep.mubr.bf16.mxu0 %v2503
        %3571 = vmatmul.mubr.bf16.gmra.mrb[0].mxu0 %v2502
        %v3572 = vpop.f32.mrb[0].mxu0
        %v3573 = vadd.f32 %v3412, %v3572
        %v3574 = vpop.f32.mrb[0].mxu0
        %v3575 = vpop.f32.mrb[0].mxu0
        %v3576 = vadd.f32 %v3415, %v3575
        %v3577 = vpop.f32.mrb[0].mxu0
        %3578 = vmatprep.mubr.bf16.mxu0 %v2512
        %3579 = vmatmul.mubr.bf16.gmra.mrb[0].mxu0 %v2511
        %v3580 = vpop.f32.mrb[0].mxu0
        %v3581 = vadd.f32 %v3420, %v3580
        %v3582 = vpop.f32.mrb[0].mxu0
        %v3583 = vpop.f32.mrb[0].mxu0
        %v3584 = vadd.f32 %v3423, %v3583
        %v3585 = vpop.f32.mrb[0].mxu0
        %3586 = vmatprep.mubr.bf16.mxu0 %v2521
        %3587 = vmatmul.mubr.bf16.gmra.mrb[0].mxu0 %v2520
        %v3588 = vpop.f32.mrb[0].mxu0
        %v3589 = vadd.f32 %v3428, %v3588
        %v3590 = vpop.f32.mrb[0].mxu0
        %v3591 = vpop.f32.mrb[0].mxu0
        %v3592 = vadd.f32 %v3431, %v3591
        %v3593 = vpop.f32.mrb[0].mxu0
        %3594 = vmatprep.mubr.bf16.mxu0 %v2530
        %3595 = vmatmul.mubr.bf16.gmra.mrb[0].mxu0 %v2529
        %v3596 = vpop.f32.mrb[0].mxu0
        %v3597 = vadd.f32 %v3436, %v3596
        %v3598 = vpop.f32.mrb[0].mxu0
        %v3599 = vpop.f32.mrb[0].mxu0
        %v3600 = vadd.f32 %v3439, %v3599
        %v3601 = vpop.f32.mrb[0].mxu0
        %3602 = vmatprep.mubr.bf16.mxu0 %v2539
        %3603 = vmatmul.mubr.bf16.gmra.mrb[0].mxu0 %v2538
        %v3604 = vpop.f32.mrb[0].mxu0
        %v3605 = vadd.f32 %v3444, %v3604
        %v3606 = vpop.f32.mrb[0].mxu0
        %v3607 = vpop.f32.mrb[0].mxu0
        %v3608 = vadd.f32 %v3447, %v3607
        %v3609 = vpop.f32.mrb[0].mxu0
        %3610 = vmatprep.mubr.bf16.mxu0 %v2548
        %3611 = vmatmul.mubr.bf16.gmra.mrb[0].mxu0 %v2547
        %v3612 = vpop.f32.mrb[0].mxu0
        %v3613 = vadd.f32 %v3452, %v3612
        %v3614 = vpop.f32.mrb[0].mxu0
        %v3615 = vpop.f32.mrb[0].mxu0
        %v3616 = vadd.f32 %v3455, %v3615
        %v3617 = vpop.f32.mrb[0].mxu0
        %3618 = vmatprep.mubr.bf16.mxu0 %v2557
        %3619 = vmatmul.mubr.bf16.gmra.mrb[0].mxu0 %v2556
        %v3620 = vpop.f32.mrb[0].mxu0
        %v3621 = vadd.f32 %v3460, %v3620
        %v3622 = vpop.f32.mrb[0].mxu0
        %v3623 = vpop.f32.mrb[0].mxu0
        %v3624 = vadd.f32 %v3463, %v3623
        %v3625 = vpop.f32.mrb[0].mxu0
        %3626 = vmatprep.mubr.bf16.mxu0 %v2566
        %3627 = vmatmul.mubr.bf16.gmra.mrb[0].mxu0 %v2565
        %v3628 = vpop.f32.mrb[0].mxu0
        %v3629 = vadd.f32 %v3468, %v3628
        %v3630 = vpop.f32.mrb[0].mxu0
        %v3631 = vpop.f32.mrb[0].mxu0
        %v3632 = vadd.f32 %v3471, %v3631
        %v3633 = vpop.f32.mrb[0].mxu0
        %3634 = vmatprep.mubr.bf16.mxu0 %v2575
        %3635 = vmatmul.mubr.bf16.gmra.mrb[0].mxu0 %v2574
        %v3636 = vpop.f32.mrb[0].mxu0
        %v3637 = vadd.f32 %v3476, %v3636
        %v3638 = vpop.f32.mrb[0].mxu0
        %v3639 = vpop.f32.mrb[0].mxu0
        %v3640 = vadd.f32 %v3479, %v3639
        %v3641 = vpop.f32.mrb[0].mxu0
        %3642 = vmatprep.mubr.bf16.mxu0 %v2584
        %3643 = vmatmul.mubr.bf16.gmra.mrb[0].mxu0 %v2583
        %v3644 = vpop.f32.mrb[0].mxu0
        %v3645 = vadd.f32 %v3484, %v3644
        %v3646 = vpop.f32.mrb[0].mxu0
        %v3647 = vpop.f32.mrb[0].mxu0
        %v3648 = vadd.f32 %v3487, %v3647
        %v3649 = vpop.f32.mrb[0].mxu0
        %3650 = vmatprep.mubr.bf16.mxu0 %v2593
        %3651 = vmatmul.mubr.bf16.gmra.mrb[0].mxu0 %v2592
        %v3652 = vpop.f32.mrb[0].mxu0
        %v3653 = vadd.f32 %v3492, %v3652
        %v3654 = vpop.f32.mrb[0].mxu0
        %v3655 = vpop.f32.mrb[0].mxu0
        %v3656 = vadd.f32 %v3495, %v3655
        %v3657 = vpop.f32.mrb[0].mxu0
        %3658 = vmatprep.mubr.bf16.mxu0 %v2602
        %3659 = vmatmul.mubr.bf16.gmra.mrb[0].mxu0 %v2601
        %v3660 = vpop.f32.mrb[0].mxu0
        %v3661 = vadd.f32 %v3500, %v3660
        %v3662 = vpop.f32.mrb[0].mxu0
        %v3663 = vpop.f32.mrb[0].mxu0
        %v3664 = vadd.f32 %v3503, %v3663
        %v3665 = vpop.f32.mrb[0].mxu0
        %3666 = vmatprep.mubr.bf16.mxu0 %v2611
        %3667 = vmatmul.mubr.bf16.gmra.mrb[0].mxu0 %v2610
        %v3668 = vpop.f32.mrb[0].mxu0
        %v3669 = vadd.f32 %v3508, %v3668
        %v3670 = vpop.f32.mrb[0].mxu0
        %v3671 = vpop.f32.mrb[0].mxu0
        %v3672 = vadd.f32 %v3511, %v3671
        %v3673 = vpop.f32.mrb[0].mxu0
        %3674 = vmatprep.mubr.bf16.mxu0 %v2620
        %3675 = vmatmul.mubr.bf16.gmra.mrb[0].mxu0 %v2619
        %v3676 = vpop.f32.mrb[0].mxu0
        %v3677 = vadd.f32 %v3516, %v3676
        %v3678 = vpop.f32.mrb[0].mxu0
        %v3679 = vpop.f32.mrb[0].mxu0
        %v3680 = vadd.f32 %v3519, %v3679
        %v3681 = vpop.f32.mrb[0].mxu0
        %3682 = vdwg.mxu0
        %3683 = vmatprep.subr.bf16.mxu0 0
        %3684 = vmatpush1.bf16.msra.mxu0 %v3104
        %3685 = vmatprep.subr.bf16.mxu0 0
        %3686 = vmatpush1.bf16.msra.mxu0 %v3105
        %3687 = vmatprep.subr.bf16.mxu0 0
        %3688 = vmatpush1.bf16.msra.mxu0 %v3106
        %3689 = vmatprep.subr.bf16.mxu0 0
        %3690 = vmatpush1.bf16.msra.mxu0 %v3107
        %3691 = vmatprep.subr.bf16.mxu0 0
        %3692 = vmatpush1.bf16.msra.mxu0 %v3108
        %3693 = vmatprep.subr.bf16.mxu0 0
        %3694 = vmatpush1.bf16.msra.mxu0 %v3109
        %3695 = vmatprep.subr.bf16.mxu0 0
        %3696 = vmatpush1.bf16.msra.mxu0 %v3110
        %3697 = vmatprep.subr.bf16.mxu0 0
        %3698 = vmatpush1.bf16.msra.mxu0 %v3111
        %3699 = vmatprep.subr.bf16.mxu0 0
        %3700 = vmatpush1.bf16.msra.mxu0 %v3112
        %3701 = vmatprep.subr.bf16.mxu0 0
        %3702 = vmatpush1.bf16.msra.mxu0 %v3113
        %3703 = vmatprep.subr.bf16.mxu0 0
        %3704 = vmatpush1.bf16.msra.mxu0 %v3114
        %3705 = vmatprep.subr.bf16.mxu0 0
        %3706 = vmatpush1.bf16.msra.mxu0 %v3115
        %3707 = vmatprep.subr.bf16.mxu0 0
        %3708 = vmatpush1.bf16.msra.mxu0 %v3116
        %3709 = vmatprep.subr.bf16.mxu0 0
        %3710 = vmatpush1.bf16.msra.mxu0 %v3117
        %3711 = vmatprep.subr.bf16.mxu0 0
        %3712 = vmatpush1.bf16.msra.mxu0 %v3118
        %3713 = vmatprep.subr.bf16.mxu0 0
        %3714 = vmatpush1.bf16.msra.mxu0 %v3119
        %3715 = vmatprep.mubr.bf16.mxu0 %v2487
        %3716 = vmatmul.mubr.bf16.gmra.mrb[0].mxu0 %v2486
        %v3717 = vpop.f32.mrb[0].mxu0
        %v3718 = vadd.f32 %v3557, %v3717
        %v3719 = vpop.f32.mrb[0].mxu0
        %v3720 = vpop.f32.mrb[0].mxu0
        %v3721 = vadd.f32 %v3560, %v3720
        %v3722 = vpop.f32.mrb[0].mxu0
        %3723 = vmatprep.mubr.bf16.mxu0 %v2496
        %3724 = vmatmul.mubr.bf16.gmra.mrb[0].mxu0 %v2495
        %v3725 = vpop.f32.mrb[0].mxu0
        %v3726 = vadd.f32 %v3565, %v3725
        %v3727 = vpop.f32.mrb[0].mxu0
        %v3728 = vpop.f32.mrb[0].mxu0
        %v3729 = vadd.f32 %v3568, %v3728
        %v3730 = vpop.f32.mrb[0].mxu0
        %3731 = vmatprep.mubr.bf16.mxu0 %v2505
        %3732 = vmatmul.mubr.bf16.gmra.mrb[0].mxu0 %v2504
        %v3733 = vpop.f32.mrb[0].mxu0
        %v3734 = vadd.f32 %v3573, %v3733
        %v3735 = vpop.f32.mrb[0].mxu0
        %v3736 = vpop.f32.mrb[0].mxu0
        %v3737 = vadd.f32 %v3576, %v3736
        %v3738 = vpop.f32.mrb[0].mxu0
        %3739 = vmatprep.mubr.bf16.mxu0 %v2514
        %3740 = vmatmul.mubr.bf16.gmra.mrb[0].mxu0 %v2513
        %v3741 = vpop.f32.mrb[0].mxu0
        %v3742 = vadd.f32 %v3581, %v3741
        %v3743 = vpop.f32.mrb[0].mxu0
        %v3744 = vpop.f32.mrb[0].mxu0
        %v3745 = vadd.f32 %v3584, %v3744
        %v3746 = vpop.f32.mrb[0].mxu0
        %3747 = vmatprep.mubr.bf16.mxu0 %v2523
        %3748 = vmatmul.mubr.bf16.gmra.mrb[0].mxu0 %v2522
        %v3749 = vpop.f32.mrb[0].mxu0
        %v3750 = vadd.f32 %v3589, %v3749
        %v3751 = vpop.f32.mrb[0].mxu0
        %v3752 = vpop.f32.mrb[0].mxu0
        %v3753 = vadd.f32 %v3592, %v3752
        %v3754 = vpop.f32.mrb[0].mxu0
        %3755 = vmatprep.mubr.bf16.mxu0 %v2532
        %3756 = vmatmul.mubr.bf16.gmra.mrb[0].mxu0 %v2531
        %v3757 = vpop.f32.mrb[0].mxu0
        %v3758 = vadd.f32 %v3597, %v3757
        %v3759 = vpop.f32.mrb[0].mxu0
        %v3760 = vpop.f32.mrb[0].mxu0
        %v3761 = vadd.f32 %v3600, %v3760
        %v3762 = vpop.f32.mrb[0].mxu0
        %3763 = vmatprep.mubr.bf16.mxu0 %v2541
        %3764 = vmatmul.mubr.bf16.gmra.mrb[0].mxu0 %v2540
        %v3765 = vpop.f32.mrb[0].mxu0
        %v3766 = vadd.f32 %v3605, %v3765
        %v3767 = vpop.f32.mrb[0].mxu0
        %v3768 = vpop.f32.mrb[0].mxu0
        %v3769 = vadd.f32 %v3608, %v3768
        %v3770 = vpop.f32.mrb[0].mxu0
        %3771 = vmatprep.mubr.bf16.mxu0 %v2550
        %3772 = vmatmul.mubr.bf16.gmra.mrb[0].mxu0 %v2549
        %v3773 = vpop.f32.mrb[0].mxu0
        %v3774 = vadd.f32 %v3613, %v3773
        %v3775 = vpop.f32.mrb[0].mxu0
        %v3776 = vpop.f32.mrb[0].mxu0
        %v3777 = vadd.f32 %v3616, %v3776
        %v3778 = vpop.f32.mrb[0].mxu0
        %3779 = vmatprep.mubr.bf16.mxu0 %v2559
        %3780 = vmatmul.mubr.bf16.gmra.mrb[0].mxu0 %v2558
        %v3781 = vpop.f32.mrb[0].mxu0
        %v3782 = vadd.f32 %v3621, %v3781
        %v3783 = vpop.f32.mrb[0].mxu0
        %v3784 = vpop.f32.mrb[0].mxu0
        %v3785 = vadd.f32 %v3624, %v3784
        %v3786 = vpop.f32.mrb[0].mxu0
        %3787 = vmatprep.mubr.bf16.mxu0 %v2568
        %3788 = vmatmul.mubr.bf16.gmra.mrb[0].mxu0 %v2567
        %v3789 = vpop.f32.mrb[0].mxu0
        %v3790 = vadd.f32 %v3629, %v3789
        %v3791 = vpop.f32.mrb[0].mxu0
        %v3792 = vpop.f32.mrb[0].mxu0
        %v3793 = vadd.f32 %v3632, %v3792
        %v3794 = vpop.f32.mrb[0].mxu0
        %3795 = vmatprep.mubr.bf16.mxu0 %v2577
        %3796 = vmatmul.mubr.bf16.gmra.mrb[0].mxu0 %v2576
        %v3797 = vpop.f32.mrb[0].mxu0
        %v3798 = vadd.f32 %v3637, %v3797
        %v3799 = vpop.f32.mrb[0].mxu0
        %v3800 = vpop.f32.mrb[0].mxu0
        %v3801 = vadd.f32 %v3640, %v3800
        %v3802 = vpop.f32.mrb[0].mxu0
        %3803 = vmatprep.mubr.bf16.mxu0 %v2586
        %3804 = vmatmul.mubr.bf16.gmra.mrb[0].mxu0 %v2585
        %v3805 = vpop.f32.mrb[0].mxu0
        %v3806 = vadd.f32 %v3645, %v3805
        %v3807 = vpop.f32.mrb[0].mxu0
        %v3808 = vpop.f32.mrb[0].mxu0
        %v3809 = vadd.f32 %v3648, %v3808
        %v3810 = vpop.f32.mrb[0].mxu0
        %3811 = vmatprep.mubr.bf16.mxu0 %v2595
        %3812 = vmatmul.mubr.bf16.gmra.mrb[0].mxu0 %v2594
        %v3813 = vpop.f32.mrb[0].mxu0
        %v3814 = vadd.f32 %v3653, %v3813
        %v3815 = vpop.f32.mrb[0].mxu0
        %v3816 = vpop.f32.mrb[0].mxu0
        %v3817 = vadd.f32 %v3656, %v3816
        %v3818 = vpop.f32.mrb[0].mxu0
        %3819 = vmatprep.mubr.bf16.mxu0 %v2604
        %3820 = vmatmul.mubr.bf16.gmra.mrb[0].mxu0 %v2603
        %v3821 = vpop.f32.mrb[0].mxu0
        %v3822 = vadd.f32 %v3661, %v3821
        %v3823 = vpop.f32.mrb[0].mxu0
        %v3824 = vpop.f32.mrb[0].mxu0
        %v3825 = vadd.f32 %v3664, %v3824
        %v3826 = vpop.f32.mrb[0].mxu0
        %3827 = vmatprep.mubr.bf16.mxu0 %v2613
        %3828 = vmatmul.mubr.bf16.gmra.mrb[0].mxu0 %v2612
        %v3829 = vpop.f32.mrb[0].mxu0
        %v3830 = vadd.f32 %v3669, %v3829
        %v3831 = vpop.f32.mrb[0].mxu0
        %v3832 = vpop.f32.mrb[0].mxu0
        %v3833 = vadd.f32 %v3672, %v3832
        %v3834 = vpop.f32.mrb[0].mxu0
        %3835 = vmatprep.mubr.bf16.mxu0 %v2622
        %3836 = vmatmul.mubr.bf16.gmra.mrb[0].mxu0 %v2621
        %v3837 = vpop.f32.mrb[0].mxu0
        %v3838 = vadd.f32 %v3677, %v3837
        %v3839 = vpop.f32.mrb[0].mxu0
        %v3840 = vpop.f32.mrb[0].mxu0
        %v3841 = vadd.f32 %v3680, %v3840
        %v3842 = vpop.f32.mrb[0].mxu0
        %3843 = vdwg.mxu0
        %3844 = vmatprep.subr.bf16.mxu0 0
        %3845 = vmatpush1.bf16.msra.mxu0 %v3120
        %3846 = vmatprep.subr.bf16.mxu0 0
        %3847 = vmatpush1.bf16.msra.mxu0 %v3121
        %3848 = vmatprep.subr.bf16.mxu0 0
        %3849 = vmatpush1.bf16.msra.mxu0 %v3122
        %3850 = vmatprep.subr.bf16.mxu0 0
        %3851 = vmatpush1.bf16.msra.mxu0 %v3123
        %3852 = vmatprep.subr.bf16.mxu0 0
        %3853 = vmatpush1.bf16.msra.mxu0 %v3124
        %3854 = vmatprep.subr.bf16.mxu0 0
        %3855 = vmatpush1.bf16.msra.mxu0 %v3125
        %3856 = vmatprep.subr.bf16.mxu0 0
        %3857 = vmatpush1.bf16.msra.mxu0 %v3126
        %3858 = vmatprep.subr.bf16.mxu0 0
        %3859 = vmatpush1.bf16.msra.mxu0 %v3127
        %3860 = vmatprep.subr.bf16.mxu0 0
        %3861 = vmatpush1.bf16.msra.mxu0 0
        %3862 = vmatprep.subr.bf16.mxu0 0
        %3863 = vmatpush1.bf16.msra.mxu0 0
        %3864 = vmatprep.subr.bf16.mxu0 0
        %3865 = vmatpush1.bf16.msra.mxu0 0
        %3866 = vmatprep.subr.bf16.mxu0 0
        %3867 = vmatpush1.bf16.msra.mxu0 0
        %3868 = vmatprep.subr.bf16.mxu0 0
        %3869 = vmatpush1.bf16.msra.mxu0 0
        %3870 = vmatprep.subr.bf16.mxu0 0
        %3871 = vmatpush1.bf16.msra.mxu0 0
        %3872 = vmatprep.subr.bf16.mxu0 0
        %3873 = vmatpush1.bf16.msra.mxu0 0
        %3874 = vmatprep.subr.bf16.mxu0 0
        %3875 = vmatpush1.bf16.msra.mxu0 0
        %3876 = vmatprep.mubr.bf16.mxu0 0
        %3877 = vmatmul.mubr.bf16.gmra.mrb[0].mxu0 %v2488
        %v3878 = vpop.f32.mrb[0].mxu0
        %v3879 = vadd.f32 %v3718, %v3878
        %v3880 = vpop.f32.mrb[0].mxu0
        %v3881 = vpop.f32.mrb[0].mxu0
        %v3882 = vadd.f32 %v3721, %v3881
        %v3883 = vpop.f32.mrb[0].mxu0
        %3884 = vmatprep.mubr.bf16.mxu0 0
        %3885 = vmatmul.mubr.bf16.gmra.mrb[0].mxu0 %v2497
        %v3886 = vpop.f32.mrb[0].mxu0
        %v3887 = vadd.f32 %v3726, %v3886
        %v3888 = vpop.f32.mrb[0].mxu0
        %v3889 = vpop.f32.mrb[0].mxu0
        %v3890 = vadd.f32 %v3729, %v3889
        %v3891 = vpop.f32.mrb[0].mxu0
        %3892 = vmatprep.mubr.bf16.mxu0 0
        %3893 = vmatmul.mubr.bf16.gmra.mrb[0].mxu0 %v2506
        %v3894 = vpop.f32.mrb[0].mxu0
        %v3895 = vadd.f32 %v3734, %v3894
        %v3896 = vpop.f32.mrb[0].mxu0
        %v3897 = vpop.f32.mrb[0].mxu0
        %v3898 = vadd.f32 %v3737, %v3897
        %v3899 = vpop.f32.mrb[0].mxu0
        %3900 = vmatprep.mubr.bf16.mxu0 0
        %3901 = vmatmul.mubr.bf16.gmra.mrb[0].mxu0 %v2515
        %v3902 = vpop.f32.mrb[0].mxu0
        %v3903 = vadd.f32 %v3742, %v3902
        %v3904 = vpop.f32.mrb[0].mxu0
        %v3905 = vpop.f32.mrb[0].mxu0
        %v3906 = vadd.f32 %v3745, %v3905
        %v3907 = vpop.f32.mrb[0].mxu0
        %3908 = vmatprep.mubr.bf16.mxu0 0
        %3909 = vmatmul.mubr.bf16.gmra.mrb[0].mxu0 %v2524
        %v3910 = vpop.f32.mrb[0].mxu0
        %v3911 = vadd.f32 %v3750, %v3910
        %v3912 = vpop.f32.mrb[0].mxu0
        %v3913 = vpop.f32.mrb[0].mxu0
        %v3914 = vadd.f32 %v3753, %v3913
        %v3915 = vpop.f32.mrb[0].mxu0
        %3916 = vmatprep.mubr.bf16.mxu0 0
        %3917 = vmatmul.mubr.bf16.gmra.mrb[0].mxu0 %v2533
        %v3918 = vpop.f32.mrb[0].mxu0
        %v3919 = vadd.f32 %v3758, %v3918
        %v3920 = vpop.f32.mrb[0].mxu0
        %v3921 = vpop.f32.mrb[0].mxu0
        %v3922 = vadd.f32 %v3761, %v3921
        %v3923 = vpop.f32.mrb[0].mxu0
        %3924 = vmatprep.mubr.bf16.mxu0 0
        %3925 = vmatmul.mubr.bf16.gmra.mrb[0].mxu0 %v2542
        %v3926 = vpop.f32.mrb[0].mxu0
        %v3927 = vadd.f32 %v3766, %v3926
        %v3928 = vpop.f32.mrb[0].mxu0
        %v3929 = vpop.f32.mrb[0].mxu0
        %v3930 = vadd.f32 %v3769, %v3929
        %v3931 = vpop.f32.mrb[0].mxu0
        %3932 = vmatprep.mubr.bf16.mxu0 0
        %3933 = vmatmul.mubr.bf16.gmra.mrb[0].mxu0 %v2551
        %v3934 = vpop.f32.mrb[0].mxu0
        %v3935 = vadd.f32 %v3774, %v3934
        %v3936 = vpop.f32.mrb[0].mxu0
        %v3937 = vpop.f32.mrb[0].mxu0
        %v3938 = vadd.f32 %v3777, %v3937
        %v3939 = vpop.f32.mrb[0].mxu0
        %3940 = vmatprep.mubr.bf16.mxu0 0
        %3941 = vmatmul.mubr.bf16.gmra.mrb[0].mxu0 %v2560
        %v3942 = vpop.f32.mrb[0].mxu0
        %v3943 = vadd.f32 %v3782, %v3942
        %v3944 = vpop.f32.mrb[0].mxu0
        %v3945 = vpop.f32.mrb[0].mxu0
        %v3946 = vadd.f32 %v3785, %v3945
        %v3947 = vpop.f32.mrb[0].mxu0
        %3948 = vmatprep.mubr.bf16.mxu0 0
        %3949 = vmatmul.mubr.bf16.gmra.mrb[0].mxu0 %v2569
        %v3950 = vpop.f32.mrb[0].mxu0
        %v3951 = vadd.f32 %v3790, %v3950
        %v3952 = vpop.f32.mrb[0].mxu0
        %v3953 = vpop.f32.mrb[0].mxu0
        %v3954 = vadd.f32 %v3793, %v3953
        %v3955 = vpop.f32.mrb[0].mxu0
        %3956 = vmatprep.mubr.bf16.mxu0 0
        %3957 = vmatmul.mubr.bf16.gmra.mrb[0].mxu0 %v2578
        %v3958 = vpop.f32.mrb[0].mxu0
        %v3959 = vadd.f32 %v3798, %v3958
        %v3960 = vpop.f32.mrb[0].mxu0
        %v3961 = vpop.f32.mrb[0].mxu0
        %v3962 = vadd.f32 %v3801, %v3961
        %v3963 = vpop.f32.mrb[0].mxu0
        %3964 = vmatprep.mubr.bf16.mxu0 0
        %3965 = vmatmul.mubr.bf16.gmra.mrb[0].mxu0 %v2587
        %v3966 = vpop.f32.mrb[0].mxu0
        %v3967 = vadd.f32 %v3806, %v3966
        %v3968 = vpop.f32.mrb[0].mxu0
        %v3969 = vpop.f32.mrb[0].mxu0
        %v3970 = vadd.f32 %v3809, %v3969
        %v3971 = vpop.f32.mrb[0].mxu0
        %3972 = vmatprep.mubr.bf16.mxu0 0
        %3973 = vmatmul.mubr.bf16.gmra.mrb[0].mxu0 %v2596
        %v3974 = vpop.f32.mrb[0].mxu0
        %v3975 = vadd.f32 %v3814, %v3974
        %v3976 = vpop.f32.mrb[0].mxu0
        %v3977 = vpop.f32.mrb[0].mxu0
        %v3978 = vadd.f32 %v3817, %v3977
        %v3979 = vpop.f32.mrb[0].mxu0
        %3980 = vmatprep.mubr.bf16.mxu0 0
        %3981 = vmatmul.mubr.bf16.gmra.mrb[0].mxu0 %v2605
        %v3982 = vpop.f32.mrb[0].mxu0
        %v3983 = vadd.f32 %v3822, %v3982
        %v3984 = vpop.f32.mrb[0].mxu0
        %v3985 = vpop.f32.mrb[0].mxu0
        %v3986 = vadd.f32 %v3825, %v3985
        %v3987 = vpop.f32.mrb[0].mxu0
        %3988 = vmatprep.mubr.bf16.mxu0 0
        %3989 = vmatmul.mubr.bf16.gmra.mrb[0].mxu0 %v2614
        %v3990 = vpop.f32.mrb[0].mxu0
        %v3991 = vadd.f32 %v3830, %v3990
        %v3992 = vpop.f32.mrb[0].mxu0
        %v3993 = vpop.f32.mrb[0].mxu0
        %v3994 = vadd.f32 %v3833, %v3993
        %v3995 = vpop.f32.mrb[0].mxu0
        %3996 = vmatprep.mubr.bf16.mxu0 0
        %3997 = vmatmul.mubr.bf16.gmra.mrb[0].mxu0 %v2623
        %v3998 = vpop.f32.mrb[0].mxu0
        %v3999 = vadd.f32 %v3838, %v3998
        %v4000 = vpop.f32.mrb[0].mxu0
        %v4001 = vpop.f32.mrb[0].mxu0
        %v4002 = vadd.f32 %v3841, %v4001
        %v4003 = vpop.f32.mrb[0].mxu0
        %4004 = vdwg.mxu0
        %v4005 = vpack.c.bf16 %v3882, %v3879
        %v4006 = vpack.c.bf16 %v3890, %v3887
        %v4007 = vpack.c.bf16 %v3898, %v3895
        %v4008 = vpack.c.bf16 %v3906, %v3903
        %v4009 = vpack.c.bf16 %v3914, %v3911
        %v4010 = vpack.c.bf16 %v3922, %v3919
        %v4011 = vpack.c.bf16 %v3930, %v3927
        %v4012 = vpack.c.bf16 %v3938, %v3935
        %v4013 = vpack.c.bf16 %v3946, %v3943
        %v4014 = vpack.c.bf16 %v3954, %v3951
        %v4015 = vpack.c.bf16 %v3962, %v3959
        %v4016 = vpack.c.bf16 %v3970, %v3967
        %v4017 = vpack.c.bf16 %v3978, %v3975
        %v4018 = vpack.c.bf16 %v3986, %v3983
        %v4019 = vpack.c.bf16 %v3994, %v3991
        %v4020 = vpack.c.bf16 %v4002, %v3999
        %v4037 = vunpack.c.l.b16 %v4005
        %v4038 = vunpack.c.h.b16 %v4005
        %v4039 = vunpack.c.l.b16 %v4006
        %v4040 = vunpack.c.h.b16 %v4006
        %v4041 = vunpack.c.l.b16 %v4007
        %v4042 = vunpack.c.h.b16 %v4007
        %v4043 = vunpack.c.l.b16 %v4008
        %v4044 = vunpack.c.h.b16 %v4008
        %v4045 = vunpack.c.l.b16 %v4009
        %v4046 = vunpack.c.h.b16 %v4009
        %v4047 = vunpack.c.l.b16 %v4010
        %v4048 = vunpack.c.h.b16 %v4010
        %v4049 = vunpack.c.l.b16 %v4011
        %v4050 = vunpack.c.h.b16 %v4011
        %v4051 = vunpack.c.l.b16 %v4012
        %v4052 = vunpack.c.h.b16 %v4012
        %v4053 = vunpack.c.l.b16 %v4013
        %v4054 = vunpack.c.h.b16 %v4013
        %v4055 = vunpack.c.l.b16 %v4014
        %v4056 = vunpack.c.h.b16 %v4014
        %v4057 = vunpack.c.l.b16 %v4015
        %v4058 = vunpack.c.h.b16 %v4015
        %v4059 = vunpack.c.l.b16 %v4016
        %v4060 = vunpack.c.h.b16 %v4016
        %v4061 = vunpack.c.l.b16 %v4017
        %v4062 = vunpack.c.h.b16 %v4017
        %v4063 = vunpack.c.l.b16 %v4018
        %v4064 = vunpack.c.h.b16 %v4018
        %v4065 = vunpack.c.l.b16 %v4019
        %v4066 = vunpack.c.h.b16 %v4019
        %v4067 = vunpack.c.l.b16 %v4020
        %v4068 = vunpack.c.h.b16 %v4020
        %v4069 = vpack.c.b16 %v4037, %v4037
        %v4070 = vpack.c.b16 %v4038, %v4038
        %v4071 = vpack.c.b16 %v4039, %v4039
        %v4072 = vpack.c.b16 %v4040, %v4040
        %v4073 = vpack.c.b16 %v4041, %v4041
        %v4074 = vpack.c.b16 %v4042, %v4042
        %v4075 = vpack.c.b16 %v4043, %v4043
        %v4076 = vpack.c.b16 %v4044, %v4044
        %v4077 = vpack.c.b16 %v4045, %v4045
        %v4078 = vpack.c.b16 %v4046, %v4046
        %v4079 = vpack.c.b16 %v4047, %v4047
        %v4080 = vpack.c.b16 %v4048, %v4048
        %v4081 = vpack.c.b16 %v4049, %v4049
        %v4082 = vpack.c.b16 %v4050, %v4050
        %v4083 = vpack.c.b16 %v4051, %v4051
        %v4084 = vpack.c.b16 %v4052, %v4052
        %v4085 = vpack.c.b16 %v4053, %v4053
        %v4086 = vpack.c.b16 %v4054, %v4054
        %v4087 = vpack.c.b16 %v4055, %v4055
        %v4088 = vpack.c.b16 %v4056, %v4056
        %v4089 = vpack.c.b16 %v4057, %v4057
        %v4090 = vpack.c.b16 %v4058, %v4058
        %v4091 = vpack.c.b16 %v4059, %v4059
        %v4092 = vpack.c.b16 %v4060, %v4060
        %v4093 = vpack.c.b16 %v4061, %v4061
        %v4094 = vpack.c.b16 %v4062, %v4062
        %v4095 = vpack.c.b16 %v4063, %v4063
        %v4096 = vpack.c.b16 %v4064, %v4064
        %v4097 = vpack.c.b16 %v4065, %v4065
        %v4098 = vpack.c.b16 %v4066, %v4066
        %v4099 = vpack.c.b16 %v4067, %v4067
        %v4100 = vpack.c.b16 %v4068, %v4068
        %4133 = vst [vmem:[%s612] sm:$0xf] %v4069
        %4134 = vst [vmem:[%s612 + $0x4] sm:$0xf] %v4070
        %4135 = vst [vmem:[%s612 + $0x8] sm:$0xf] %v4071
        %4136 = vst [vmem:[%s612 + $0xc] sm:$0xf] %v4072
        %4137 = vst [vmem:[%s612 + $0x10] sm:$0xf] %v4073
        %4138 = vst [vmem:[%s612 + $0x14] sm:$0xf] %v4074
        %4139 = vst [vmem:[%s612 + $0x18] sm:$0xf] %v4075
        %4140 = vst [vmem:[%s612 + $0x1c] sm:$0xf] %v4076
        %4141 = vst [vmem:[%s612 + $0x20] sm:$0xf] %v4077
        %4142 = vst [vmem:[%s612 + $0x24] sm:$0xf] %v4078
        %4143 = vst [vmem:[%s612 + $0x28] sm:$0xf] %v4079
        %4144 = vst [vmem:[%s612 + $0x2c] sm:$0xf] %v4080
        %4145 = vst [vmem:[%s612 + $0x30] sm:$0xf] %v4081
        %4146 = vst [vmem:[%s612 + $0x34] sm:$0xf] %v4082
        %4147 = vst [vmem:[%s612 + $0x38] sm:$0xf] %v4083
        %4148 = vst [vmem:[%s612 + $0x3c] sm:$0xf] %v4084
        %4149 = vst [vmem:[%s612 + $0x40] sm:$0xf] %v4085
        %4150 = vst [vmem:[%s612 + $0x44] sm:$0xf] %v4086
        %4151 = vst [vmem:[%s612 + $0x48] sm:$0xf] %v4087
        %4152 = vst [vmem:[%s612 + $0x4c] sm:$0xf] %v4088
        %4153 = vst [vmem:[%s612 + $0x50] sm:$0xf] %v4089
        %4154 = vst [vmem:[%s612 + $0x54] sm:$0xf] %v4090
        %4155 = vst [vmem:[%s612 + $0x58] sm:$0xf] %v4091
        %4156 = vst [vmem:[%s612 + $0x5c] sm:$0xf] %v4092
        %4157 = vst [vmem:[%s612 + $0x60] sm:$0xf] %v4093
        %4158 = vst [vmem:[%s612 + $0x64] sm:$0xf] %v4094
        %4159 = vst [vmem:[%s612 + $0x68] sm:$0xf] %v4095
        %4160 = vst [vmem:[%s612 + $0x6c] sm:$0xf] %v4096
        %4161 = vst [vmem:[%s612 + $0x70] sm:$0xf] %v4097
        %4162 = vst [vmem:[%s612 + $0x74] sm:$0xf] %v4098
        %4163 = vst [vmem:[%s612 + $0x78] sm:$0xf] %v4099
        %4164 = vst [vmem:[%s612 + $0x7c] sm:$0xf] %v4100
        %v4165 = vadd.f32 %v3879, %v3882
        %v4166 = vadd.f32 %v4165, %v3887
        %v4167 = vadd.f32 %v4166, %v3890
        %v4168 = vadd.f32 %v4167, %v3895
        %v4169 = vadd.f32 %v4168, %v3898
        %v4170 = vadd.f32 %v4169, %v3903
        %v4171 = vadd.f32 %v4170, %v3906
        %v4172 = vadd.f32 %v4171, %v3911
        %v4173 = vadd.f32 %v4172, %v3914
        %v4174 = vadd.f32 %v4173, %v3919
        %v4175 = vadd.f32 %v4174, %v3922
        %v4176 = vadd.f32 %v4175, %v3927
        %v4177 = vadd.f32 %v4176, %v3930
        %v4178 = vadd.f32 %v4177, %v3935
        %v4179 = vadd.f32 %v4178, %v3938
        %v4180 = vadd.f32 %v4179, %v3943
        %v4181 = vadd.f32 %v4180, %v3946
        %v4182 = vadd.f32 %v4181, %v3951
        %v4183 = vadd.f32 %v4182, %v3954
        %v4184 = vadd.f32 %v4183, %v3959
        %v4185 = vadd.f32 %v4184, %v3962
        %v4186 = vadd.f32 %v4185, %v3967
        %v4187 = vadd.f32 %v4186, %v3970
        %v4188 = vadd.f32 %v4187, %v3975
        %v4189 = vadd.f32 %v4188, %v3978
        %v4190 = vadd.f32 %v4189, %v3983
        %v4191 = vadd.f32 %v4190, %v3986
        %v4192 = vadd.f32 %v4191, %v3991
        %v4193 = vadd.f32 %v4192, %v3994
        %v4194 = vadd.f32 %v4193, %v3999
        %v4195 = vadd.f32 %v4194, %v4002
        %v4196 = vrot.slane %v4195, 4
        %v4197 = vadd.f32 %v4195, %v4196
        %v4198 = vrot.slane %v4197, 2
        %v4199 = vadd.f32 %v4197, %v4198
        %v4200 = vrot.slane %v4199, 1
        %v4201 = vadd.f32 %v4199, %v4200
        %v4202 = vrcp.pop 256.0
        %v4203 = vmul.f32 %v4201, %v4202
        %v4204 = vsub.f32 %v3879, %v4203
        %v4205 = vsub.f32 %v3882, %v4203
        %v4206 = vsub.f32 %v3887, %v4203
        %v4207 = vsub.f32 %v3890, %v4203
        %v4208 = vsub.f32 %v3895, %v4203
        %v4209 = vsub.f32 %v3898, %v4203
        %v4210 = vsub.f32 %v3903, %v4203
        %v4211 = vsub.f32 %v3906, %v4203
        %v4212 = vsub.f32 %v3911, %v4203
        %v4213 = vsub.f32 %v3914, %v4203
        %v4214 = vsub.f32 %v3919, %v4203
        %v4215 = vsub.f32 %v3922, %v4203
        %v4216 = vsub.f32 %v3927, %v4203
        %v4217 = vsub.f32 %v3930, %v4203
        %v4218 = vsub.f32 %v3935, %v4203
        %v4219 = vsub.f32 %v3938, %v4203
        %v4220 = vsub.f32 %v3943, %v4203
        %v4221 = vsub.f32 %v3946, %v4203
        %v4222 = vsub.f32 %v3951, %v4203
        %v4223 = vsub.f32 %v3954, %v4203
        %v4224 = vsub.f32 %v3959, %v4203
        %v4225 = vsub.f32 %v3962, %v4203
        %v4226 = vsub.f32 %v3967, %v4203
        %v4227 = vsub.f32 %v3970, %v4203
        %v4228 = vsub.f32 %v3975, %v4203
        %v4229 = vsub.f32 %v3978, %v4203
        %v4230 = vsub.f32 %v3983, %v4203
        %v4231 = vsub.f32 %v3986, %v4203
        %v4232 = vsub.f32 %v3991, %v4203
        %v4233 = vsub.f32 %v3994, %v4203
        %v4234 = vsub.f32 %v3999, %v4203
        %v4235 = vsub.f32 %v4002, %v4203
        %v4236 = vmul.f32 %v4204, %v4204
        %v4237 = vmul.f32 %v4205, %v4205
        %v4238 = vmul.f32 %v4206, %v4206
        %v4239 = vmul.f32 %v4207, %v4207
        %v4240 = vmul.f32 %v4208, %v4208
        %v4241 = vmul.f32 %v4209, %v4209
        %v4242 = vmul.f32 %v4210, %v4210
        %v4243 = vmul.f32 %v4211, %v4211
        %v4244 = vmul.f32 %v4212, %v4212
        %v4245 = vmul.f32 %v4213, %v4213
        %v4246 = vmul.f32 %v4214, %v4214
        %v4247 = vmul.f32 %v4215, %v4215
        %v4248 = vmul.f32 %v4216, %v4216
        %v4249 = vmul.f32 %v4217, %v4217
        %v4250 = vmul.f32 %v4218, %v4218
        %v4251 = vmul.f32 %v4219, %v4219
        %v4252 = vmul.f32 %v4220, %v4220
        %v4253 = vmul.f32 %v4221, %v4221
        %v4254 = vmul.f32 %v4222, %v4222
        %v4255 = vmul.f32 %v4223, %v4223
        %v4256 = vmul.f32 %v4224, %v4224
        %v4257 = vmul.f32 %v4225, %v4225
        %v4258 = vmul.f32 %v4226, %v4226
        %v4259 = vmul.f32 %v4227, %v4227
        %v4260 = vmul.f32 %v4228, %v4228
        %v4261 = vmul.f32 %v4229, %v4229
        %v4262 = vmul.f32 %v4230, %v4230
        %v4263 = vmul.f32 %v4231, %v4231
        %v4264 = vmul.f32 %v4232, %v4232
        %v4265 = vmul.f32 %v4233, %v4233
        %v4266 = vmul.f32 %v4234, %v4234
        %v4267 = vmul.f32 %v4235, %v4235
        %v4268 = vadd.f32 %v4236, %v4237
        %v4269 = vadd.f32 %v4268, %v4238
        %v4270 = vadd.f32 %v4269, %v4239
        %v4271 = vadd.f32 %v4270, %v4240
        %v4272 = vadd.f32 %v4271, %v4241
        %v4273 = vadd.f32 %v4272, %v4242
        %v4274 = vadd.f32 %v4273, %v4243
        %v4275 = vadd.f32 %v4274, %v4244
        %v4276 = vadd.f32 %v4275, %v4245
        %v4277 = vadd.f32 %v4276, %v4246
        %v4278 = vadd.f32 %v4277, %v4247
        %v4279 = vadd.f32 %v4278, %v4248
        %v4280 = vadd.f32 %v4279, %v4249
        %v4281 = vadd.f32 %v4280, %v4250
        %v4282 = vadd.f32 %v4281, %v4251
        %v4283 = vadd.f32 %v4282, %v4252
        %v4284 = vadd.f32 %v4283, %v4253
        %v4285 = vadd.f32 %v4284, %v4254
        %v4286 = vadd.f32 %v4285, %v4255
        %v4287 = vadd.f32 %v4286, %v4256
        %v4288 = vadd.f32 %v4287, %v4257
        %v4289 = vadd.f32 %v4288, %v4258
        %v4290 = vadd.f32 %v4289, %v4259
        %v4291 = vadd.f32 %v4290, %v4260
        %v4292 = vadd.f32 %v4291, %v4261
        %v4293 = vadd.f32 %v4292, %v4262
        %v4294 = vadd.f32 %v4293, %v4263
        %v4295 = vadd.f32 %v4294, %v4264
        %v4296 = vadd.f32 %v4295, %v4265
        %v4297 = vadd.f32 %v4296, %v4266
        %v4298 = vadd.f32 %v4297, %v4267
        %v4299 = vrot.slane %v4298, 4
        %v4300 = vadd.f32 %v4298, %v4299
        %v4301 = vrot.slane %v4300, 2
        %v4302 = vadd.f32 %v4300, %v4301
        %v4303 = vrot.slane %v4302, 1
        %v4304 = vadd.f32 %v4302, %v4303
        %4305 = vst [vmem:[%s632] sm:$0x1] %v4201
        %4306 = vst [vmem:[%s632 + $0x1] sm:$0x1] %v4304
        %s4307 = sand.u32 %s184, 1
        %s4308 = sand.u32 %s184, 1
        %s4309 = smul.addr %s4308, 128
        %s4310 = scalar_lea.vmem [#allocation7], %s4309
        %p4311 = scmp.lt.s32.totalorder %s19, 1
        %s4312 = scalar_select %p4311, %s19, 1
        %s4313 = smul.addr %s4312, 2
        %s4314 = scalar_lea.vmem %s7, %s4313
        // Predicated region
        $region168: #{double_conv.4} parent=154 // pred_check
          %p4315 = pneg %p194
        $region169: #{double_conv.4} parent=154 // pred_check_branch
          %4317 = sbr.rel (%p4315) target = $region171
        $region170: #{double_conv.4} parent=154 // pred_region
          %s4318 = smul.u32 8, %s19
          %s4319 = smul.addr %s4318, 2
          %s4320 = smul.addr %s4319, 4
          %s4321 = scalar_lea.vmem %s6, %s4320
          // Predicated region
          $region172: #{double_conv.4} parent=170 // pred_check
            _
          $region173: #{double_conv.4} parent=170 // pred_check_branch
            %4323 = sbr.rel (0) target = $region175
          $region174: #{double_conv.4} parent=170 // pred_region
            // Predicated region
            $region176: #{double_conv.4} parent=174 // pred_check
              _
            $region177: #{double_conv.4} parent=174 // pred_check_branch
              %4325 = sbr.rel target = $region179
            $region178: #{double_conv.4} parent=174 // pred_region
              // Predicated region
              $region191: #{double_conv.4} parent=178 // pred_check
                _
              $region192: #{double_conv.4} parent=178 // pred_check_branch
                %4402 = sbr.rel (0) target = $region194
              $region193: #{double_conv.4} parent=178 // pred_region
                loop: start=0, step=1, limit=1
                $region195: #{double_conv.4} parent=193 // loop_pre_header
                  _
                $region196: #{double_conv.4} parent=193 // loop_header
                  %s4404 = sphi 0, %s4408
                  %p4405 = scmp.ge.s32.totalorder %s4404, 1
                  %s4409 = sphi %s4310, %s4310
                  %s4410 = sphi %s4321, %s4321
                $region197: #{double_conv.4} parent=193 // loop_header_branch
                  %4407 = sbr.rel (%p4405) target = $region201
                $region198: #{double_conv.4} parent=193 // loop_body
                  _
                $region199: #{double_conv.4} parent=193 // loop_footer
                  %s4408 = sadd.s32 1, %s4404
                $region200: #{double_conv.4} parent=193 // loop_footer_branch
                  %4403 = sbr.rel target = $region196
                $region201: #{double_conv.4} parent=193 // loop_exit
                  _
                loop: start=0, step=1, limit=1
                $region202: #{double_conv.4} parent=193 // loop_pre_header
                  _
                $region203: #{double_conv.4} parent=193 // loop_header
                  %s4413 = sphi 0, %s4417
                  %p4414 = scmp.ge.s32.totalorder %s4413, 1
                  %s4418 = sphi %s4310, %s4310
                  %s4419 = sphi %s4321, %s4321
                $region204: #{double_conv.4} parent=193 // loop_header_branch
                  %4416 = sbr.rel (%p4414) target = $region208
                $region205: #{double_conv.4} parent=193 // loop_body
                  %v4420 = vld [vmem:[%s4418] sm:$0xf]
                  %4421 = vst [vmem:[%s4419] sm:$0xf] %v4420
                  %v4422 = vld [vmem:[%s4418 + $0x4] sm:$0xf]
                  %4423 = vst [vmem:[%s4419 + $0x4] sm:$0xf] %v4422
                  %v4424 = vld [vmem:[%s4418 + $0x8] sm:$0xf]
                  %4425 = vst [vmem:[%s4419 + $0x8] sm:$0xf] %v4424
                  %v4426 = vld [vmem:[%s4418 + $0xc] sm:$0xf]
                  %4427 = vst [vmem:[%s4419 + $0xc] sm:$0xf] %v4426
                  %v4428 = vld [vmem:[%s4418 + $0x10] sm:$0xf]
                  %4429 = vst [vmem:[%s4419 + $0x10] sm:$0xf] %v4428
                  %v4430 = vld [vmem:[%s4418 + $0x14] sm:$0xf]
                  %4431 = vst [vmem:[%s4419 + $0x14] sm:$0xf] %v4430
                  %v4432 = vld [vmem:[%s4418 + $0x18] sm:$0xf]
                  %4433 = vst [vmem:[%s4419 + $0x18] sm:$0xf] %v4432
                  %v4434 = vld [vmem:[%s4418 + $0x1c] sm:$0xf]
                  %4435 = vst [vmem:[%s4419 + $0x1c] sm:$0xf] %v4434
                  %v4436 = vld [vmem:[%s4418 + $0x20] sm:$0xf]
                  %4437 = vst [vmem:[%s4419 + $0x20] sm:$0xf] %v4436
                  %v4438 = vld [vmem:[%s4418 + $0x24] sm:$0xf]
                  %4439 = vst [vmem:[%s4419 + $0x24] sm:$0xf] %v4438
                  %v4440 = vld [vmem:[%s4418 + $0x28] sm:$0xf]
                  %4441 = vst [vmem:[%s4419 + $0x28] sm:$0xf] %v4440
                  %v4442 = vld [vmem:[%s4418 + $0x2c] sm:$0xf]
                  %4443 = vst [vmem:[%s4419 + $0x2c] sm:$0xf] %v4442
                  %v4444 = vld [vmem:[%s4418 + $0x30] sm:$0xf]
                  %4445 = vst [vmem:[%s4419 + $0x30] sm:$0xf] %v4444
                  %v4446 = vld [vmem:[%s4418 + $0x34] sm:$0xf]
                  %4447 = vst [vmem:[%s4419 + $0x34] sm:$0xf] %v4446
                  %v4448 = vld [vmem:[%s4418 + $0x38] sm:$0xf]
                  %4449 = vst [vmem:[%s4419 + $0x38] sm:$0xf] %v4448
                  %v4450 = vld [vmem:[%s4418 + $0x3c] sm:$0xf]
                  %4451 = vst [vmem:[%s4419 + $0x3c] sm:$0xf] %v4450
                  %v4452 = vld [vmem:[%s4418 + $0x40] sm:$0xf]
                  %4453 = vst [vmem:[%s4419 + $0x80] sm:$0xf] %v4452
                  %v4454 = vld [vmem:[%s4418 + $0x44] sm:$0xf]
                  %4455 = vst [vmem:[%s4419 + $0x84] sm:$0xf] %v4454
                  %v4456 = vld [vmem:[%s4418 + $0x48] sm:$0xf]
                  %4457 = vst [vmem:[%s4419 + $0x88] sm:$0xf] %v4456
                  %v4458 = vld [vmem:[%s4418 + $0x4c] sm:$0xf]
                  %4459 = vst [vmem:[%s4419 + $0x8c] sm:$0xf] %v4458
                  %v4460 = vld [vmem:[%s4418 + $0x50] sm:$0xf]
                  %4461 = vst [vmem:[%s4419 + $0x90] sm:$0xf] %v4460
                  %v4462 = vld [vmem:[%s4418 + $0x54] sm:$0xf]
                  %4463 = vst [vmem:[%s4419 + $0x94] sm:$0xf] %v4462
                  %v4464 = vld [vmem:[%s4418 + $0x58] sm:$0xf]
                  %4465 = vst [vmem:[%s4419 + $0x98] sm:$0xf] %v4464
                  %v4466 = vld [vmem:[%s4418 + $0x5c] sm:$0xf]
                  %4467 = vst [vmem:[%s4419 + $0x9c] sm:$0xf] %v4466
                  %v4468 = vld [vmem:[%s4418 + $0x60] sm:$0xf]
                  %4469 = vst [vmem:[%s4419 + $0xa0] sm:$0xf] %v4468
                  %v4470 = vld [vmem:[%s4418 + $0x64] sm:$0xf]
                  %4471 = vst [vmem:[%s4419 + $0xa4] sm:$0xf] %v4470
                  %v4472 = vld [vmem:[%s4418 + $0x68] sm:$0xf]
                  %4473 = vst [vmem:[%s4419 + $0xa8] sm:$0xf] %v4472
                  %v4474 = vld [vmem:[%s4418 + $0x6c] sm:$0xf]
                  %4475 = vst [vmem:[%s4419 + $0xac] sm:$0xf] %v4474
                  %v4476 = vld [vmem:[%s4418 + $0x70] sm:$0xf]
                  %4477 = vst [vmem:[%s4419 + $0xb0] sm:$0xf] %v4476
                  %v4478 = vld [vmem:[%s4418 + $0x74] sm:$0xf]
                  %4479 = vst [vmem:[%s4419 + $0xb4] sm:$0xf] %v4478
                  %v4480 = vld [vmem:[%s4418 + $0x78] sm:$0xf]
                  %4481 = vst [vmem:[%s4419 + $0xb8] sm:$0xf] %v4480
                  %v4482 = vld [vmem:[%s4418 + $0x7c] sm:$0xf]
                  %4483 = vst [vmem:[%s4419 + $0xbc] sm:$0xf] %v4482
                $region206: #{double_conv.4} parent=193 // loop_footer
                  %s4417 = sadd.s32 1, %s4413
                $region207: #{double_conv.4} parent=193 // loop_footer_branch
                  %4412 = sbr.rel target = $region203
                $region208: #{double_conv.4} parent=193 // loop_exit
                  _
              $region194: #{double_conv.4} parent=178 // pred_fallthru
                _
            $region179: #{double_conv.4} parent=174 // pred_fallthru
              _
            // Predicated region
            $region180: #{double_conv.4} parent=174 // pred_check
              _
            $region181: #{double_conv.4} parent=174 // pred_check_branch
              %4327 = sbr.rel (0) target = $region183
            $region182: #{double_conv.4} parent=174 // pred_region
              loop: start=0, step=1, limit=1
              $region184: #{double_conv.4} parent=182 // loop_pre_header
                _
              $region185: #{double_conv.4} parent=182 // loop_header
                %s4330 = sphi 0, %s4334
                %p4331 = scmp.ge.s32.totalorder %s4330, 1
                %s4335 = sphi %s4310, %s4310
                %s4336 = sphi %s4321, %s4321
              $region186: #{double_conv.4} parent=182 // loop_header_branch
                %4333 = sbr.rel (%p4331) target = $region190
              $region187: #{double_conv.4} parent=182 // loop_body
                %v4337 = vld [vmem:[%s4335] sm:$0xf]
                %4338 = vst [vmem:[%s4336] sm:$0xf] %v4337
                %v4339 = vld [vmem:[%s4335 + $0x4] sm:$0xf]
                %4340 = vst [vmem:[%s4336 + $0x4] sm:$0xf] %v4339
                %v4341 = vld [vmem:[%s4335 + $0x8] sm:$0xf]
                %4342 = vst [vmem:[%s4336 + $0x8] sm:$0xf] %v4341
                %v4343 = vld [vmem:[%s4335 + $0xc] sm:$0xf]
                %4344 = vst [vmem:[%s4336 + $0xc] sm:$0xf] %v4343
                %v4345 = vld [vmem:[%s4335 + $0x10] sm:$0xf]
                %4346 = vst [vmem:[%s4336 + $0x10] sm:$0xf] %v4345
                %v4347 = vld [vmem:[%s4335 + $0x14] sm:$0xf]
                %4348 = vst [vmem:[%s4336 + $0x14] sm:$0xf] %v4347
                %v4349 = vld [vmem:[%s4335 + $0x18] sm:$0xf]
                %4350 = vst [vmem:[%s4336 + $0x18] sm:$0xf] %v4349
                %v4351 = vld [vmem:[%s4335 + $0x1c] sm:$0xf]
                %4352 = vst [vmem:[%s4336 + $0x1c] sm:$0xf] %v4351
                %v4353 = vld [vmem:[%s4335 + $0x20] sm:$0xf]
                %4354 = vst [vmem:[%s4336 + $0x20] sm:$0xf] %v4353
                %v4355 = vld [vmem:[%s4335 + $0x24] sm:$0xf]
                %4356 = vst [vmem:[%s4336 + $0x24] sm:$0xf] %v4355
                %v4357 = vld [vmem:[%s4335 + $0x28] sm:$0xf]
                %4358 = vst [vmem:[%s4336 + $0x28] sm:$0xf] %v4357
                %v4359 = vld [vmem:[%s4335 + $0x2c] sm:$0xf]
                %4360 = vst [vmem:[%s4336 + $0x2c] sm:$0xf] %v4359
                %v4361 = vld [vmem:[%s4335 + $0x30] sm:$0xf]
                %4362 = vst [vmem:[%s4336 + $0x30] sm:$0xf] %v4361
                %v4363 = vld [vmem:[%s4335 + $0x34] sm:$0xf]
                %4364 = vst [vmem:[%s4336 + $0x34] sm:$0xf] %v4363
                %v4365 = vld [vmem:[%s4335 + $0x38] sm:$0xf]
                %4366 = vst [vmem:[%s4336 + $0x38] sm:$0xf] %v4365
                %v4367 = vld [vmem:[%s4335 + $0x3c] sm:$0xf]
                %4368 = vst [vmem:[%s4336 + $0x3c] sm:$0xf] %v4367
                %v4369 = vld [vmem:[%s4335 + $0x40] sm:$0xf]
                %4370 = vst [vmem:[%s4336 + $0x80] sm:$0xf] %v4369
                %v4371 = vld [vmem:[%s4335 + $0x44] sm:$0xf]
                %4372 = vst [vmem:[%s4336 + $0x84] sm:$0xf] %v4371
                %v4373 = vld [vmem:[%s4335 + $0x48] sm:$0xf]
                %4374 = vst [vmem:[%s4336 + $0x88] sm:$0xf] %v4373
                %v4375 = vld [vmem:[%s4335 + $0x4c] sm:$0xf]
                %4376 = vst [vmem:[%s4336 + $0x8c] sm:$0xf] %v4375
                %v4377 = vld [vmem:[%s4335 + $0x50] sm:$0xf]
                %4378 = vst [vmem:[%s4336 + $0x90] sm:$0xf] %v4377
                %v4379 = vld [vmem:[%s4335 + $0x54] sm:$0xf]
                %4380 = vst [vmem:[%s4336 + $0x94] sm:$0xf] %v4379
                %v4381 = vld [vmem:[%s4335 + $0x58] sm:$0xf]
                %4382 = vst [vmem:[%s4336 + $0x98] sm:$0xf] %v4381
                %v4383 = vld [vmem:[%s4335 + $0x5c] sm:$0xf]
                %4384 = vst [vmem:[%s4336 + $0x9c] sm:$0xf] %v4383
                %v4385 = vld [vmem:[%s4335 + $0x60] sm:$0xf]
                %4386 = vst [vmem:[%s4336 + $0xa0] sm:$0xf] %v4385
                %v4387 = vld [vmem:[%s4335 + $0x64] sm:$0xf]
                %4388 = vst [vmem:[%s4336 + $0xa4] sm:$0xf] %v4387
                %v4389 = vld [vmem:[%s4335 + $0x68] sm:$0xf]
                %4390 = vst [vmem:[%s4336 + $0xa8] sm:$0xf] %v4389
                %v4391 = vld [vmem:[%s4335 + $0x6c] sm:$0xf]
                %4392 = vst [vmem:[%s4336 + $0xac] sm:$0xf] %v4391
                %v4393 = vld [vmem:[%s4335 + $0x70] sm:$0xf]
                %4394 = vst [vmem:[%s4336 + $0xb0] sm:$0xf] %v4393
                %v4395 = vld [vmem:[%s4335 + $0x74] sm:$0xf]
                %4396 = vst [vmem:[%s4336 + $0xb4] sm:$0xf] %v4395
                %v4397 = vld [vmem:[%s4335 + $0x78] sm:$0xf]
                %4398 = vst [vmem:[%s4336 + $0xb8] sm:$0xf] %v4397
                %v4399 = vld [vmem:[%s4335 + $0x7c] sm:$0xf]
                %4400 = vst [vmem:[%s4336 + $0xbc] sm:$0xf] %v4399
              $region188: #{double_conv.4} parent=182 // loop_footer
                %s4334 = sadd.s32 1, %s4330
              $region189: #{double_conv.4} parent=182 // loop_footer_branch
                %4329 = sbr.rel target = $region185
              $region190: #{double_conv.4} parent=182 // loop_exit
                _
            $region183: #{double_conv.4} parent=174 // pred_fallthru
              _
          $region175: #{double_conv.4} parent=170 // pred_fallthru
            _
          %4484 = vnop
        $region171: #{double_conv.4} parent=154 // pred_fallthru
          _
        // Predicated region
        $region209: #{double_conv.4} parent=154 // pred_check
          %p4485 = pneg %p220
        $region210: #{double_conv.4} parent=154 // pred_check_branch
          %4487 = sbr.rel (%p4485) target = $region212
        $region211: #{double_conv.4} parent=154 // pred_region
          _
        $region212: #{double_conv.4} parent=154 // pred_fallthru
          _
      $region155: #{double_conv.4} parent=5 // pred_fallthru
        _
      %p4488 = scmp.le.s32.totalorder 2, %s14
      // Predicated region
      $region213: #{double_conv.4} parent=5 // pred_check
        %p4489 = pneg %p4488
      $region214: #{double_conv.4} parent=5 // pred_check_branch
        %4491 = sbr.rel (%p4489) target = $region216
      $region215: #{double_conv.4} parent=5 // pred_region
        %s4492 = ssub.s32 %s14, 2
        // Predicated region
        $region217: #{double_conv.4} parent=215 // pred_check
          %p4493 = pneg %p200
        $region218: #{double_conv.4} parent=215 // pred_check_branch
          %4495 = sbr.rel (%p4493) target = $region220
        $region219: #{double_conv.4} parent=215 // pred_region
          %s4496 = sand.u32 %s185, 1
          %s4497 = sand.u32 %s185, 1
          %s4498 = smul.addr %s4497, 128
          %s4499 = scalar_lea.vmem [#allocation7], %s4498
        $region220: #{double_conv.4} parent=215 // pred_fallthru
          _
        // Predicated region
        $region221: #{double_conv.4} parent=215 // pred_check
          %p4500 = pneg %p226
        $region222: #{double_conv.4} parent=215 // pred_check_branch
          %4502 = sbr.rel (%p4500) target = $region224
        $region223: #{double_conv.4} parent=215 // pred_region
          %p4503 = scmp.lt.s32.totalorder %s20, 1
          %s4504 = scalar_select %p4503, %s20, 1
          %s4505 = smul.addr %s4504, 2
          %s4506 = scalar_lea.vmem %s7, %s4505
        $region224: #{double_conv.4} parent=215 // pred_fallthru
          _
      $region216: #{double_conv.4} parent=5 // pred_fallthru
        _
    $region6: #{double_conv.4} parent=1 // loop_footer
      %s18 = sadd.s32 1, %s14
    $region7: #{double_conv.4} parent=1 // loop_footer_branch
      %13 = sbr.rel target = $region3
    $region8: #{double_conv.4} parent=1 // loop_exit
      _

</llo_original>
